<compile_context>
chip_gen: v6e
topology: v6e:2x2x1
jax: 0.10.0
libtpu: 0.0.40
codegen_flags: <defaults>
</compile_context>

<pallas_src>
import jax
import jax.numpy as jnp
from jax.experimental import pallas as pl
from jax.experimental.pallas import tpu as pltpu

CLAMP_MIN = -0.2514298553466797
CLAMP_MAX = 0.5333021664619446

IN_FEATURES = 3072
OUT_FEATURES = 768
TN = 384  # output tile; OUT_FEATURES // TN = 2 blocks -> one per v7x TensorCore


def _linear_clamp_kernel(x_ref, w_ref, b_ref, o_ref):
    """o = clamp(x @ W_slab + b_slab) for one contiguous N slab (full K)."""
    y = jnp.dot(x_ref[...], w_ref[...], preferred_element_type=jnp.float32)
    y = y + b_ref[...]                                   # (1, tn) broadcasts over rows
    y = jnp.minimum(jnp.maximum(y, CLAMP_MIN), CLAMP_MAX)
    o_ref[...] = y.astype(o_ref.dtype)


def prepare_params(w, b, *, tn=TN):
    """One-time host-side re-layout so each per-step weight slab is contiguous.

    w: (K, N) row-major  ->  (N // tn, K, tn) slab-major (each slab = 1 DMA run).
    """
    K, N = w.shape
    assert N % tn == 0
    w_slabs = jnp.transpose(w.reshape(K, N // tn, tn), (1, 0, 2))
    b2 = b.reshape(1, N)
    return w_slabs, b2


def linear_clamp(x_flat, w_slabs, b2, *, tn=TN):
    """x_flat: (B, 3072) f32, w_slabs: (N//tn, 3072, tn) f32, b2: (1, N) f32 -> (B, N)."""
    B, K = x_flat.shape
    n_blocks, Kw, tn_w = w_slabs.shape
    assert K == Kw and tn_w == tn
    N = n_blocks * tn
    assert b2.shape == (1, N)

    cost = pl.CostEstimate(
        flops=2 * B * K * N,
        transcendentals=0,
        bytes_accessed=K * N * 4 + B * K * 4 + N * 4 + B * N * 4,
    )
    return pl.pallas_call(
        _linear_clamp_kernel,
        out_shape=jax.ShapeDtypeStruct((B, N), x_flat.dtype),
        grid_spec=pltpu.PrefetchScalarGridSpec(
            num_scalar_prefetch=0,
            grid=(n_blocks,),  # single K step; only the output dim is tiled
            in_specs=[
                # full activations, fetched once (constant block index)
                pl.BlockSpec((B, K), lambda j: (0, 0)),
                # contiguous weight slab j; leading slab dim squeezed away
                pl.BlockSpec((pl.Squeezed(), K, tn), lambda j: (j, 0, 0)),
                # bias tile
                pl.BlockSpec((1, tn), lambda j: (0, j)),
            ],
            out_specs=pl.BlockSpec((B, tn), lambda j: (0, j)),
        ),
        compiler_params=pltpu.CompilerParams(
            dimension_semantics=("parallel",),
        ),
        cost_estimate=cost,
    )(x_flat, w_slabs, b2)


@jax.jit
def model_forward(x, w_slabs, b2):
    # torch.flatten(x, 1) == row-major reshape to (B, -1); zero-copy under jit.
    B = x.shape[0]
    x_flat = x.reshape(B, -1)
    return linear_clamp(x_flat, w_slabs, b2)


if __name__ == "__main__":
    key = jax.random.PRNGKey(0)
    kx, kw, kb = jax.random.split(key, 3)

    # Input: (B=2, C=3, H=32, W=32) -> flattens to 3072 features (matches Linear(3072, 768)).
    x = jax.random.normal(kx, (2, 3, 32, 32), dtype=jnp.float32)

    # Deterministic parameter init (PyTorch Linear: weight (768, 3072), bias (768,)).
    # We store the transposed weight (3072, 768) so the kernel computes x @ W.
    bound = 1.0 / (IN_FEATURES ** 0.5)
    w = jax.random.uniform(
        kw, (IN_FEATURES, OUT_FEATURES), dtype=jnp.float32,
        minval=-bound, maxval=bound)
    b = jax.random.uniform(
        kb, (OUT_FEATURES,), dtype=jnp.float32, minval=-bound, maxval=bound)

    # One-time slab-major weight re-layout (done outside the jitted forward).
    w_slabs, b2 = prepare_params(w, b)

    out = model_forward(x, w_slabs, b2)
    jax.block_until_ready(out)

    # Reference check in plain JAX.
    ref = jnp.clip(x.reshape(2, -1) @ w + b, CLAMP_MIN, CLAMP_MAX)
    assert out.shape == (2, OUT_FEATURES)
    assert jnp.allclose(out, ref, atol=1e-5, rtol=1e-5)

    print("KERNEL_OK")
</pallas_src>

<mosaic_0001>
module attributes {stable_mosaic.version = 11 : i64} {
  func.func @_linear_clamp_kernel(%arg0: i32, %arg1: memref<2x3072xf32, #tpu.memory_space<vmem>>, %arg2: memref<1x3072x384xf32, #tpu.memory_space<vmem>>, %arg3: memref<1x384xf32, #tpu.memory_space<vmem>>, %arg4: memref<2x384xf32, #tpu.memory_space<vmem>>) attributes {dimension_semantics = [#tpu.dimension_semantics<parallel>], iteration_bounds = array<i64: 2>, scalar_prefetch = 0 : i64, scratch_operands = 0 : i64, tpu.core_type = #tpu.core_type<tc>, window_params = [{pipeline_mode = #tpu.pipeline_mode<synchronous>, transform_indices = @transform_0, window_bounds = array<i64: 2, 3072>}, {transform_indices = @transform_1, window_bounds = array<i64: 1, 3072, 384>}, {transform_indices = @transform_2, window_bounds = array<i64: 1, 384>}, {transform_indices = @transform_3, window_bounds = array<i64: 2, 384>}]} {
    %c0 = arith.constant 0 : index
    %c0_0 = arith.constant 0 : index
    %0 = vector.load %arg1[%c0, %c0_0] : memref<2x3072xf32, #tpu.memory_space<vmem>>, vector<2x3072xf32>
    %c0_1 = arith.constant 0 : index
    %c0_2 = arith.constant 0 : index
    %c0_3 = arith.constant 0 : index
    %1 = vector.load %arg2[%c0_1, %c0_2, %c0_3] : memref<1x3072x384xf32, #tpu.memory_space<vmem>>, vector<1x3072x384xf32>
    %2 = vector.shape_cast %1 : vector<1x3072x384xf32> to vector<3072x384xf32>
    %cst = arith.constant dense<0.000000e+00> : vector<2x384xf32>
    %3 = tpu.matmul %0, %2, %cst {dimension_numbers = #tpu.dot_dimension_numbers<[1], [0], [0], [1], [0, 0, 1, 1], [], []>} : vector<2x3072xf32>, vector<3072x384xf32>, vector<2x384xf32> -> vector<2x384xf32>
    %c0_4 = arith.constant 0 : index
    %c0_5 = arith.constant 0 : index
    %4 = vector.load %arg3[%c0_4, %c0_5] : memref<1x384xf32, #tpu.memory_space<vmem>>, vector<1x384xf32>
    %5 = vector.broadcast %4 : vector<1x384xf32> to vector<2x384xf32>
    %6 = arith.addf %3, %5 : vector<2x384xf32>
    %cst_6 = arith.constant -0.251429856 : f32
    %7 = vector.broadcast %cst_6 : f32 to vector<2x384xf32>
    %8 = arith.maximumf %6, %7 : vector<2x384xf32>
    %cst_7 = arith.constant 0.533302188 : f32
    %9 = vector.broadcast %cst_7 : f32 to vector<2x384xf32>
    %10 = arith.minimumf %8, %9 : vector<2x384xf32>
    %c0_8 = arith.constant 0 : index
    %c0_9 = arith.constant 0 : index
    %11 = vector.load %arg4[%c0_8, %c0_9] : memref<2x384xf32, #tpu.memory_space<vmem>>, vector<2x384xf32>
    tpu.vector_store %arg4[%c0_8, %c0_9], %10 {strides = array<i32>} : memref<2x384xf32, #tpu.memory_space<vmem>>, vector<2x384xf32>,
    return
  }
  func.func @transform_0(%arg0: i32) -> (i32, i32) {
    %c0_i32 = arith.constant 0 : i32
    %c0_i32_0 = arith.constant 0 : i32
    %c0_i32_1 = arith.constant 0 : i32
    return %c0_i32, %c0_i32_0 : i32, i32
  }
  func.func @transform_1(%arg0: i32) -> (i32, i32, i32) {
    %c0_i32 = arith.constant 0 : i32
    %c0_i32_0 = arith.constant 0 : i32
    %c0_i32_1 = arith.constant 0 : i32
    return %arg0, %c0_i32, %c0_i32_0 : i32, i32, i32
  }
  func.func @transform_2(%arg0: i32) -> (i32, i32) {
    %c0_i32 = arith.constant 0 : i32
    %c0_i32_0 = arith.constant 0 : i32
    return %c0_i32, %arg0 : i32, i32
  }
  func.func @transform_3(%arg0: i32) -> (i32, i32) {
    %c0_i32 = arith.constant 0 : i32
    %c0_i32_0 = arith.constant 0 : i32
    return %c0_i32, %arg0 : i32, i32
  }
}

</mosaic_0001>

<llo_original>
// kernel: model_forward.1
$region0: #{model_forward.1}
  #allocation0 [shape = 'u32[]', space=smem, size = 0x4, offset = 0x4, fixed_abs, tag = 'smem constant byte address 0x4 - core index']
  #allocation1 [shape = 'u32[144,128]{1,0:T(1,128)}', space=vmem, size = 0x12000, scoped, tag = 'internal scratch']
  %s0 = inlined_call_operand.vmem [shape: f32[2,3072], index: 0, kind: input, shape index: {}]
  %s1 = inlined_call_operand.hbm [shape: f32[2,3072,384], index: 1, kind: input, shape index: {}]
  %s2 = inlined_call_operand.hbm [shape: f32[1,768], index: 2, kind: input, shape index: {}]
  %s3 = inlined_call_operand.hbm [shape: f32[2,768], index: 3, kind: output, shape index: {}]
  %s4 = sld [smem:[#allocation0]]
  $region53: #{model_forward.1} parent=0
    _
  %s6 = ssub.s32 1, %s4
  %s7 = scalar_select 0, %s6, %s4
  $region1: #{model_forward.1} parent=0
    #allocation2 [shape = 'u8[9437184]{0}', space=vmem, size = 0x900000, scoped, tag = 'input window, operand 1']
    #allocation3 [shape = 's32[2]{0}', space=sflag, size = 0x8, scoped, tag = 'scoped memory for model_forward.1']
    #allocation4 [shape = 's32[2]{0}', space=sflag, size = 0x8, scoped, tag = 'scoped memory for model_forward.1']
    #allocation5 [shape = 'u8[3072]{0}', space=vmem, size = 0xc00, scoped, tag = 'input window, operand 2']
    #allocation6 [shape = 's32[2]{0}', space=sflag, size = 0x8, scoped, tag = 'scoped memory for model_forward.1']
    #allocation7 [shape = 'u8[6144]{0}', space=vmem, size = 0x1800, scoped, tag = 'output window, operand 0']
    %8 = vsyncpa [#allocation3], 0
    %s9 = scalar_lea.sflag [#allocation3], 1
    %10 = vsyncpa %s9, 0
    %11 = vsyncpa [#allocation6], 0
    %s12 = scalar_lea.sflag [#allocation6], 1
    %13 = vsyncpa %s12, 0
    %14 = vsyncpa [#allocation4], 0
    %s15 = scalar_lea.sflag [#allocation4], 1
    %16 = vsyncpa %s15, 0
    loop: start=0, step=1, limit=4
    $region2: #{model_forward.1} parent=1 // loop_pre_header
      _
    $region3: #{model_forward.1} parent=1 // loop_header
      %s18 = sphi 0, %s22
      %p19 = scmp.ge.s32.totalorder %s18, 4
      %s26 = sphi 0, %s26
      %s28 = sphi 0, %s26
      %s29 = sphi 0, %s28
      %s43 = sphi 0, %s29
      %s49 = sphi 0, %s51
      %s52 = sphi 0, %s49
      %s53 = sphi 0, %s52
      %s69 = sphi 0, %s53
      %s75 = sphi 0, %s77
      %s78 = sphi 0, %s75
      %s79 = sphi 0, %s78
      %s95 = sphi 0, %s79
      %s101 = sphi 0, %s103
      %s104 = sphi 0, %s101
      %s105 = sphi 0, %s104
      %s121 = sphi 0, %s105
    $region4: #{model_forward.1} parent=1 // loop_header_branch
      %21 = sbr.rel (%p19) target = $region8
    $region5: #{model_forward.1} parent=1 // loop_body
      %s23 = ssub.s32 %s18, 1
      %s24 = ssub.s32 %s18, 2
      %s25 = sadd.s32 %s18, 1
      %s27 = sadd.s32 %s26, 1
      %p30 = scmp.eq.s32.totalorder %s18, 1
      %p31 = scmp.ne.s32.totalorder %s26, %s28
      %p32 = scmp.eq.s32.totalorder %s18, 0
      %p33 = por %p31, %p32
      %p34 = scmp.ne.s32.totalorder %s26, %s28
      %p35 = scmp.eq.s32.totalorder %s23, 1
      %p36 = por %p34, %p35
      %p37 = scmp.ne.s32.totalorder %s28, %s29
      %p38 = scmp.eq.s32.totalorder %s23, 0
      %p39 = por %p37, %p38
      %p40 = scmp.ne.s32.totalorder %s28, %s29
      %p41 = scmp.eq.s32.totalorder %s24, 1
      %p42 = por %p40, %p41
      %p44 = scmp.ne.s32.totalorder %s29, %s43
      %p45 = scmp.eq.s32.totalorder %s24, 0
      %p46 = por %p44, %p45
      %s47 = ssub.s32 %s18, %s25
      %p48 = scmp.eq.s32.totalorder %s47, 0
      %s50 = sadd.s32 %s49, 1
      %s51 = scalar_select %p48, %s49, %s50
      %p54 = pneg %p48
      %p55 = scmp.eq.s32.totalorder %s18, 1
      %p56 = por %p54, %p55
      %p57 = scmp.ne.s32.totalorder %s49, %s52
      %p58 = scmp.eq.s32.totalorder %s18, 0
      %p59 = por %p57, %p58
      %p60 = scmp.ne.s32.totalorder %s49, %s52
      %p61 = scmp.eq.s32.totalorder %s23, 1
      %p62 = por %p60, %p61
      %p63 = scmp.ne.s32.totalorder %s52, %s53
      %p64 = scmp.eq.s32.totalorder %s23, 0
      %p65 = por %p63, %p64
      %p66 = scmp.ne.s32.totalorder %s52, %s53
      %p67 = scmp.eq.s32.totalorder %s24, 1
      %p68 = por %p66, %p67
      %p70 = scmp.ne.s32.totalorder %s53, %s69
      %p71 = scmp.eq.s32.totalorder %s24, 0
      %p72 = por %p70, %p71
      %s73 = ssub.s32 %s18, %s25
      %p74 = scmp.eq.s32.totalorder %s73, 0
      %s76 = sadd.s32 %s75, 1
      %s77 = scalar_select %p74, %s75, %s76
      %p80 = pneg %p74
      %p81 = scmp.eq.s32.totalorder %s18, 1
      %p82 = por %p80, %p81
      %p83 = scmp.ne.s32.totalorder %s75, %s78
      %p84 = scmp.eq.s32.totalorder %s18, 0
      %p85 = por %p83, %p84
      %p86 = scmp.ne.s32.totalorder %s75, %s78
      %p87 = scmp.eq.s32.totalorder %s23, 1
      %p88 = por %p86, %p87
      %p89 = scmp.ne.s32.totalorder %s78, %s79
      %p90 = scmp.eq.s32.totalorder %s23, 0
      %p91 = por %p89, %p90
      %p92 = scmp.ne.s32.totalorder %s78, %s79
      %p93 = scmp.eq.s32.totalorder %s24, 1
      %p94 = por %p92, %p93
      %p96 = scmp.ne.s32.totalorder %s79, %s95
      %p97 = scmp.eq.s32.totalorder %s24, 0
      %p98 = por %p96, %p97
      %s99 = ssub.s32 %s18, %s25
      %p100 = scmp.eq.s32.totalorder %s99, 0
      %s102 = sadd.s32 %s101, 1
      %s103 = scalar_select %p100, %s101, %s102
      %p106 = pneg %p100
      %p107 = scmp.eq.s32.totalorder %s18, 1
      %p108 = por %p106, %p107
      %p109 = scmp.ne.s32.totalorder %s101, %s104
      %p110 = scmp.eq.s32.totalorder %s18, 0
      %p111 = por %p109, %p110
      %p112 = scmp.ne.s32.totalorder %s101, %s104
      %p113 = scmp.eq.s32.totalorder %s23, 1
      %p114 = por %p112, %p113
      %p115 = scmp.ne.s32.totalorder %s104, %s105
      %p116 = scmp.eq.s32.totalorder %s23, 0
      %p117 = por %p115, %p116
      %p118 = scmp.ne.s32.totalorder %s104, %s105
      %p119 = scmp.eq.s32.totalorder %s24, 1
      %p120 = por %p118, %p119
      %p122 = scmp.ne.s32.totalorder %s105, %s121
      %p123 = scmp.eq.s32.totalorder %s24, 0
      %p124 = por %p122, %p123
      %p125 = scmp.le.s32.totalorder 1, %s18
      %p126 = scmp.lt.s32.totalorder %s18, 3
      %p127 = pnand %p125, %p126
      %p128 = pneg %p127
      // Predicated region
      $region9: #{model_forward.1} parent=5 // pred_check
        _
      $region10: #{model_forward.1} parent=5 // pred_check_branch
        %130 = sbr.rel (%p127) target = $region12
      $region11: #{model_forward.1} parent=5 // pred_region
        %s131 = ssub.s32 %s18, 1
        // Predicated region
        $region13: #{model_forward.1} parent=11 // pred_check
          %p132 = pneg %p39
        $region14: #{model_forward.1} parent=11 // pred_check_branch
          %134 = sbr.rel (%p132) target = $region16
        $region15: #{model_forward.1} parent=11 // pred_region
          _
        $region16: #{model_forward.1} parent=11 // pred_fallthru
          _
      $region12: #{model_forward.1} parent=5 // pred_fallthru
        _
      %p135 = scmp.lt.s32.totalorder %s18, 2
      // Predicated region
      $region17: #{model_forward.1} parent=5 // pred_check
        %p136 = pneg %p135
      $region18: #{model_forward.1} parent=5 // pred_check_branch
        %138 = sbr.rel (%p136) target = $region20
      $region19: #{model_forward.1} parent=5 // pred_region
        // Predicated region
        $region21: #{model_forward.1} parent=19 // pred_check
          %p139 = pneg %p59
        $region22: #{model_forward.1} parent=19 // pred_check_branch
          %141 = sbr.rel (%p139) target = $region24
        $region23: #{model_forward.1} parent=19 // pred_region
          %s142 = sand.u32 %s49, 1
          %s143 = scalar_lea.sflag [#allocation3], %s142
          %s144 = sand.u32 %s49, 1
          %s145 = smul.addr %s144, 9216
          %s146 = scalar_lea.vmem [#allocation2], %s145
          %s148 = ssub.s32 147456, 147456
          %149 = vsyncadd %s143, %s148
          %s150 = smul.addr %s18, 1152
          %s151 = smul.addr %s150, 128
          %s152 = scalar_lea.hbm %s1, %s151
          %s153 = sshll.u32 %s146, 4
          %s154 = int_to_ptr.vmem [resolvable:$true] %s153
          %159 = dma.hbm_to_vmem [thread:$0]  %s152, 147456, %s154, %s143, 384, 384, 24
        $region24: #{model_forward.1} parent=19 // pred_fallthru
          _
        // Predicated region
        $region25: #{model_forward.1} parent=19 // pred_check
          %p160 = pneg %p85
        $region26: #{model_forward.1} parent=19 // pred_check_branch
          %162 = sbr.rel (%p160) target = $region28
        $region27: #{model_forward.1} parent=19 // pred_region
          %s163 = sand.u32 %s75, 1
          %s164 = scalar_lea.sflag [#allocation6], %s163
          %s165 = sand.u32 %s75, 1
          %s166 = smul.addr %s165, 3
          %s167 = scalar_lea.vmem [#allocation5], %s166
          %s168 = smul.u32 3, %s18
          %s170 = ssub.s32 48, 48
          %171 = vsyncadd %s164, %s170
          %s172 = smul.addr %s168, 16
          %s173 = scalar_lea.hbm %s2, %s172
          %s175 = sshll.u32 %s167, 4
          %s176 = int_to_ptr.vmem [resolvable:$true] %s175
          %178 = dma.hbm_to_vmem [thread:$0]  %s173, 48, %s176, %s164
        $region28: #{model_forward.1} parent=19 // pred_fallthru
          _
      $region20: #{model_forward.1} parent=5 // pred_fallthru
        _
      %p179 = scmp.le.s32.totalorder 1, %s18
      %p180 = scmp.lt.s32.totalorder %s18, 3
      %p181 = pnand %p179, %p180
      %p182 = pneg %p181
      // Predicated region
      $region29: #{model_forward.1} parent=5 // pred_check
        _
      $region30: #{model_forward.1} parent=5 // pred_check_branch
        %184 = sbr.rel (%p181) target = $region32
      $region31: #{model_forward.1} parent=5 // pred_region
        %s185 = ssub.s32 %s18, 1
        %s186 = sand.u32 %s52, 1
        %s187 = scalar_lea.sflag [#allocation3], %s186
        %s188 = sand.u32 %s52, 1
        %s189 = smul.addr %s188, 9216
        %s190 = scalar_lea.vmem [#allocation2], %s189
        // Predicated region
        $region33: #{model_forward.1} parent=31 // pred_check
          %p191 = pneg %p65
        $region34: #{model_forward.1} parent=31 // pred_check_branch
          %193 = sbr.rel (%p191) target = $region36
        $region35: #{model_forward.1} parent=31 // pred_region
          %194 = dma.done %s187, 147456
        $region36: #{model_forward.1} parent=31 // pred_fallthru
          _
        %s195 = sand.u32 %s78, 1
        %s196 = scalar_lea.sflag [#allocation6], %s195
        %s197 = sand.u32 %s78, 1
        %s198 = smul.addr %s197, 3
        %s199 = scalar_lea.vmem [#allocation5], %s198
        // Predicated region
        $region37: #{model_forward.1} parent=31 // pred_check
          %p200 = pneg %p91
        $region38: #{model_forward.1} parent=31 // pred_check_branch
          %202 = sbr.rel (%p200) target = $region40
        $region39: #{model_forward.1} parent=31 // pred_region
          %203 = dma.done %s196, 48
        $region40: #{model_forward.1} parent=31 // pred_fallthru
          _
        %p204 = pneg %p39
        %p205 = pneg %p36
        %s206 = sand.u32 %s52, 1
        %s207 = scalar_lea.sflag [#allocation3], %s206
        %s208 = sand.u32 %s52, 1
        %s209 = smul.addr %s208, 9216
        %s210 = scalar_lea.vmem [#allocation2], %s209
        %p211 = pneg %p65
        %p212 = pneg %p62
        %s213 = sand.u32 %s78, 1
        %s214 = scalar_lea.sflag [#allocation6], %s213
        %s215 = sand.u32 %s78, 1
        %s216 = smul.addr %s215, 3
        %s217 = scalar_lea.vmem [#allocation5], %s216
        %p218 = pneg %p91
        %p219 = pneg %p88
        %p220 = pneg %p117
        %p221 = pneg %p114
        %s222 = sand.u32 %s104, 1
        %s223 = scalar_lea.sflag [#allocation4], %s222
        %s224 = sand.u32 %s104, 1
        %s225 = smul.addr %s224, 6
        %s226 = scalar_lea.vmem [#allocation7], %s225
        %s227 = smul.u32 3, %s23
        %s228 = smul.u32 3, %s23
        %v229 = vld [vmem:[%s0] sm:$0xff]
        %v230 = vld [vmem:[%s0 + $0x8] sm:$0xff]
        %v231 = vld [vmem:[%s0 + $0x10] sm:$0xff]
        %v232 = vld [vmem:[%s0 + $0x18] sm:$0xff]
        %v233 = vld [vmem:[%s0 + $0x20] sm:$0xff]
        %v234 = vld [vmem:[%s0 + $0x28] sm:$0xff]
        %v235 = vld [vmem:[%s190] sm:$0xff]
        %v236 = vld [vmem:[%s190 + $0x8] sm:$0xff]
        %v237 = vld [vmem:[%s190 + $0x10] sm:$0xff]
        %v238 = vld [vmem:[%s190 + $0x18] sm:$0xff]
        %v239 = vld [vmem:[%s190 + $0x20] sm:$0xff]
        %v240 = vld [vmem:[%s190 + $0x28] sm:$0xff]
        %v241 = vld [vmem:[%s190 + $0x30] sm:$0xff]
        %v242 = vld [vmem:[%s190 + $0x38] sm:$0xff]
        %v243 = vld [vmem:[%s190 + $0x40] sm:$0xff]
        %v244 = vld [vmem:[%s190 + $0x48] sm:$0xff]
        %v245 = vld [vmem:[%s190 + $0x50] sm:$0xff]
        %v246 = vld [vmem:[%s190 + $0x58] sm:$0xff]
        %v247 = vld [vmem:[%s190 + $0x60] sm:$0xff]
        %v248 = vld [vmem:[%s190 + $0x68] sm:$0xff]
        %v249 = vld [vmem:[%s190 + $0x70] sm:$0xff]
        %v250 = vld [vmem:[%s190 + $0x78] sm:$0xff]
        %v251 = vld [vmem:[%s190 + $0x80] sm:$0xff]
        %v252 = vld [vmem:[%s190 + $0x88] sm:$0xff]
        %v253 = vld [vmem:[%s190 + $0x90] sm:$0xff]
        %v254 = vld [vmem:[%s190 + $0x98] sm:$0xff]
        %v255 = vld [vmem:[%s190 + $0xa0] sm:$0xff]
        %v256 = vld [vmem:[%s190 + $0xa8] sm:$0xff]
        %v257 = vld [vmem:[%s190 + $0xb0] sm:$0xff]
        %v258 = vld [vmem:[%s190 + $0xb8] sm:$0xff]
        %v259 = vld [vmem:[%s190 + $0xc0] sm:$0xff]
        %v260 = vld [vmem:[%s190 + $0xc8] sm:$0xff]
        %v261 = vld [vmem:[%s190 + $0xd0] sm:$0xff]
        %v262 = vld [vmem:[%s190 + $0xd8] sm:$0xff]
        %v263 = vld [vmem:[%s190 + $0xe0] sm:$0xff]
        %v264 = vld [vmem:[%s190 + $0xe8] sm:$0xff]
        %v265 = vld [vmem:[%s190 + $0xf0] sm:$0xff]
        %v266 = vld [vmem:[%s190 + $0xf8] sm:$0xff]
        %v267 = vld [vmem:[%s190 + $0x100] sm:$0xff]
        %v268 = vld [vmem:[%s190 + $0x108] sm:$0xff]
        %v269 = vld [vmem:[%s190 + $0x110] sm:$0xff]
        %v270 = vld [vmem:[%s190 + $0x118] sm:$0xff]
        %v271 = vld [vmem:[%s190 + $0x120] sm:$0xff]
        %v272 = vld [vmem:[%s190 + $0x128] sm:$0xff]
        %v273 = vld [vmem:[%s190 + $0x130] sm:$0xff]
        %v274 = vld [vmem:[%s190 + $0x138] sm:$0xff]
        %v275 = vld [vmem:[%s190 + $0x140] sm:$0xff]
        %v276 = vld [vmem:[%s190 + $0x148] sm:$0xff]
        %v277 = vld [vmem:[%s190 + $0x150] sm:$0xff]
        %v278 = vld [vmem:[%s190 + $0x158] sm:$0xff]
        %v279 = vld [vmem:[%s190 + $0x160] sm:$0xff]
        %v280 = vld [vmem:[%s190 + $0x168] sm:$0xff]
        %v281 = vld [vmem:[%s190 + $0x170] sm:$0xff]
        %v282 = vld [vmem:[%s190 + $0x178] sm:$0xff]
        %v283 = vld [vmem:[%s190 + $0x180] sm:$0xff]
        %v284 = vld [vmem:[%s190 + $0x188] sm:$0xff]
        %v285 = vld [vmem:[%s190 + $0x190] sm:$0xff]
        %v286 = vld [vmem:[%s190 + $0x198] sm:$0xff]
        %v287 = vld [vmem:[%s190 + $0x1a0] sm:$0xff]
        %v288 = vld [vmem:[%s190 + $0x1a8] sm:$0xff]
        %v289 = vld [vmem:[%s190 + $0x1b0] sm:$0xff]
        %v290 = vld [vmem:[%s190 + $0x1b8] sm:$0xff]
        %v291 = vld [vmem:[%s190 + $0x1c0] sm:$0xff]
        %v292 = vld [vmem:[%s190 + $0x1c8] sm:$0xff]
        %v293 = vld [vmem:[%s190 + $0x1d0] sm:$0xff]
        %v294 = vld [vmem:[%s190 + $0x1d8] sm:$0xff]
        %v295 = vld [vmem:[%s190 + $0x1e0] sm:$0xff]
        %v296 = vld [vmem:[%s190 + $0x1e8] sm:$0xff]
        %v297 = vld [vmem:[%s190 + $0x1f0] sm:$0xff]
        %v298 = vld [vmem:[%s190 + $0x1f8] sm:$0xff]
        %v299 = vld [vmem:[%s190 + $0x200] sm:$0xff]
        %v300 = vld [vmem:[%s190 + $0x208] sm:$0xff]
        %v301 = vld [vmem:[%s190 + $0x210] sm:$0xff]
        %v302 = vld [vmem:[%s190 + $0x218] sm:$0xff]
        %v303 = vld [vmem:[%s190 + $0x220] sm:$0xff]
        %v304 = vld [vmem:[%s190 + $0x228] sm:$0xff]
        %v305 = vld [vmem:[%s190 + $0x230] sm:$0xff]
        %v306 = vld [vmem:[%s190 + $0x238] sm:$0xff]
        %v307 = vld [vmem:[%s190 + $0x240] sm:$0xff]
        %v308 = vld [vmem:[%s190 + $0x248] sm:$0xff]
        %v309 = vld [vmem:[%s190 + $0x250] sm:$0xff]
        %v310 = vld [vmem:[%s190 + $0x258] sm:$0xff]
        %v311 = vld [vmem:[%s190 + $0x260] sm:$0xff]
        %v312 = vld [vmem:[%s190 + $0x268] sm:$0xff]
        %v313 = vld [vmem:[%s190 + $0x270] sm:$0xff]
        %v314 = vld [vmem:[%s190 + $0x278] sm:$0xff]
        %v315 = vld [vmem:[%s190 + $0x280] sm:$0xff]
        %v316 = vld [vmem:[%s190 + $0x288] sm:$0xff]
        %v317 = vld [vmem:[%s190 + $0x290] sm:$0xff]
        %v318 = vld [vmem:[%s190 + $0x298] sm:$0xff]
        %v319 = vld [vmem:[%s190 + $0x2a0] sm:$0xff]
        %v320 = vld [vmem:[%s190 + $0x2a8] sm:$0xff]
        %v321 = vld [vmem:[%s190 + $0x2b0] sm:$0xff]
        %v322 = vld [vmem:[%s190 + $0x2b8] sm:$0xff]
        %v323 = vld [vmem:[%s190 + $0x2c0] sm:$0xff]
        %v324 = vld [vmem:[%s190 + $0x2c8] sm:$0xff]
        %v325 = vld [vmem:[%s190 + $0x2d0] sm:$0xff]
        %v326 = vld [vmem:[%s190 + $0x2d8] sm:$0xff]
        %v327 = vld [vmem:[%s190 + $0x2e0] sm:$0xff]
        %v328 = vld [vmem:[%s190 + $0x2e8] sm:$0xff]
        %v329 = vld [vmem:[%s190 + $0x2f0] sm:$0xff]
        %v330 = vld [vmem:[%s190 + $0x2f8] sm:$0xff]
        %v331 = vld [vmem:[%s190 + $0x300] sm:$0xff]
        %v332 = vld [vmem:[%s190 + $0x308] sm:$0xff]
        %v333 = vld [vmem:[%s190 + $0x310] sm:$0xff]
        %v334 = vld [vmem:[%s190 + $0x318] sm:$0xff]
        %v335 = vld [vmem:[%s190 + $0x320] sm:$0xff]
        %v336 = vld [vmem:[%s190 + $0x328] sm:$0xff]
        %v337 = vld [vmem:[%s190 + $0x330] sm:$0xff]
        %v338 = vld [vmem:[%s190 + $0x338] sm:$0xff]
        %v339 = vld [vmem:[%s190 + $0x340] sm:$0xff]
        %v340 = vld [vmem:[%s190 + $0x348] sm:$0xff]
        %v341 = vld [vmem:[%s190 + $0x350] sm:$0xff]
        %v342 = vld [vmem:[%s190 + $0x358] sm:$0xff]
        %v343 = vld [vmem:[%s190 + $0x360] sm:$0xff]
        %v344 = vld [vmem:[%s190 + $0x368] sm:$0xff]
        %v345 = vld [vmem:[%s190 + $0x370] sm:$0xff]
        %v346 = vld [vmem:[%s190 + $0x378] sm:$0xff]
        %v347 = vld [vmem:[%s190 + $0x380] sm:$0xff]
        %v348 = vld [vmem:[%s190 + $0x388] sm:$0xff]
        %v349 = vld [vmem:[%s190 + $0x390] sm:$0xff]
        %v350 = vld [vmem:[%s190 + $0x398] sm:$0xff]
        %v351 = vld [vmem:[%s190 + $0x3a0] sm:$0xff]
        %v352 = vld [vmem:[%s190 + $0x3a8] sm:$0xff]
        %v353 = vld [vmem:[%s190 + $0x3b0] sm:$0xff]
        %v354 = vld [vmem:[%s190 + $0x3b8] sm:$0xff]
        %v355 = vld [vmem:[%s190 + $0x3c0] sm:$0xff]
        %v356 = vld [vmem:[%s190 + $0x3c8] sm:$0xff]
        %v357 = vld [vmem:[%s190 + $0x3d0] sm:$0xff]
        %v358 = vld [vmem:[%s190 + $0x3d8] sm:$0xff]
        %v359 = vld [vmem:[%s190 + $0x3e0] sm:$0xff]
        %v360 = vld [vmem:[%s190 + $0x3e8] sm:$0xff]
        %v361 = vld [vmem:[%s190 + $0x3f0] sm:$0xff]
        %v362 = vld [vmem:[%s190 + $0x3f8] sm:$0xff]
        %v363 = vld [vmem:[%s190 + $0x400] sm:$0xff]
        %v364 = vld [vmem:[%s190 + $0x408] sm:$0xff]
        %v365 = vld [vmem:[%s190 + $0x410] sm:$0xff]
        %v366 = vld [vmem:[%s190 + $0x418] sm:$0xff]
        %v367 = vld [vmem:[%s190 + $0x420] sm:$0xff]
        %v368 = vld [vmem:[%s190 + $0x428] sm:$0xff]
        %v369 = vld [vmem:[%s190 + $0x430] sm:$0xff]
        %v370 = vld [vmem:[%s190 + $0x438] sm:$0xff]
        %v371 = vld [vmem:[%s190 + $0x440] sm:$0xff]
        %v372 = vld [vmem:[%s190 + $0x448] sm:$0xff]
        %v373 = vld [vmem:[%s190 + $0x450] sm:$0xff]
        %v374 = vld [vmem:[%s190 + $0x458] sm:$0xff]
        %v375 = vld [vmem:[%s190 + $0x460] sm:$0xff]
        %v376 = vld [vmem:[%s190 + $0x468] sm:$0xff]
        %v377 = vld [vmem:[%s190 + $0x470] sm:$0xff]
        %v378 = vld [vmem:[%s190 + $0x478] sm:$0xff]
        %v379 = vld [vmem:[%s190 + $0x480] sm:$0xff]
        %v380 = vld [vmem:[%s190 + $0x488] sm:$0xff]
        %v381 = vld [vmem:[%s190 + $0x490] sm:$0xff]
        %v382 = vld [vmem:[%s190 + $0x498] sm:$0xff]
        %v383 = vld [vmem:[%s190 + $0x4a0] sm:$0xff]
        %v384 = vld [vmem:[%s190 + $0x4a8] sm:$0xff]
        %v385 = vld [vmem:[%s190 + $0x4b0] sm:$0xff]
        %v386 = vld [vmem:[%s190 + $0x4b8] sm:$0xff]
        %v387 = vld [vmem:[%s190 + $0x4c0] sm:$0xff]
        %v388 = vld [vmem:[%s190 + $0x4c8] sm:$0xff]
        %v389 = vld [vmem:[%s190 + $0x4d0] sm:$0xff]
        %v390 = vld [vmem:[%s190 + $0x4d8] sm:$0xff]
        %v391 = vld [vmem:[%s190 + $0x4e0] sm:$0xff]
        %v392 = vld [vmem:[%s190 + $0x4e8] sm:$0xff]
        %v393 = vld [vmem:[%s190 + $0x4f0] sm:$0xff]
        %v394 = vld [vmem:[%s190 + $0x4f8] sm:$0xff]
        %v395 = vld [vmem:[%s190 + $0x500] sm:$0xff]
        %v396 = vld [vmem:[%s190 + $0x508] sm:$0xff]
        %v397 = vld [vmem:[%s190 + $0x510] sm:$0xff]
        %v398 = vld [vmem:[%s190 + $0x518] sm:$0xff]
        %v399 = vld [vmem:[%s190 + $0x520] sm:$0xff]
        %v400 = vld [vmem:[%s190 + $0x528] sm:$0xff]
        %v401 = vld [vmem:[%s190 + $0x530] sm:$0xff]
        %v402 = vld [vmem:[%s190 + $0x538] sm:$0xff]
        %v403 = vld [vmem:[%s190 + $0x540] sm:$0xff]
        %v404 = vld [vmem:[%s190 + $0x548] sm:$0xff]
        %v405 = vld [vmem:[%s190 + $0x550] sm:$0xff]
        %v406 = vld [vmem:[%s190 + $0x558] sm:$0xff]
        %v407 = vld [vmem:[%s190 + $0x560] sm:$0xff]
        %v408 = vld [vmem:[%s190 + $0x568] sm:$0xff]
        %v409 = vld [vmem:[%s190 + $0x570] sm:$0xff]
        %v410 = vld [vmem:[%s190 + $0x578] sm:$0xff]
        %v411 = vld [vmem:[%s190 + $0x580] sm:$0xff]
        %v412 = vld [vmem:[%s190 + $0x588] sm:$0xff]
        %v413 = vld [vmem:[%s190 + $0x590] sm:$0xff]
        %v414 = vld [vmem:[%s190 + $0x598] sm:$0xff]
        %v415 = vld [vmem:[%s190 + $0x5a0] sm:$0xff]
        %v416 = vld [vmem:[%s190 + $0x5a8] sm:$0xff]
        %v417 = vld [vmem:[%s190 + $0x5b0] sm:$0xff]
        %v418 = vld [vmem:[%s190 + $0x5b8] sm:$0xff]
        %v419 = vld [vmem:[%s190 + $0x5c0] sm:$0xff]
        %v420 = vld [vmem:[%s190 + $0x5c8] sm:$0xff]
        %v421 = vld [vmem:[%s190 + $0x5d0] sm:$0xff]
        %v422 = vld [vmem:[%s190 + $0x5d8] sm:$0xff]
        %v423 = vld [vmem:[%s190 + $0x5e0] sm:$0xff]
        %v424 = vld [vmem:[%s190 + $0x5e8] sm:$0xff]
        %v425 = vld [vmem:[%s190 + $0x5f0] sm:$0xff]
        %v426 = vld [vmem:[%s190 + $0x5f8] sm:$0xff]
        %v427 = vld [vmem:[%s190 + $0x600] sm:$0xff]
        %v428 = vld [vmem:[%s190 + $0x608] sm:$0xff]
        %v429 = vld [vmem:[%s190 + $0x610] sm:$0xff]
        %v430 = vld [vmem:[%s190 + $0x618] sm:$0xff]
        %v431 = vld [vmem:[%s190 + $0x620] sm:$0xff]
        %v432 = vld [vmem:[%s190 + $0x628] sm:$0xff]
        %v433 = vld [vmem:[%s190 + $0x630] sm:$0xff]
        %v434 = vld [vmem:[%s190 + $0x638] sm:$0xff]
        %v435 = vld [vmem:[%s190 + $0x640] sm:$0xff]
        %v436 = vld [vmem:[%s190 + $0x648] sm:$0xff]
        %v437 = vld [vmem:[%s190 + $0x650] sm:$0xff]
        %v438 = vld [vmem:[%s190 + $0x658] sm:$0xff]
        %v439 = vld [vmem:[%s190 + $0x660] sm:$0xff]
        %v440 = vld [vmem:[%s190 + $0x668] sm:$0xff]
        %v441 = vld [vmem:[%s190 + $0x670] sm:$0xff]
        %v442 = vld [vmem:[%s190 + $0x678] sm:$0xff]
        %v443 = vld [vmem:[%s190 + $0x680] sm:$0xff]
        %v444 = vld [vmem:[%s190 + $0x688] sm:$0xff]
        %v445 = vld [vmem:[%s190 + $0x690] sm:$0xff]
        %v446 = vld [vmem:[%s190 + $0x698] sm:$0xff]
        %v447 = vld [vmem:[%s190 + $0x6a0] sm:$0xff]
        %v448 = vld [vmem:[%s190 + $0x6a8] sm:$0xff]
        %v449 = vld [vmem:[%s190 + $0x6b0] sm:$0xff]
        %v450 = vld [vmem:[%s190 + $0x6b8] sm:$0xff]
        %v451 = vld [vmem:[%s190 + $0x6c0] sm:$0xff]
        %v452 = vld [vmem:[%s190 + $0x6c8] sm:$0xff]
        %v453 = vld [vmem:[%s190 + $0x6d0] sm:$0xff]
        %v454 = vld [vmem:[%s190 + $0x6d8] sm:$0xff]
        %v455 = vld [vmem:[%s190 + $0x6e0] sm:$0xff]
        %v456 = vld [vmem:[%s190 + $0x6e8] sm:$0xff]
        %v457 = vld [vmem:[%s190 + $0x6f0] sm:$0xff]
        %v458 = vld [vmem:[%s190 + $0x6f8] sm:$0xff]
        %v459 = vld [vmem:[%s190 + $0x700] sm:$0xff]
        %v460 = vld [vmem:[%s190 + $0x708] sm:$0xff]
        %v461 = vld [vmem:[%s190 + $0x710] sm:$0xff]
        %v462 = vld [vmem:[%s190 + $0x718] sm:$0xff]
        %v463 = vld [vmem:[%s190 + $0x720] sm:$0xff]
        %v464 = vld [vmem:[%s190 + $0x728] sm:$0xff]
        %v465 = vld [vmem:[%s190 + $0x730] sm:$0xff]
        %v466 = vld [vmem:[%s190 + $0x738] sm:$0xff]
        %v467 = vld [vmem:[%s190 + $0x740] sm:$0xff]
        %v468 = vld [vmem:[%s190 + $0x748] sm:$0xff]
        %v469 = vld [vmem:[%s190 + $0x750] sm:$0xff]
        %v470 = vld [vmem:[%s190 + $0x758] sm:$0xff]
        %v471 = vld [vmem:[%s190 + $0x760] sm:$0xff]
        %v472 = vld [vmem:[%s190 + $0x768] sm:$0xff]
        %v473 = vld [vmem:[%s190 + $0x770] sm:$0xff]
        %v474 = vld [vmem:[%s190 + $0x778] sm:$0xff]
        %v475 = vld [vmem:[%s190 + $0x780] sm:$0xff]
        %v476 = vld [vmem:[%s190 + $0x788] sm:$0xff]
        %v477 = vld [vmem:[%s190 + $0x790] sm:$0xff]
        %v478 = vld [vmem:[%s190 + $0x798] sm:$0xff]
        %v479 = vld [vmem:[%s190 + $0x7a0] sm:$0xff]
        %v480 = vld [vmem:[%s190 + $0x7a8] sm:$0xff]
        %v481 = vld [vmem:[%s190 + $0x7b0] sm:$0xff]
        %v482 = vld [vmem:[%s190 + $0x7b8] sm:$0xff]
        %v483 = vld [vmem:[%s190 + $0x7c0] sm:$0xff]
        %v484 = vld [vmem:[%s190 + $0x7c8] sm:$0xff]
        %v485 = vld [vmem:[%s190 + $0x7d0] sm:$0xff]
        %v486 = vld [vmem:[%s190 + $0x7d8] sm:$0xff]
        %v487 = vld [vmem:[%s190 + $0x7e0] sm:$0xff]
        %v488 = vld [vmem:[%s190 + $0x7e8] sm:$0xff]
        %v489 = vld [vmem:[%s190 + $0x7f0] sm:$0xff]
        %v490 = vld [vmem:[%s190 + $0x7f8] sm:$0xff]
        %v491 = vld [vmem:[%s190 + $0x800] sm:$0xff]
        %v492 = vld [vmem:[%s190 + $0x808] sm:$0xff]
        %v493 = vld [vmem:[%s190 + $0x810] sm:$0xff]
        %v494 = vld [vmem:[%s190 + $0x818] sm:$0xff]
        %v495 = vld [vmem:[%s190 + $0x820] sm:$0xff]
        %v496 = vld [vmem:[%s190 + $0x828] sm:$0xff]
        %v497 = vld [vmem:[%s190 + $0x830] sm:$0xff]
        %v498 = vld [vmem:[%s190 + $0x838] sm:$0xff]
        %v499 = vld [vmem:[%s190 + $0x840] sm:$0xff]
        %v500 = vld [vmem:[%s190 + $0x848] sm:$0xff]
        %v501 = vld [vmem:[%s190 + $0x850] sm:$0xff]
        %v502 = vld [vmem:[%s190 + $0x858] sm:$0xff]
        %v503 = vld [vmem:[%s190 + $0x860] sm:$0xff]
        %v504 = vld [vmem:[%s190 + $0x868] sm:$0xff]
        %v505 = vld [vmem:[%s190 + $0x870] sm:$0xff]
        %v506 = vld [vmem:[%s190 + $0x878] sm:$0xff]
        %v507 = vld [vmem:[%s190 + $0x880] sm:$0xff]
        %v508 = vld [vmem:[%s190 + $0x888] sm:$0xff]
        %v509 = vld [vmem:[%s190 + $0x890] sm:$0xff]
        %v510 = vld [vmem:[%s190 + $0x898] sm:$0xff]
        %v511 = vld [vmem:[%s190 + $0x8a0] sm:$0xff]
        %v512 = vld [vmem:[%s190 + $0x8a8] sm:$0xff]
        %v513 = vld [vmem:[%s190 + $0x8b0] sm:$0xff]
        %v514 = vld [vmem:[%s190 + $0x8b8] sm:$0xff]
        %v515 = vld [vmem:[%s190 + $0x8c0] sm:$0xff]
        %v516 = vld [vmem:[%s190 + $0x8c8] sm:$0xff]
        %v517 = vld [vmem:[%s190 + $0x8d0] sm:$0xff]
        %v518 = vld [vmem:[%s190 + $0x8d8] sm:$0xff]
        %v519 = vld [vmem:[%s190 + $0x8e0] sm:$0xff]
        %v520 = vld [vmem:[%s190 + $0x8e8] sm:$0xff]
        %v521 = vld [vmem:[%s190 + $0x8f0] sm:$0xff]
        %v522 = vld [vmem:[%s190 + $0x8f8] sm:$0xff]
        %v523 = vld [vmem:[%s190 + $0x900] sm:$0xff]
        %v524 = vld [vmem:[%s190 + $0x908] sm:$0xff]
        %v525 = vld [vmem:[%s190 + $0x910] sm:$0xff]
        %v526 = vld [vmem:[%s190 + $0x918] sm:$0xff]
        %v527 = vld [vmem:[%s190 + $0x920] sm:$0xff]
        %v528 = vld [vmem:[%s190 + $0x928] sm:$0xff]
        %v529 = vld [vmem:[%s190 + $0x930] sm:$0xff]
        %v530 = vld [vmem:[%s190 + $0x938] sm:$0xff]
        %v531 = vld [vmem:[%s190 + $0x940] sm:$0xff]
        %v532 = vld [vmem:[%s190 + $0x948] sm:$0xff]
        %v533 = vld [vmem:[%s190 + $0x950] sm:$0xff]
        %v534 = vld [vmem:[%s190 + $0x958] sm:$0xff]
        %v535 = vld [vmem:[%s190 + $0x960] sm:$0xff]
        %v536 = vld [vmem:[%s190 + $0x968] sm:$0xff]
        %v537 = vld [vmem:[%s190 + $0x970] sm:$0xff]
        %v538 = vld [vmem:[%s190 + $0x978] sm:$0xff]
        %v539 = vld [vmem:[%s190 + $0x980] sm:$0xff]
        %v540 = vld [vmem:[%s190 + $0x988] sm:$0xff]
        %v541 = vld [vmem:[%s190 + $0x990] sm:$0xff]
        %v542 = vld [vmem:[%s190 + $0x998] sm:$0xff]
        %v543 = vld [vmem:[%s190 + $0x9a0] sm:$0xff]
        %v544 = vld [vmem:[%s190 + $0x9a8] sm:$0xff]
        %v545 = vld [vmem:[%s190 + $0x9b0] sm:$0xff]
        %v546 = vld [vmem:[%s190 + $0x9b8] sm:$0xff]
        %v547 = vld [vmem:[%s190 + $0x9c0] sm:$0xff]
        %v548 = vld [vmem:[%s190 + $0x9c8] sm:$0xff]
        %v549 = vld [vmem:[%s190 + $0x9d0] sm:$0xff]
        %v550 = vld [vmem:[%s190 + $0x9d8] sm:$0xff]
        %v551 = vld [vmem:[%s190 + $0x9e0] sm:$0xff]
        %v552 = vld [vmem:[%s190 + $0x9e8] sm:$0xff]
        %v553 = vld [vmem:[%s190 + $0x9f0] sm:$0xff]
        %v554 = vld [vmem:[%s190 + $0x9f8] sm:$0xff]
        %v555 = vld [vmem:[%s190 + $0xa00] sm:$0xff]
        %v556 = vld [vmem:[%s190 + $0xa08] sm:$0xff]
        %v557 = vld [vmem:[%s190 + $0xa10] sm:$0xff]
        %v558 = vld [vmem:[%s190 + $0xa18] sm:$0xff]
        %v559 = vld [vmem:[%s190 + $0xa20] sm:$0xff]
        %v560 = vld [vmem:[%s190 + $0xa28] sm:$0xff]
        %v561 = vld [vmem:[%s190 + $0xa30] sm:$0xff]
        %v562 = vld [vmem:[%s190 + $0xa38] sm:$0xff]
        %v563 = vld [vmem:[%s190 + $0xa40] sm:$0xff]
        %v564 = vld [vmem:[%s190 + $0xa48] sm:$0xff]
        %v565 = vld [vmem:[%s190 + $0xa50] sm:$0xff]
        %v566 = vld [vmem:[%s190 + $0xa58] sm:$0xff]
        %v567 = vld [vmem:[%s190 + $0xa60] sm:$0xff]
        %v568 = vld [vmem:[%s190 + $0xa68] sm:$0xff]
        %v569 = vld [vmem:[%s190 + $0xa70] sm:$0xff]
        %v570 = vld [vmem:[%s190 + $0xa78] sm:$0xff]
        %v571 = vld [vmem:[%s190 + $0xa80] sm:$0xff]
        %v572 = vld [vmem:[%s190 + $0xa88] sm:$0xff]
        %v573 = vld [vmem:[%s190 + $0xa90] sm:$0xff]
        %v574 = vld [vmem:[%s190 + $0xa98] sm:$0xff]
        %v575 = vld [vmem:[%s190 + $0xaa0] sm:$0xff]
        %v576 = vld [vmem:[%s190 + $0xaa8] sm:$0xff]
        %v577 = vld [vmem:[%s190 + $0xab0] sm:$0xff]
        %v578 = vld [vmem:[%s190 + $0xab8] sm:$0xff]
        %v579 = vld [vmem:[%s190 + $0xac0] sm:$0xff]
        %v580 = vld [vmem:[%s190 + $0xac8] sm:$0xff]
        %v581 = vld [vmem:[%s190 + $0xad0] sm:$0xff]
        %v582 = vld [vmem:[%s190 + $0xad8] sm:$0xff]
        %v583 = vld [vmem:[%s190 + $0xae0] sm:$0xff]
        %v584 = vld [vmem:[%s190 + $0xae8] sm:$0xff]
        %v585 = vld [vmem:[%s190 + $0xaf0] sm:$0xff]
        %v586 = vld [vmem:[%s190 + $0xaf8] sm:$0xff]
        %v587 = vld [vmem:[%s190 + $0xb00] sm:$0xff]
        %v588 = vld [vmem:[%s190 + $0xb08] sm:$0xff]
        %v589 = vld [vmem:[%s190 + $0xb10] sm:$0xff]
        %v590 = vld [vmem:[%s190 + $0xb18] sm:$0xff]
        %v591 = vld [vmem:[%s190 + $0xb20] sm:$0xff]
        %v592 = vld [vmem:[%s190 + $0xb28] sm:$0xff]
        %v593 = vld [vmem:[%s190 + $0xb30] sm:$0xff]
        %v594 = vld [vmem:[%s190 + $0xb38] sm:$0xff]
        %v595 = vld [vmem:[%s190 + $0xb40] sm:$0xff]
        %v596 = vld [vmem:[%s190 + $0xb48] sm:$0xff]
        %v597 = vld [vmem:[%s190 + $0xb50] sm:$0xff]
        %v598 = vld [vmem:[%s190 + $0xb58] sm:$0xff]
        %v599 = vld [vmem:[%s190 + $0xb60] sm:$0xff]
        %v600 = vld [vmem:[%s190 + $0xb68] sm:$0xff]
        %v601 = vld [vmem:[%s190 + $0xb70] sm:$0xff]
        %v602 = vld [vmem:[%s190 + $0xb78] sm:$0xff]
        %v603 = vld [vmem:[%s190 + $0xb80] sm:$0xff]
        %v604 = vld [vmem:[%s190 + $0xb88] sm:$0xff]
        %v605 = vld [vmem:[%s190 + $0xb90] sm:$0xff]
        %v606 = vld [vmem:[%s190 + $0xb98] sm:$0xff]
        %v607 = vld [vmem:[%s190 + $0xba0] sm:$0xff]
        %v608 = vld [vmem:[%s190 + $0xba8] sm:$0xff]
        %v609 = vld [vmem:[%s190 + $0xbb0] sm:$0xff]
        %v610 = vld [vmem:[%s190 + $0xbb8] sm:$0xff]
        %v611 = vld [vmem:[%s190 + $0xbc0] sm:$0xff]
        %v612 = vld [vmem:[%s190 + $0xbc8] sm:$0xff]
        %v613 = vld [vmem:[%s190 + $0xbd0] sm:$0xff]
        %v614 = vld [vmem:[%s190 + $0xbd8] sm:$0xff]
        %v615 = vld [vmem:[%s190 + $0xbe0] sm:$0xff]
        %v616 = vld [vmem:[%s190 + $0xbe8] sm:$0xff]
        %v617 = vld [vmem:[%s190 + $0xbf0] sm:$0xff]
        %v618 = vld [vmem:[%s190 + $0xbf8] sm:$0xff]
        %v619 = vld [vmem:[%s190 + $0xc00] sm:$0xff]
        %v620 = vld [vmem:[%s190 + $0xc08] sm:$0xff]
        %v621 = vld [vmem:[%s190 + $0xc10] sm:$0xff]
        %v622 = vld [vmem:[%s190 + $0xc18] sm:$0xff]
        %v623 = vld [vmem:[%s190 + $0xc20] sm:$0xff]
        %v624 = vld [vmem:[%s190 + $0xc28] sm:$0xff]
        %v625 = vld [vmem:[%s190 + $0xc30] sm:$0xff]
        %v626 = vld [vmem:[%s190 + $0xc38] sm:$0xff]
        %v627 = vld [vmem:[%s190 + $0xc40] sm:$0xff]
        %v628 = vld [vmem:[%s190 + $0xc48] sm:$0xff]
        %v629 = vld [vmem:[%s190 + $0xc50] sm:$0xff]
        %v630 = vld [vmem:[%s190 + $0xc58] sm:$0xff]
        %v631 = vld [vmem:[%s190 + $0xc60] sm:$0xff]
        %v632 = vld [vmem:[%s190 + $0xc68] sm:$0xff]
        %v633 = vld [vmem:[%s190 + $0xc70] sm:$0xff]
        %v634 = vld [vmem:[%s190 + $0xc78] sm:$0xff]
        %v635 = vld [vmem:[%s190 + $0xc80] sm:$0xff]
        %v636 = vld [vmem:[%s190 + $0xc88] sm:$0xff]
        %v637 = vld [vmem:[%s190 + $0xc90] sm:$0xff]
        %v638 = vld [vmem:[%s190 + $0xc98] sm:$0xff]
        %v639 = vld [vmem:[%s190 + $0xca0] sm:$0xff]
        %v640 = vld [vmem:[%s190 + $0xca8] sm:$0xff]
        %v641 = vld [vmem:[%s190 + $0xcb0] sm:$0xff]
        %v642 = vld [vmem:[%s190 + $0xcb8] sm:$0xff]
        %v643 = vld [vmem:[%s190 + $0xcc0] sm:$0xff]
        %v644 = vld [vmem:[%s190 + $0xcc8] sm:$0xff]
        %v645 = vld [vmem:[%s190 + $0xcd0] sm:$0xff]
        %v646 = vld [vmem:[%s190 + $0xcd8] sm:$0xff]
        %v647 = vld [vmem:[%s190 + $0xce0] sm:$0xff]
        %v648 = vld [vmem:[%s190 + $0xce8] sm:$0xff]
        %v649 = vld [vmem:[%s190 + $0xcf0] sm:$0xff]
        %v650 = vld [vmem:[%s190 + $0xcf8] sm:$0xff]
        %v651 = vld [vmem:[%s190 + $0xd00] sm:$0xff]
        %v652 = vld [vmem:[%s190 + $0xd08] sm:$0xff]
        %v653 = vld [vmem:[%s190 + $0xd10] sm:$0xff]
        %v654 = vld [vmem:[%s190 + $0xd18] sm:$0xff]
        %v655 = vld [vmem:[%s190 + $0xd20] sm:$0xff]
        %v656 = vld [vmem:[%s190 + $0xd28] sm:$0xff]
        %v657 = vld [vmem:[%s190 + $0xd30] sm:$0xff]
        %v658 = vld [vmem:[%s190 + $0xd38] sm:$0xff]
        %v659 = vld [vmem:[%s190 + $0xd40] sm:$0xff]
        %v660 = vld [vmem:[%s190 + $0xd48] sm:$0xff]
        %v661 = vld [vmem:[%s190 + $0xd50] sm:$0xff]
        %v662 = vld [vmem:[%s190 + $0xd58] sm:$0xff]
        %v663 = vld [vmem:[%s190 + $0xd60] sm:$0xff]
        %v664 = vld [vmem:[%s190 + $0xd68] sm:$0xff]
        %v665 = vld [vmem:[%s190 + $0xd70] sm:$0xff]
        %v666 = vld [vmem:[%s190 + $0xd78] sm:$0xff]
        %v667 = vld [vmem:[%s190 + $0xd80] sm:$0xff]
        %v668 = vld [vmem:[%s190 + $0xd88] sm:$0xff]
        %v669 = vld [vmem:[%s190 + $0xd90] sm:$0xff]
        %v670 = vld [vmem:[%s190 + $0xd98] sm:$0xff]
        %v671 = vld [vmem:[%s190 + $0xda0] sm:$0xff]
        %v672 = vld [vmem:[%s190 + $0xda8] sm:$0xff]
        %v673 = vld [vmem:[%s190 + $0xdb0] sm:$0xff]
        %v674 = vld [vmem:[%s190 + $0xdb8] sm:$0xff]
        %v675 = vld [vmem:[%s190 + $0xdc0] sm:$0xff]
        %v676 = vld [vmem:[%s190 + $0xdc8] sm:$0xff]
        %v677 = vld [vmem:[%s190 + $0xdd0] sm:$0xff]
        %v678 = vld [vmem:[%s190 + $0xdd8] sm:$0xff]
        %v679 = vld [vmem:[%s190 + $0xde0] sm:$0xff]
        %v680 = vld [vmem:[%s190 + $0xde8] sm:$0xff]
        %v681 = vld [vmem:[%s190 + $0xdf0] sm:$0xff]
        %v682 = vld [vmem:[%s190 + $0xdf8] sm:$0xff]
        %v683 = vld [vmem:[%s190 + $0xe00] sm:$0xff]
        %v684 = vld [vmem:[%s190 + $0xe08] sm:$0xff]
        %v685 = vld [vmem:[%s190 + $0xe10] sm:$0xff]
        %v686 = vld [vmem:[%s190 + $0xe18] sm:$0xff]
        %v687 = vld [vmem:[%s190 + $0xe20] sm:$0xff]
        %v688 = vld [vmem:[%s190 + $0xe28] sm:$0xff]
        %v689 = vld [vmem:[%s190 + $0xe30] sm:$0xff]
        %v690 = vld [vmem:[%s190 + $0xe38] sm:$0xff]
        %v691 = vld [vmem:[%s190 + $0xe40] sm:$0xff]
        %v692 = vld [vmem:[%s190 + $0xe48] sm:$0xff]
        %v693 = vld [vmem:[%s190 + $0xe50] sm:$0xff]
        %v694 = vld [vmem:[%s190 + $0xe58] sm:$0xff]
        %v695 = vld [vmem:[%s190 + $0xe60] sm:$0xff]
        %v696 = vld [vmem:[%s190 + $0xe68] sm:$0xff]
        %v697 = vld [vmem:[%s190 + $0xe70] sm:$0xff]
        %v698 = vld [vmem:[%s190 + $0xe78] sm:$0xff]
        %v699 = vld [vmem:[%s190 + $0xe80] sm:$0xff]
        %v700 = vld [vmem:[%s190 + $0xe88] sm:$0xff]
        %v701 = vld [vmem:[%s190 + $0xe90] sm:$0xff]
        %v702 = vld [vmem:[%s190 + $0xe98] sm:$0xff]
        %v703 = vld [vmem:[%s190 + $0xea0] sm:$0xff]
        %v704 = vld [vmem:[%s190 + $0xea8] sm:$0xff]
        %v705 = vld [vmem:[%s190 + $0xeb0] sm:$0xff]
        %v706 = vld [vmem:[%s190 + $0xeb8] sm:$0xff]
        %v707 = vld [vmem:[%s190 + $0xec0] sm:$0xff]
        %v708 = vld [vmem:[%s190 + $0xec8] sm:$0xff]
        %v709 = vld [vmem:[%s190 + $0xed0] sm:$0xff]
        %v710 = vld [vmem:[%s190 + $0xed8] sm:$0xff]
        %v711 = vld [vmem:[%s190 + $0xee0] sm:$0xff]
        %v712 = vld [vmem:[%s190 + $0xee8] sm:$0xff]
        %v713 = vld [vmem:[%s190 + $0xef0] sm:$0xff]
        %v714 = vld [vmem:[%s190 + $0xef8] sm:$0xff]
        %v715 = vld [vmem:[%s190 + $0xf00] sm:$0xff]
        %v716 = vld [vmem:[%s190 + $0xf08] sm:$0xff]
        %v717 = vld [vmem:[%s190 + $0xf10] sm:$0xff]
        %v718 = vld [vmem:[%s190 + $0xf18] sm:$0xff]
        %v719 = vld [vmem:[%s190 + $0xf20] sm:$0xff]
        %v720 = vld [vmem:[%s190 + $0xf28] sm:$0xff]
        %v721 = vld [vmem:[%s190 + $0xf30] sm:$0xff]
        %v722 = vld [vmem:[%s190 + $0xf38] sm:$0xff]
        %v723 = vld [vmem:[%s190 + $0xf40] sm:$0xff]
        %v724 = vld [vmem:[%s190 + $0xf48] sm:$0xff]
        %v725 = vld [vmem:[%s190 + $0xf50] sm:$0xff]
        %v726 = vld [vmem:[%s190 + $0xf58] sm:$0xff]
        %v727 = vld [vmem:[%s190 + $0xf60] sm:$0xff]
        %v728 = vld [vmem:[%s190 + $0xf68] sm:$0xff]
        %v729 = vld [vmem:[%s190 + $0xf70] sm:$0xff]
        %v730 = vld [vmem:[%s190 + $0xf78] sm:$0xff]
        %v731 = vld [vmem:[%s190 + $0xf80] sm:$0xff]
        %v732 = vld [vmem:[%s190 + $0xf88] sm:$0xff]
        %v733 = vld [vmem:[%s190 + $0xf90] sm:$0xff]
        %v734 = vld [vmem:[%s190 + $0xf98] sm:$0xff]
        %v735 = vld [vmem:[%s190 + $0xfa0] sm:$0xff]
        %v736 = vld [vmem:[%s190 + $0xfa8] sm:$0xff]
        %v737 = vld [vmem:[%s190 + $0xfb0] sm:$0xff]
        %v738 = vld [vmem:[%s190 + $0xfb8] sm:$0xff]
        %v739 = vld [vmem:[%s190 + $0xfc0] sm:$0xff]
        %v740 = vld [vmem:[%s190 + $0xfc8] sm:$0xff]
        %v741 = vld [vmem:[%s190 + $0xfd0] sm:$0xff]
        %v742 = vld [vmem:[%s190 + $0xfd8] sm:$0xff]
        %v743 = vld [vmem:[%s190 + $0xfe0] sm:$0xff]
        %v744 = vld [vmem:[%s190 + $0xfe8] sm:$0xff]
        %v745 = vld [vmem:[%s190 + $0xff0] sm:$0xff]
        %v746 = vld [vmem:[%s190 + $0xff8] sm:$0xff]
        %v747 = vld [vmem:[%s190 + $0x1000] sm:$0xff]
        %v748 = vld [vmem:[%s190 + $0x1008] sm:$0xff]
        %v749 = vld [vmem:[%s190 + $0x1010] sm:$0xff]
        %v750 = vld [vmem:[%s190 + $0x1018] sm:$0xff]
        %v751 = vld [vmem:[%s190 + $0x1020] sm:$0xff]
        %v752 = vld [vmem:[%s190 + $0x1028] sm:$0xff]
        %v753 = vld [vmem:[%s190 + $0x1030] sm:$0xff]
        %v754 = vld [vmem:[%s190 + $0x1038] sm:$0xff]
        %v755 = vld [vmem:[%s190 + $0x1040] sm:$0xff]
        %v756 = vld [vmem:[%s190 + $0x1048] sm:$0xff]
        %v757 = vld [vmem:[%s190 + $0x1050] sm:$0xff]
        %v758 = vld [vmem:[%s190 + $0x1058] sm:$0xff]
        %v759 = vld [vmem:[%s190 + $0x1060] sm:$0xff]
        %v760 = vld [vmem:[%s190 + $0x1068] sm:$0xff]
        %v761 = vld [vmem:[%s190 + $0x1070] sm:$0xff]
        %v762 = vld [vmem:[%s190 + $0x1078] sm:$0xff]
        %v763 = vld [vmem:[%s190 + $0x1080] sm:$0xff]
        %v764 = vld [vmem:[%s190 + $0x1088] sm:$0xff]
        %v765 = vld [vmem:[%s190 + $0x1090] sm:$0xff]
        %v766 = vld [vmem:[%s190 + $0x1098] sm:$0xff]
        %v767 = vld [vmem:[%s190 + $0x10a0] sm:$0xff]
        %v768 = vld [vmem:[%s190 + $0x10a8] sm:$0xff]
        %v769 = vld [vmem:[%s190 + $0x10b0] sm:$0xff]
        %v770 = vld [vmem:[%s190 + $0x10b8] sm:$0xff]
        %v771 = vld [vmem:[%s190 + $0x10c0] sm:$0xff]
        %v772 = vld [vmem:[%s190 + $0x10c8] sm:$0xff]
        %v773 = vld [vmem:[%s190 + $0x10d0] sm:$0xff]
        %v774 = vld [vmem:[%s190 + $0x10d8] sm:$0xff]
        %v775 = vld [vmem:[%s190 + $0x10e0] sm:$0xff]
        %v776 = vld [vmem:[%s190 + $0x10e8] sm:$0xff]
        %v777 = vld [vmem:[%s190 + $0x10f0] sm:$0xff]
        %v778 = vld [vmem:[%s190 + $0x10f8] sm:$0xff]
        %v779 = vld [vmem:[%s190 + $0x1100] sm:$0xff]
        %v780 = vld [vmem:[%s190 + $0x1108] sm:$0xff]
        %v781 = vld [vmem:[%s190 + $0x1110] sm:$0xff]
        %v782 = vld [vmem:[%s190 + $0x1118] sm:$0xff]
        %v783 = vld [vmem:[%s190 + $0x1120] sm:$0xff]
        %v784 = vld [vmem:[%s190 + $0x1128] sm:$0xff]
        %v785 = vld [vmem:[%s190 + $0x1130] sm:$0xff]
        %v786 = vld [vmem:[%s190 + $0x1138] sm:$0xff]
        %v787 = vld [vmem:[%s190 + $0x1140] sm:$0xff]
        %v788 = vld [vmem:[%s190 + $0x1148] sm:$0xff]
        %v789 = vld [vmem:[%s190 + $0x1150] sm:$0xff]
        %v790 = vld [vmem:[%s190 + $0x1158] sm:$0xff]
        %v791 = vld [vmem:[%s190 + $0x1160] sm:$0xff]
        %v792 = vld [vmem:[%s190 + $0x1168] sm:$0xff]
        %v793 = vld [vmem:[%s190 + $0x1170] sm:$0xff]
        %v794 = vld [vmem:[%s190 + $0x1178] sm:$0xff]
        %v795 = vld [vmem:[%s190 + $0x1180] sm:$0xff]
        %v796 = vld [vmem:[%s190 + $0x1188] sm:$0xff]
        %v797 = vld [vmem:[%s190 + $0x1190] sm:$0xff]
        %v798 = vld [vmem:[%s190 + $0x1198] sm:$0xff]
        %v799 = vld [vmem:[%s190 + $0x11a0] sm:$0xff]
        %v800 = vld [vmem:[%s190 + $0x11a8] sm:$0xff]
        %v801 = vld [vmem:[%s190 + $0x11b0] sm:$0xff]
        %v802 = vld [vmem:[%s190 + $0x11b8] sm:$0xff]
        %v803 = vld [vmem:[%s190 + $0x11c0] sm:$0xff]
        %v804 = vld [vmem:[%s190 + $0x11c8] sm:$0xff]
        %v805 = vld [vmem:[%s190 + $0x11d0] sm:$0xff]
        %v806 = vld [vmem:[%s190 + $0x11d8] sm:$0xff]
        %v807 = vld [vmem:[%s190 + $0x11e0] sm:$0xff]
        %v808 = vld [vmem:[%s190 + $0x11e8] sm:$0xff]
        %v809 = vld [vmem:[%s190 + $0x11f0] sm:$0xff]
        %v810 = vld [vmem:[%s190 + $0x11f8] sm:$0xff]
        %v811 = vld [vmem:[%s190 + $0x1200] sm:$0xff]
        %v812 = vld [vmem:[%s190 + $0x1208] sm:$0xff]
        %v813 = vld [vmem:[%s190 + $0x1210] sm:$0xff]
        %v814 = vld [vmem:[%s190 + $0x1218] sm:$0xff]
        %v815 = vld [vmem:[%s190 + $0x1220] sm:$0xff]
        %v816 = vld [vmem:[%s190 + $0x1228] sm:$0xff]
        %v817 = vld [vmem:[%s190 + $0x1230] sm:$0xff]
        %v818 = vld [vmem:[%s190 + $0x1238] sm:$0xff]
        %v819 = vld [vmem:[%s190 + $0x1240] sm:$0xff]
        %v820 = vld [vmem:[%s190 + $0x1248] sm:$0xff]
        %v821 = vld [vmem:[%s190 + $0x1250] sm:$0xff]
        %v822 = vld [vmem:[%s190 + $0x1258] sm:$0xff]
        %v823 = vld [vmem:[%s190 + $0x1260] sm:$0xff]
        %v824 = vld [vmem:[%s190 + $0x1268] sm:$0xff]
        %v825 = vld [vmem:[%s190 + $0x1270] sm:$0xff]
        %v826 = vld [vmem:[%s190 + $0x1278] sm:$0xff]
        %v827 = vld [vmem:[%s190 + $0x1280] sm:$0xff]
        %v828 = vld [vmem:[%s190 + $0x1288] sm:$0xff]
        %v829 = vld [vmem:[%s190 + $0x1290] sm:$0xff]
        %v830 = vld [vmem:[%s190 + $0x1298] sm:$0xff]
        %v831 = vld [vmem:[%s190 + $0x12a0] sm:$0xff]
        %v832 = vld [vmem:[%s190 + $0x12a8] sm:$0xff]
        %v833 = vld [vmem:[%s190 + $0x12b0] sm:$0xff]
        %v834 = vld [vmem:[%s190 + $0x12b8] sm:$0xff]
        %v835 = vld [vmem:[%s190 + $0x12c0] sm:$0xff]
        %v836 = vld [vmem:[%s190 + $0x12c8] sm:$0xff]
        %v837 = vld [vmem:[%s190 + $0x12d0] sm:$0xff]
        %v838 = vld [vmem:[%s190 + $0x12d8] sm:$0xff]
        %v839 = vld [vmem:[%s190 + $0x12e0] sm:$0xff]
        %v840 = vld [vmem:[%s190 + $0x12e8] sm:$0xff]
        %v841 = vld [vmem:[%s190 + $0x12f0] sm:$0xff]
        %v842 = vld [vmem:[%s190 + $0x12f8] sm:$0xff]
        %v843 = vld [vmem:[%s190 + $0x1300] sm:$0xff]
        %v844 = vld [vmem:[%s190 + $0x1308] sm:$0xff]
        %v845 = vld [vmem:[%s190 + $0x1310] sm:$0xff]
        %v846 = vld [vmem:[%s190 + $0x1318] sm:$0xff]
        %v847 = vld [vmem:[%s190 + $0x1320] sm:$0xff]
        %v848 = vld [vmem:[%s190 + $0x1328] sm:$0xff]
        %v849 = vld [vmem:[%s190 + $0x1330] sm:$0xff]
        %v850 = vld [vmem:[%s190 + $0x1338] sm:$0xff]
        %v851 = vld [vmem:[%s190 + $0x1340] sm:$0xff]
        %v852 = vld [vmem:[%s190 + $0x1348] sm:$0xff]
        %v853 = vld [vmem:[%s190 + $0x1350] sm:$0xff]
        %v854 = vld [vmem:[%s190 + $0x1358] sm:$0xff]
        %v855 = vld [vmem:[%s190 + $0x1360] sm:$0xff]
        %v856 = vld [vmem:[%s190 + $0x1368] sm:$0xff]
        %v857 = vld [vmem:[%s190 + $0x1370] sm:$0xff]
        %v858 = vld [vmem:[%s190 + $0x1378] sm:$0xff]
        %v859 = vld [vmem:[%s190 + $0x1380] sm:$0xff]
        %v860 = vld [vmem:[%s190 + $0x1388] sm:$0xff]
        %v861 = vld [vmem:[%s190 + $0x1390] sm:$0xff]
        %v862 = vld [vmem:[%s190 + $0x1398] sm:$0xff]
        %v863 = vld [vmem:[%s190 + $0x13a0] sm:$0xff]
        %v864 = vld [vmem:[%s190 + $0x13a8] sm:$0xff]
        %v865 = vld [vmem:[%s190 + $0x13b0] sm:$0xff]
        %v866 = vld [vmem:[%s190 + $0x13b8] sm:$0xff]
        %v867 = vld [vmem:[%s190 + $0x13c0] sm:$0xff]
        %v868 = vld [vmem:[%s190 + $0x13c8] sm:$0xff]
        %v869 = vld [vmem:[%s190 + $0x13d0] sm:$0xff]
        %v870 = vld [vmem:[%s190 + $0x13d8] sm:$0xff]
        %v871 = vld [vmem:[%s190 + $0x13e0] sm:$0xff]
        %v872 = vld [vmem:[%s190 + $0x13e8] sm:$0xff]
        %v873 = vld [vmem:[%s190 + $0x13f0] sm:$0xff]
        %v874 = vld [vmem:[%s190 + $0x13f8] sm:$0xff]
        %v875 = vld [vmem:[%s190 + $0x1400] sm:$0xff]
        %v876 = vld [vmem:[%s190 + $0x1408] sm:$0xff]
        %v877 = vld [vmem:[%s190 + $0x1410] sm:$0xff]
        %v878 = vld [vmem:[%s190 + $0x1418] sm:$0xff]
        %v879 = vld [vmem:[%s190 + $0x1420] sm:$0xff]
        %v880 = vld [vmem:[%s190 + $0x1428] sm:$0xff]
        %v881 = vld [vmem:[%s190 + $0x1430] sm:$0xff]
        %v882 = vld [vmem:[%s190 + $0x1438] sm:$0xff]
        %v883 = vld [vmem:[%s190 + $0x1440] sm:$0xff]
        %v884 = vld [vmem:[%s190 + $0x1448] sm:$0xff]
        %v885 = vld [vmem:[%s190 + $0x1450] sm:$0xff]
        %v886 = vld [vmem:[%s190 + $0x1458] sm:$0xff]
        %v887 = vld [vmem:[%s190 + $0x1460] sm:$0xff]
        %v888 = vld [vmem:[%s190 + $0x1468] sm:$0xff]
        %v889 = vld [vmem:[%s190 + $0x1470] sm:$0xff]
        %v890 = vld [vmem:[%s190 + $0x1478] sm:$0xff]
        %v891 = vld [vmem:[%s190 + $0x1480] sm:$0xff]
        %v892 = vld [vmem:[%s190 + $0x1488] sm:$0xff]
        %v893 = vld [vmem:[%s190 + $0x1490] sm:$0xff]
        %v894 = vld [vmem:[%s190 + $0x1498] sm:$0xff]
        %v895 = vld [vmem:[%s190 + $0x14a0] sm:$0xff]
        %v896 = vld [vmem:[%s190 + $0x14a8] sm:$0xff]
        %v897 = vld [vmem:[%s190 + $0x14b0] sm:$0xff]
        %v898 = vld [vmem:[%s190 + $0x14b8] sm:$0xff]
        %v899 = vld [vmem:[%s190 + $0x14c0] sm:$0xff]
        %v900 = vld [vmem:[%s190 + $0x14c8] sm:$0xff]
        %v901 = vld [vmem:[%s190 + $0x14d0] sm:$0xff]
        %v902 = vld [vmem:[%s190 + $0x14d8] sm:$0xff]
        %v903 = vld [vmem:[%s190 + $0x14e0] sm:$0xff]
        %v904 = vld [vmem:[%s190 + $0x14e8] sm:$0xff]
        %v905 = vld [vmem:[%s190 + $0x14f0] sm:$0xff]
        %v906 = vld [vmem:[%s190 + $0x14f8] sm:$0xff]
        %v907 = vld [vmem:[%s190 + $0x1500] sm:$0xff]
        %v908 = vld [vmem:[%s190 + $0x1508] sm:$0xff]
        %v909 = vld [vmem:[%s190 + $0x1510] sm:$0xff]
        %v910 = vld [vmem:[%s190 + $0x1518] sm:$0xff]
        %v911 = vld [vmem:[%s190 + $0x1520] sm:$0xff]
        %v912 = vld [vmem:[%s190 + $0x1528] sm:$0xff]
        %v913 = vld [vmem:[%s190 + $0x1530] sm:$0xff]
        %v914 = vld [vmem:[%s190 + $0x1538] sm:$0xff]
        %v915 = vld [vmem:[%s190 + $0x1540] sm:$0xff]
        %v916 = vld [vmem:[%s190 + $0x1548] sm:$0xff]
        %v917 = vld [vmem:[%s190 + $0x1550] sm:$0xff]
        %v918 = vld [vmem:[%s190 + $0x1558] sm:$0xff]
        %v919 = vld [vmem:[%s190 + $0x1560] sm:$0xff]
        %v920 = vld [vmem:[%s190 + $0x1568] sm:$0xff]
        %v921 = vld [vmem:[%s190 + $0x1570] sm:$0xff]
        %v922 = vld [vmem:[%s190 + $0x1578] sm:$0xff]
        %v923 = vld [vmem:[%s190 + $0x1580] sm:$0xff]
        %v924 = vld [vmem:[%s190 + $0x1588] sm:$0xff]
        %v925 = vld [vmem:[%s190 + $0x1590] sm:$0xff]
        %v926 = vld [vmem:[%s190 + $0x1598] sm:$0xff]
        %v927 = vld [vmem:[%s190 + $0x15a0] sm:$0xff]
        %v928 = vld [vmem:[%s190 + $0x15a8] sm:$0xff]
        %v929 = vld [vmem:[%s190 + $0x15b0] sm:$0xff]
        %v930 = vld [vmem:[%s190 + $0x15b8] sm:$0xff]
        %v931 = vld [vmem:[%s190 + $0x15c0] sm:$0xff]
        %v932 = vld [vmem:[%s190 + $0x15c8] sm:$0xff]
        %v933 = vld [vmem:[%s190 + $0x15d0] sm:$0xff]
        %v934 = vld [vmem:[%s190 + $0x15d8] sm:$0xff]
        %v935 = vld [vmem:[%s190 + $0x15e0] sm:$0xff]
        %v936 = vld [vmem:[%s190 + $0x15e8] sm:$0xff]
        %v937 = vld [vmem:[%s190 + $0x15f0] sm:$0xff]
        %v938 = vld [vmem:[%s190 + $0x15f8] sm:$0xff]
        %v939 = vld [vmem:[%s190 + $0x1600] sm:$0xff]
        %v940 = vld [vmem:[%s190 + $0x1608] sm:$0xff]
        %v941 = vld [vmem:[%s190 + $0x1610] sm:$0xff]
        %v942 = vld [vmem:[%s190 + $0x1618] sm:$0xff]
        %v943 = vld [vmem:[%s190 + $0x1620] sm:$0xff]
        %v944 = vld [vmem:[%s190 + $0x1628] sm:$0xff]
        %v945 = vld [vmem:[%s190 + $0x1630] sm:$0xff]
        %v946 = vld [vmem:[%s190 + $0x1638] sm:$0xff]
        %v947 = vld [vmem:[%s190 + $0x1640] sm:$0xff]
        %v948 = vld [vmem:[%s190 + $0x1648] sm:$0xff]
        %v949 = vld [vmem:[%s190 + $0x1650] sm:$0xff]
        %v950 = vld [vmem:[%s190 + $0x1658] sm:$0xff]
        %v951 = vld [vmem:[%s190 + $0x1660] sm:$0xff]
        %v952 = vld [vmem:[%s190 + $0x1668] sm:$0xff]
        %v953 = vld [vmem:[%s190 + $0x1670] sm:$0xff]
        %v954 = vld [vmem:[%s190 + $0x1678] sm:$0xff]
        %v955 = vld [vmem:[%s190 + $0x1680] sm:$0xff]
        %v956 = vld [vmem:[%s190 + $0x1688] sm:$0xff]
        %v957 = vld [vmem:[%s190 + $0x1690] sm:$0xff]
        %v958 = vld [vmem:[%s190 + $0x1698] sm:$0xff]
        %v959 = vld [vmem:[%s190 + $0x16a0] sm:$0xff]
        %v960 = vld [vmem:[%s190 + $0x16a8] sm:$0xff]
        %v961 = vld [vmem:[%s190 + $0x16b0] sm:$0xff]
        %v962 = vld [vmem:[%s190 + $0x16b8] sm:$0xff]
        %v963 = vld [vmem:[%s190 + $0x16c0] sm:$0xff]
        %v964 = vld [vmem:[%s190 + $0x16c8] sm:$0xff]
        %v965 = vld [vmem:[%s190 + $0x16d0] sm:$0xff]
        %v966 = vld [vmem:[%s190 + $0x16d8] sm:$0xff]
        %v967 = vld [vmem:[%s190 + $0x16e0] sm:$0xff]
        %v968 = vld [vmem:[%s190 + $0x16e8] sm:$0xff]
        %v969 = vld [vmem:[%s190 + $0x16f0] sm:$0xff]
        %v970 = vld [vmem:[%s190 + $0x16f8] sm:$0xff]
        %v971 = vld [vmem:[%s190 + $0x1700] sm:$0xff]
        %v972 = vld [vmem:[%s190 + $0x1708] sm:$0xff]
        %v973 = vld [vmem:[%s190 + $0x1710] sm:$0xff]
        %v974 = vld [vmem:[%s190 + $0x1718] sm:$0xff]
        %v975 = vld [vmem:[%s190 + $0x1720] sm:$0xff]
        %v976 = vld [vmem:[%s190 + $0x1728] sm:$0xff]
        %v977 = vld [vmem:[%s190 + $0x1730] sm:$0xff]
        %v978 = vld [vmem:[%s190 + $0x1738] sm:$0xff]
        %v979 = vld [vmem:[%s190 + $0x1740] sm:$0xff]
        %v980 = vld [vmem:[%s190 + $0x1748] sm:$0xff]
        %v981 = vld [vmem:[%s190 + $0x1750] sm:$0xff]
        %v982 = vld [vmem:[%s190 + $0x1758] sm:$0xff]
        %v983 = vld [vmem:[%s190 + $0x1760] sm:$0xff]
        %v984 = vld [vmem:[%s190 + $0x1768] sm:$0xff]
        %v985 = vld [vmem:[%s190 + $0x1770] sm:$0xff]
        %v986 = vld [vmem:[%s190 + $0x1778] sm:$0xff]
        %v987 = vld [vmem:[%s190 + $0x1780] sm:$0xff]
        %v988 = vld [vmem:[%s190 + $0x1788] sm:$0xff]
        %v989 = vld [vmem:[%s190 + $0x1790] sm:$0xff]
        %v990 = vld [vmem:[%s190 + $0x1798] sm:$0xff]
        %v991 = vld [vmem:[%s190 + $0x17a0] sm:$0xff]
        %v992 = vld [vmem:[%s190 + $0x17a8] sm:$0xff]
        %v993 = vld [vmem:[%s190 + $0x17b0] sm:$0xff]
        %v994 = vld [vmem:[%s190 + $0x17b8] sm:$0xff]
        %v995 = vld [vmem:[%s190 + $0x17c0] sm:$0xff]
        %v996 = vld [vmem:[%s190 + $0x17c8] sm:$0xff]
        %v997 = vld [vmem:[%s190 + $0x17d0] sm:$0xff]
        %v998 = vld [vmem:[%s190 + $0x17d8] sm:$0xff]
        %v999 = vld [vmem:[%s190 + $0x17e0] sm:$0xff]
        %v1000 = vld [vmem:[%s190 + $0x17e8] sm:$0xff]
        %v1001 = vld [vmem:[%s190 + $0x17f0] sm:$0xff]
        %v1002 = vld [vmem:[%s190 + $0x17f8] sm:$0xff]
        %v1003 = vld [vmem:[%s190 + $0x1800] sm:$0xff]
        %v1004 = vld [vmem:[%s190 + $0x1808] sm:$0xff]
        %v1005 = vld [vmem:[%s190 + $0x1810] sm:$0xff]
        %v1006 = vld [vmem:[%s190 + $0x1818] sm:$0xff]
        %v1007 = vld [vmem:[%s190 + $0x1820] sm:$0xff]
        %v1008 = vld [vmem:[%s190 + $0x1828] sm:$0xff]
        %v1009 = vld [vmem:[%s190 + $0x1830] sm:$0xff]
        %v1010 = vld [vmem:[%s190 + $0x1838] sm:$0xff]
        %v1011 = vld [vmem:[%s190 + $0x1840] sm:$0xff]
        %v1012 = vld [vmem:[%s190 + $0x1848] sm:$0xff]
        %v1013 = vld [vmem:[%s190 + $0x1850] sm:$0xff]
        %v1014 = vld [vmem:[%s190 + $0x1858] sm:$0xff]
        %v1015 = vld [vmem:[%s190 + $0x1860] sm:$0xff]
        %v1016 = vld [vmem:[%s190 + $0x1868] sm:$0xff]
        %v1017 = vld [vmem:[%s190 + $0x1870] sm:$0xff]
        %v1018 = vld [vmem:[%s190 + $0x1878] sm:$0xff]
        %v1019 = vld [vmem:[%s190 + $0x1880] sm:$0xff]
        %v1020 = vld [vmem:[%s190 + $0x1888] sm:$0xff]
        %v1021 = vld [vmem:[%s190 + $0x1890] sm:$0xff]
        %v1022 = vld [vmem:[%s190 + $0x1898] sm:$0xff]
        %v1023 = vld [vmem:[%s190 + $0x18a0] sm:$0xff]
        %v1024 = vld [vmem:[%s190 + $0x18a8] sm:$0xff]
        %v1025 = vld [vmem:[%s190 + $0x18b0] sm:$0xff]
        %v1026 = vld [vmem:[%s190 + $0x18b8] sm:$0xff]
        %v1027 = vld [vmem:[%s190 + $0x18c0] sm:$0xff]
        %v1028 = vld [vmem:[%s190 + $0x18c8] sm:$0xff]
        %v1029 = vld [vmem:[%s190 + $0x18d0] sm:$0xff]
        %v1030 = vld [vmem:[%s190 + $0x18d8] sm:$0xff]
        %v1031 = vld [vmem:[%s190 + $0x18e0] sm:$0xff]
        %v1032 = vld [vmem:[%s190 + $0x18e8] sm:$0xff]
        %v1033 = vld [vmem:[%s190 + $0x18f0] sm:$0xff]
        %v1034 = vld [vmem:[%s190 + $0x18f8] sm:$0xff]
        %v1035 = vld [vmem:[%s190 + $0x1900] sm:$0xff]
        %v1036 = vld [vmem:[%s190 + $0x1908] sm:$0xff]
        %v1037 = vld [vmem:[%s190 + $0x1910] sm:$0xff]
        %v1038 = vld [vmem:[%s190 + $0x1918] sm:$0xff]
        %v1039 = vld [vmem:[%s190 + $0x1920] sm:$0xff]
        %v1040 = vld [vmem:[%s190 + $0x1928] sm:$0xff]
        %v1041 = vld [vmem:[%s190 + $0x1930] sm:$0xff]
        %v1042 = vld [vmem:[%s190 + $0x1938] sm:$0xff]
        %v1043 = vld [vmem:[%s190 + $0x1940] sm:$0xff]
        %v1044 = vld [vmem:[%s190 + $0x1948] sm:$0xff]
        %v1045 = vld [vmem:[%s190 + $0x1950] sm:$0xff]
        %v1046 = vld [vmem:[%s190 + $0x1958] sm:$0xff]
        %v1047 = vld [vmem:[%s190 + $0x1960] sm:$0xff]
        %v1048 = vld [vmem:[%s190 + $0x1968] sm:$0xff]
        %v1049 = vld [vmem:[%s190 + $0x1970] sm:$0xff]
        %v1050 = vld [vmem:[%s190 + $0x1978] sm:$0xff]
        %v1051 = vld [vmem:[%s190 + $0x1980] sm:$0xff]
        %v1052 = vld [vmem:[%s190 + $0x1988] sm:$0xff]
        %v1053 = vld [vmem:[%s190 + $0x1990] sm:$0xff]
        %v1054 = vld [vmem:[%s190 + $0x1998] sm:$0xff]
        %v1055 = vld [vmem:[%s190 + $0x19a0] sm:$0xff]
        %v1056 = vld [vmem:[%s190 + $0x19a8] sm:$0xff]
        %v1057 = vld [vmem:[%s190 + $0x19b0] sm:$0xff]
        %v1058 = vld [vmem:[%s190 + $0x19b8] sm:$0xff]
        %v1059 = vld [vmem:[%s190 + $0x19c0] sm:$0xff]
        %v1060 = vld [vmem:[%s190 + $0x19c8] sm:$0xff]
        %v1061 = vld [vmem:[%s190 + $0x19d0] sm:$0xff]
        %v1062 = vld [vmem:[%s190 + $0x19d8] sm:$0xff]
        %v1063 = vld [vmem:[%s190 + $0x19e0] sm:$0xff]
        %v1064 = vld [vmem:[%s190 + $0x19e8] sm:$0xff]
        %v1065 = vld [vmem:[%s190 + $0x19f0] sm:$0xff]
        %v1066 = vld [vmem:[%s190 + $0x19f8] sm:$0xff]
        %v1067 = vld [vmem:[%s190 + $0x1a00] sm:$0xff]
        %v1068 = vld [vmem:[%s190 + $0x1a08] sm:$0xff]
        %v1069 = vld [vmem:[%s190 + $0x1a10] sm:$0xff]
        %v1070 = vld [vmem:[%s190 + $0x1a18] sm:$0xff]
        %v1071 = vld [vmem:[%s190 + $0x1a20] sm:$0xff]
        %v1072 = vld [vmem:[%s190 + $0x1a28] sm:$0xff]
        %v1073 = vld [vmem:[%s190 + $0x1a30] sm:$0xff]
        %v1074 = vld [vmem:[%s190 + $0x1a38] sm:$0xff]
        %v1075 = vld [vmem:[%s190 + $0x1a40] sm:$0xff]
        %v1076 = vld [vmem:[%s190 + $0x1a48] sm:$0xff]
        %v1077 = vld [vmem:[%s190 + $0x1a50] sm:$0xff]
        %v1078 = vld [vmem:[%s190 + $0x1a58] sm:$0xff]
        %v1079 = vld [vmem:[%s190 + $0x1a60] sm:$0xff]
        %v1080 = vld [vmem:[%s190 + $0x1a68] sm:$0xff]
        %v1081 = vld [vmem:[%s190 + $0x1a70] sm:$0xff]
        %v1082 = vld [vmem:[%s190 + $0x1a78] sm:$0xff]
        %v1083 = vld [vmem:[%s190 + $0x1a80] sm:$0xff]
        %v1084 = vld [vmem:[%s190 + $0x1a88] sm:$0xff]
        %v1085 = vld [vmem:[%s190 + $0x1a90] sm:$0xff]
        %v1086 = vld [vmem:[%s190 + $0x1a98] sm:$0xff]
        %v1087 = vld [vmem:[%s190 + $0x1aa0] sm:$0xff]
        %v1088 = vld [vmem:[%s190 + $0x1aa8] sm:$0xff]
        %v1089 = vld [vmem:[%s190 + $0x1ab0] sm:$0xff]
        %v1090 = vld [vmem:[%s190 + $0x1ab8] sm:$0xff]
        %v1091 = vld [vmem:[%s190 + $0x1ac0] sm:$0xff]
        %v1092 = vld [vmem:[%s190 + $0x1ac8] sm:$0xff]
        %v1093 = vld [vmem:[%s190 + $0x1ad0] sm:$0xff]
        %v1094 = vld [vmem:[%s190 + $0x1ad8] sm:$0xff]
        %v1095 = vld [vmem:[%s190 + $0x1ae0] sm:$0xff]
        %v1096 = vld [vmem:[%s190 + $0x1ae8] sm:$0xff]
        %v1097 = vld [vmem:[%s190 + $0x1af0] sm:$0xff]
        %v1098 = vld [vmem:[%s190 + $0x1af8] sm:$0xff]
        %v1099 = vld [vmem:[%s190 + $0x1b00] sm:$0xff]
        %v1100 = vld [vmem:[%s190 + $0x1b08] sm:$0xff]
        %v1101 = vld [vmem:[%s190 + $0x1b10] sm:$0xff]
        %v1102 = vld [vmem:[%s190 + $0x1b18] sm:$0xff]
        %v1103 = vld [vmem:[%s190 + $0x1b20] sm:$0xff]
        %v1104 = vld [vmem:[%s190 + $0x1b28] sm:$0xff]
        %v1105 = vld [vmem:[%s190 + $0x1b30] sm:$0xff]
        %v1106 = vld [vmem:[%s190 + $0x1b38] sm:$0xff]
        %v1107 = vld [vmem:[%s190 + $0x1b40] sm:$0xff]
        %v1108 = vld [vmem:[%s190 + $0x1b48] sm:$0xff]
        %v1109 = vld [vmem:[%s190 + $0x1b50] sm:$0xff]
        %v1110 = vld [vmem:[%s190 + $0x1b58] sm:$0xff]
        %v1111 = vld [vmem:[%s190 + $0x1b60] sm:$0xff]
        %v1112 = vld [vmem:[%s190 + $0x1b68] sm:$0xff]
        %v1113 = vld [vmem:[%s190 + $0x1b70] sm:$0xff]
        %v1114 = vld [vmem:[%s190 + $0x1b78] sm:$0xff]
        %v1115 = vld [vmem:[%s190 + $0x1b80] sm:$0xff]
        %v1116 = vld [vmem:[%s190 + $0x1b88] sm:$0xff]
        %v1117 = vld [vmem:[%s190 + $0x1b90] sm:$0xff]
        %v1118 = vld [vmem:[%s190 + $0x1b98] sm:$0xff]
        %v1119 = vld [vmem:[%s190 + $0x1ba0] sm:$0xff]
        %v1120 = vld [vmem:[%s190 + $0x1ba8] sm:$0xff]
        %v1121 = vld [vmem:[%s190 + $0x1bb0] sm:$0xff]
        %v1122 = vld [vmem:[%s190 + $0x1bb8] sm:$0xff]
        %v1123 = vld [vmem:[%s190 + $0x1bc0] sm:$0xff]
        %v1124 = vld [vmem:[%s190 + $0x1bc8] sm:$0xff]
        %v1125 = vld [vmem:[%s190 + $0x1bd0] sm:$0xff]
        %v1126 = vld [vmem:[%s190 + $0x1bd8] sm:$0xff]
        %v1127 = vld [vmem:[%s190 + $0x1be0] sm:$0xff]
        %v1128 = vld [vmem:[%s190 + $0x1be8] sm:$0xff]
        %v1129 = vld [vmem:[%s190 + $0x1bf0] sm:$0xff]
        %v1130 = vld [vmem:[%s190 + $0x1bf8] sm:$0xff]
        %v1131 = vld [vmem:[%s190 + $0x1c00] sm:$0xff]
        %v1132 = vld [vmem:[%s190 + $0x1c08] sm:$0xff]
        %v1133 = vld [vmem:[%s190 + $0x1c10] sm:$0xff]
        %v1134 = vld [vmem:[%s190 + $0x1c18] sm:$0xff]
        %v1135 = vld [vmem:[%s190 + $0x1c20] sm:$0xff]
        %v1136 = vld [vmem:[%s190 + $0x1c28] sm:$0xff]
        %v1137 = vld [vmem:[%s190 + $0x1c30] sm:$0xff]
        %v1138 = vld [vmem:[%s190 + $0x1c38] sm:$0xff]
        %v1139 = vld [vmem:[%s190 + $0x1c40] sm:$0xff]
        %v1140 = vld [vmem:[%s190 + $0x1c48] sm:$0xff]
        %v1141 = vld [vmem:[%s190 + $0x1c50] sm:$0xff]
        %v1142 = vld [vmem:[%s190 + $0x1c58] sm:$0xff]
        %v1143 = vld [vmem:[%s190 + $0x1c60] sm:$0xff]
        %v1144 = vld [vmem:[%s190 + $0x1c68] sm:$0xff]
        %v1145 = vld [vmem:[%s190 + $0x1c70] sm:$0xff]
        %v1146 = vld [vmem:[%s190 + $0x1c78] sm:$0xff]
        %v1147 = vld [vmem:[%s190 + $0x1c80] sm:$0xff]
        %v1148 = vld [vmem:[%s190 + $0x1c88] sm:$0xff]
        %v1149 = vld [vmem:[%s190 + $0x1c90] sm:$0xff]
        %v1150 = vld [vmem:[%s190 + $0x1c98] sm:$0xff]
        %v1151 = vld [vmem:[%s190 + $0x1ca0] sm:$0xff]
        %v1152 = vld [vmem:[%s190 + $0x1ca8] sm:$0xff]
        %v1153 = vld [vmem:[%s190 + $0x1cb0] sm:$0xff]
        %v1154 = vld [vmem:[%s190 + $0x1cb8] sm:$0xff]
        %v1155 = vld [vmem:[%s190 + $0x1cc0] sm:$0xff]
        %v1156 = vld [vmem:[%s190 + $0x1cc8] sm:$0xff]
        %v1157 = vld [vmem:[%s190 + $0x1cd0] sm:$0xff]
        %v1158 = vld [vmem:[%s190 + $0x1cd8] sm:$0xff]
        %v1159 = vld [vmem:[%s190 + $0x1ce0] sm:$0xff]
        %v1160 = vld [vmem:[%s190 + $0x1ce8] sm:$0xff]
        %v1161 = vld [vmem:[%s190 + $0x1cf0] sm:$0xff]
        %v1162 = vld [vmem:[%s190 + $0x1cf8] sm:$0xff]
        %v1163 = vld [vmem:[%s190 + $0x1d00] sm:$0xff]
        %v1164 = vld [vmem:[%s190 + $0x1d08] sm:$0xff]
        %v1165 = vld [vmem:[%s190 + $0x1d10] sm:$0xff]
        %v1166 = vld [vmem:[%s190 + $0x1d18] sm:$0xff]
        %v1167 = vld [vmem:[%s190 + $0x1d20] sm:$0xff]
        %v1168 = vld [vmem:[%s190 + $0x1d28] sm:$0xff]
        %v1169 = vld [vmem:[%s190 + $0x1d30] sm:$0xff]
        %v1170 = vld [vmem:[%s190 + $0x1d38] sm:$0xff]
        %v1171 = vld [vmem:[%s190 + $0x1d40] sm:$0xff]
        %v1172 = vld [vmem:[%s190 + $0x1d48] sm:$0xff]
        %v1173 = vld [vmem:[%s190 + $0x1d50] sm:$0xff]
        %v1174 = vld [vmem:[%s190 + $0x1d58] sm:$0xff]
        %v1175 = vld [vmem:[%s190 + $0x1d60] sm:$0xff]
        %v1176 = vld [vmem:[%s190 + $0x1d68] sm:$0xff]
        %v1177 = vld [vmem:[%s190 + $0x1d70] sm:$0xff]
        %v1178 = vld [vmem:[%s190 + $0x1d78] sm:$0xff]
        %v1179 = vld [vmem:[%s190 + $0x1d80] sm:$0xff]
        %v1180 = vld [vmem:[%s190 + $0x1d88] sm:$0xff]
        %v1181 = vld [vmem:[%s190 + $0x1d90] sm:$0xff]
        %v1182 = vld [vmem:[%s190 + $0x1d98] sm:$0xff]
        %v1183 = vld [vmem:[%s190 + $0x1da0] sm:$0xff]
        %v1184 = vld [vmem:[%s190 + $0x1da8] sm:$0xff]
        %v1185 = vld [vmem:[%s190 + $0x1db0] sm:$0xff]
        %v1186 = vld [vmem:[%s190 + $0x1db8] sm:$0xff]
        %v1187 = vld [vmem:[%s190 + $0x1dc0] sm:$0xff]
        %v1188 = vld [vmem:[%s190 + $0x1dc8] sm:$0xff]
        %v1189 = vld [vmem:[%s190 + $0x1dd0] sm:$0xff]
        %v1190 = vld [vmem:[%s190 + $0x1dd8] sm:$0xff]
        %v1191 = vld [vmem:[%s190 + $0x1de0] sm:$0xff]
        %v1192 = vld [vmem:[%s190 + $0x1de8] sm:$0xff]
        %v1193 = vld [vmem:[%s190 + $0x1df0] sm:$0xff]
        %v1194 = vld [vmem:[%s190 + $0x1df8] sm:$0xff]
        %v1195 = vld [vmem:[%s190 + $0x1e00] sm:$0xff]
        %v1196 = vld [vmem:[%s190 + $0x1e08] sm:$0xff]
        %v1197 = vld [vmem:[%s190 + $0x1e10] sm:$0xff]
        %v1198 = vld [vmem:[%s190 + $0x1e18] sm:$0xff]
        %v1199 = vld [vmem:[%s190 + $0x1e20] sm:$0xff]
        %v1200 = vld [vmem:[%s190 + $0x1e28] sm:$0xff]
        %v1201 = vld [vmem:[%s190 + $0x1e30] sm:$0xff]
        %v1202 = vld [vmem:[%s190 + $0x1e38] sm:$0xff]
        %v1203 = vld [vmem:[%s190 + $0x1e40] sm:$0xff]
        %v1204 = vld [vmem:[%s190 + $0x1e48] sm:$0xff]
        %v1205 = vld [vmem:[%s190 + $0x1e50] sm:$0xff]
        %v1206 = vld [vmem:[%s190 + $0x1e58] sm:$0xff]
        %v1207 = vld [vmem:[%s190 + $0x1e60] sm:$0xff]
        %v1208 = vld [vmem:[%s190 + $0x1e68] sm:$0xff]
        %v1209 = vld [vmem:[%s190 + $0x1e70] sm:$0xff]
        %v1210 = vld [vmem:[%s190 + $0x1e78] sm:$0xff]
        %v1211 = vld [vmem:[%s190 + $0x1e80] sm:$0xff]
        %v1212 = vld [vmem:[%s190 + $0x1e88] sm:$0xff]
        %v1213 = vld [vmem:[%s190 + $0x1e90] sm:$0xff]
        %v1214 = vld [vmem:[%s190 + $0x1e98] sm:$0xff]
        %v1215 = vld [vmem:[%s190 + $0x1ea0] sm:$0xff]
        %v1216 = vld [vmem:[%s190 + $0x1ea8] sm:$0xff]
        %v1217 = vld [vmem:[%s190 + $0x1eb0] sm:$0xff]
        %v1218 = vld [vmem:[%s190 + $0x1eb8] sm:$0xff]
        %v1219 = vld [vmem:[%s190 + $0x1ec0] sm:$0xff]
        %v1220 = vld [vmem:[%s190 + $0x1ec8] sm:$0xff]
        %v1221 = vld [vmem:[%s190 + $0x1ed0] sm:$0xff]
        %v1222 = vld [vmem:[%s190 + $0x1ed8] sm:$0xff]
        %v1223 = vld [vmem:[%s190 + $0x1ee0] sm:$0xff]
        %v1224 = vld [vmem:[%s190 + $0x1ee8] sm:$0xff]
        %v1225 = vld [vmem:[%s190 + $0x1ef0] sm:$0xff]
        %v1226 = vld [vmem:[%s190 + $0x1ef8] sm:$0xff]
        %v1227 = vld [vmem:[%s190 + $0x1f00] sm:$0xff]
        %v1228 = vld [vmem:[%s190 + $0x1f08] sm:$0xff]
        %v1229 = vld [vmem:[%s190 + $0x1f10] sm:$0xff]
        %v1230 = vld [vmem:[%s190 + $0x1f18] sm:$0xff]
        %v1231 = vld [vmem:[%s190 + $0x1f20] sm:$0xff]
        %v1232 = vld [vmem:[%s190 + $0x1f28] sm:$0xff]
        %v1233 = vld [vmem:[%s190 + $0x1f30] sm:$0xff]
        %v1234 = vld [vmem:[%s190 + $0x1f38] sm:$0xff]
        %v1235 = vld [vmem:[%s190 + $0x1f40] sm:$0xff]
        %v1236 = vld [vmem:[%s190 + $0x1f48] sm:$0xff]
        %v1237 = vld [vmem:[%s190 + $0x1f50] sm:$0xff]
        %v1238 = vld [vmem:[%s190 + $0x1f58] sm:$0xff]
        %v1239 = vld [vmem:[%s190 + $0x1f60] sm:$0xff]
        %v1240 = vld [vmem:[%s190 + $0x1f68] sm:$0xff]
        %v1241 = vld [vmem:[%s190 + $0x1f70] sm:$0xff]
        %v1242 = vld [vmem:[%s190 + $0x1f78] sm:$0xff]
        %v1243 = vld [vmem:[%s190 + $0x1f80] sm:$0xff]
        %v1244 = vld [vmem:[%s190 + $0x1f88] sm:$0xff]
        %v1245 = vld [vmem:[%s190 + $0x1f90] sm:$0xff]
        %v1246 = vld [vmem:[%s190 + $0x1f98] sm:$0xff]
        %v1247 = vld [vmem:[%s190 + $0x1fa0] sm:$0xff]
        %v1248 = vld [vmem:[%s190 + $0x1fa8] sm:$0xff]
        %v1249 = vld [vmem:[%s190 + $0x1fb0] sm:$0xff]
        %v1250 = vld [vmem:[%s190 + $0x1fb8] sm:$0xff]
        %v1251 = vld [vmem:[%s190 + $0x1fc0] sm:$0xff]
        %v1252 = vld [vmem:[%s190 + $0x1fc8] sm:$0xff]
        %v1253 = vld [vmem:[%s190 + $0x1fd0] sm:$0xff]
        %v1254 = vld [vmem:[%s190 + $0x1fd8] sm:$0xff]
        %v1255 = vld [vmem:[%s190 + $0x1fe0] sm:$0xff]
        %v1256 = vld [vmem:[%s190 + $0x1fe8] sm:$0xff]
        %v1257 = vld [vmem:[%s190 + $0x1ff0] sm:$0xff]
        %v1258 = vld [vmem:[%s190 + $0x1ff8] sm:$0xff]
        %v1259 = vld [vmem:[%s190 + $0x2000] sm:$0xff]
        %v1260 = vld [vmem:[%s190 + $0x2008] sm:$0xff]
        %v1261 = vld [vmem:[%s190 + $0x2010] sm:$0xff]
        %v1262 = vld [vmem:[%s190 + $0x2018] sm:$0xff]
        %v1263 = vld [vmem:[%s190 + $0x2020] sm:$0xff]
        %v1264 = vld [vmem:[%s190 + $0x2028] sm:$0xff]
        %v1265 = vld [vmem:[%s190 + $0x2030] sm:$0xff]
        %v1266 = vld [vmem:[%s190 + $0x2038] sm:$0xff]
        %v1267 = vld [vmem:[%s190 + $0x2040] sm:$0xff]
        %v1268 = vld [vmem:[%s190 + $0x2048] sm:$0xff]
        %v1269 = vld [vmem:[%s190 + $0x2050] sm:$0xff]
        %v1270 = vld [vmem:[%s190 + $0x2058] sm:$0xff]
        %v1271 = vld [vmem:[%s190 + $0x2060] sm:$0xff]
        %v1272 = vld [vmem:[%s190 + $0x2068] sm:$0xff]
        %v1273 = vld [vmem:[%s190 + $0x2070] sm:$0xff]
        %v1274 = vld [vmem:[%s190 + $0x2078] sm:$0xff]
        %v1275 = vld [vmem:[%s190 + $0x2080] sm:$0xff]
        %v1276 = vld [vmem:[%s190 + $0x2088] sm:$0xff]
        %v1277 = vld [vmem:[%s190 + $0x2090] sm:$0xff]
        %v1278 = vld [vmem:[%s190 + $0x2098] sm:$0xff]
        %v1279 = vld [vmem:[%s190 + $0x20a0] sm:$0xff]
        %v1280 = vld [vmem:[%s190 + $0x20a8] sm:$0xff]
        %v1281 = vld [vmem:[%s190 + $0x20b0] sm:$0xff]
        %v1282 = vld [vmem:[%s190 + $0x20b8] sm:$0xff]
        %v1283 = vld [vmem:[%s190 + $0x20c0] sm:$0xff]
        %v1284 = vld [vmem:[%s190 + $0x20c8] sm:$0xff]
        %v1285 = vld [vmem:[%s190 + $0x20d0] sm:$0xff]
        %v1286 = vld [vmem:[%s190 + $0x20d8] sm:$0xff]
        %v1287 = vld [vmem:[%s190 + $0x20e0] sm:$0xff]
        %v1288 = vld [vmem:[%s190 + $0x20e8] sm:$0xff]
        %v1289 = vld [vmem:[%s190 + $0x20f0] sm:$0xff]
        %v1290 = vld [vmem:[%s190 + $0x20f8] sm:$0xff]
        %v1291 = vld [vmem:[%s190 + $0x2100] sm:$0xff]
        %v1292 = vld [vmem:[%s190 + $0x2108] sm:$0xff]
        %v1293 = vld [vmem:[%s190 + $0x2110] sm:$0xff]
        %v1294 = vld [vmem:[%s190 + $0x2118] sm:$0xff]
        %v1295 = vld [vmem:[%s190 + $0x2120] sm:$0xff]
        %v1296 = vld [vmem:[%s190 + $0x2128] sm:$0xff]
        %v1297 = vld [vmem:[%s190 + $0x2130] sm:$0xff]
        %v1298 = vld [vmem:[%s190 + $0x2138] sm:$0xff]
        %v1299 = vld [vmem:[%s190 + $0x2140] sm:$0xff]
        %v1300 = vld [vmem:[%s190 + $0x2148] sm:$0xff]
        %v1301 = vld [vmem:[%s190 + $0x2150] sm:$0xff]
        %v1302 = vld [vmem:[%s190 + $0x2158] sm:$0xff]
        %v1303 = vld [vmem:[%s190 + $0x2160] sm:$0xff]
        %v1304 = vld [vmem:[%s190 + $0x2168] sm:$0xff]
        %v1305 = vld [vmem:[%s190 + $0x2170] sm:$0xff]
        %v1306 = vld [vmem:[%s190 + $0x2178] sm:$0xff]
        %v1307 = vld [vmem:[%s190 + $0x2180] sm:$0xff]
        %v1308 = vld [vmem:[%s190 + $0x2188] sm:$0xff]
        %v1309 = vld [vmem:[%s190 + $0x2190] sm:$0xff]
        %v1310 = vld [vmem:[%s190 + $0x2198] sm:$0xff]
        %v1311 = vld [vmem:[%s190 + $0x21a0] sm:$0xff]
        %v1312 = vld [vmem:[%s190 + $0x21a8] sm:$0xff]
        %v1313 = vld [vmem:[%s190 + $0x21b0] sm:$0xff]
        %v1314 = vld [vmem:[%s190 + $0x21b8] sm:$0xff]
        %v1315 = vld [vmem:[%s190 + $0x21c0] sm:$0xff]
        %v1316 = vld [vmem:[%s190 + $0x21c8] sm:$0xff]
        %v1317 = vld [vmem:[%s190 + $0x21d0] sm:$0xff]
        %v1318 = vld [vmem:[%s190 + $0x21d8] sm:$0xff]
        %v1319 = vld [vmem:[%s190 + $0x21e0] sm:$0xff]
        %v1320 = vld [vmem:[%s190 + $0x21e8] sm:$0xff]
        %v1321 = vld [vmem:[%s190 + $0x21f0] sm:$0xff]
        %v1322 = vld [vmem:[%s190 + $0x21f8] sm:$0xff]
        %v1323 = vld [vmem:[%s190 + $0x2200] sm:$0xff]
        %v1324 = vld [vmem:[%s190 + $0x2208] sm:$0xff]
        %v1325 = vld [vmem:[%s190 + $0x2210] sm:$0xff]
        %v1326 = vld [vmem:[%s190 + $0x2218] sm:$0xff]
        %v1327 = vld [vmem:[%s190 + $0x2220] sm:$0xff]
        %v1328 = vld [vmem:[%s190 + $0x2228] sm:$0xff]
        %v1329 = vld [vmem:[%s190 + $0x2230] sm:$0xff]
        %v1330 = vld [vmem:[%s190 + $0x2238] sm:$0xff]
        %v1331 = vld [vmem:[%s190 + $0x2240] sm:$0xff]
        %v1332 = vld [vmem:[%s190 + $0x2248] sm:$0xff]
        %v1333 = vld [vmem:[%s190 + $0x2250] sm:$0xff]
        %v1334 = vld [vmem:[%s190 + $0x2258] sm:$0xff]
        %v1335 = vld [vmem:[%s190 + $0x2260] sm:$0xff]
        %v1336 = vld [vmem:[%s190 + $0x2268] sm:$0xff]
        %v1337 = vld [vmem:[%s190 + $0x2270] sm:$0xff]
        %v1338 = vld [vmem:[%s190 + $0x2278] sm:$0xff]
        %v1339 = vld [vmem:[%s190 + $0x2280] sm:$0xff]
        %v1340 = vld [vmem:[%s190 + $0x2288] sm:$0xff]
        %v1341 = vld [vmem:[%s190 + $0x2290] sm:$0xff]
        %v1342 = vld [vmem:[%s190 + $0x2298] sm:$0xff]
        %v1343 = vld [vmem:[%s190 + $0x22a0] sm:$0xff]
        %v1344 = vld [vmem:[%s190 + $0x22a8] sm:$0xff]
        %v1345 = vld [vmem:[%s190 + $0x22b0] sm:$0xff]
        %v1346 = vld [vmem:[%s190 + $0x22b8] sm:$0xff]
        %v1347 = vld [vmem:[%s190 + $0x22c0] sm:$0xff]
        %v1348 = vld [vmem:[%s190 + $0x22c8] sm:$0xff]
        %v1349 = vld [vmem:[%s190 + $0x22d0] sm:$0xff]
        %v1350 = vld [vmem:[%s190 + $0x22d8] sm:$0xff]
        %v1351 = vld [vmem:[%s190 + $0x22e0] sm:$0xff]
        %v1352 = vld [vmem:[%s190 + $0x22e8] sm:$0xff]
        %v1353 = vld [vmem:[%s190 + $0x22f0] sm:$0xff]
        %v1354 = vld [vmem:[%s190 + $0x22f8] sm:$0xff]
        %v1355 = vld [vmem:[%s190 + $0x2300] sm:$0xff]
        %v1356 = vld [vmem:[%s190 + $0x2308] sm:$0xff]
        %v1357 = vld [vmem:[%s190 + $0x2310] sm:$0xff]
        %v1358 = vld [vmem:[%s190 + $0x2318] sm:$0xff]
        %v1359 = vld [vmem:[%s190 + $0x2320] sm:$0xff]
        %v1360 = vld [vmem:[%s190 + $0x2328] sm:$0xff]
        %v1361 = vld [vmem:[%s190 + $0x2330] sm:$0xff]
        %v1362 = vld [vmem:[%s190 + $0x2338] sm:$0xff]
        %v1363 = vld [vmem:[%s190 + $0x2340] sm:$0xff]
        %v1364 = vld [vmem:[%s190 + $0x2348] sm:$0xff]
        %v1365 = vld [vmem:[%s190 + $0x2350] sm:$0xff]
        %v1366 = vld [vmem:[%s190 + $0x2358] sm:$0xff]
        %v1367 = vld [vmem:[%s190 + $0x2360] sm:$0xff]
        %v1368 = vld [vmem:[%s190 + $0x2368] sm:$0xff]
        %v1369 = vld [vmem:[%s190 + $0x2370] sm:$0xff]
        %v1370 = vld [vmem:[%s190 + $0x2378] sm:$0xff]
        %v1371 = vld [vmem:[%s190 + $0x2380] sm:$0xff]
        %v1372 = vld [vmem:[%s190 + $0x2388] sm:$0xff]
        %v1373 = vld [vmem:[%s190 + $0x2390] sm:$0xff]
        %v1374 = vld [vmem:[%s190 + $0x2398] sm:$0xff]
        %v1375 = vld [vmem:[%s190 + $0x23a0] sm:$0xff]
        %v1376 = vld [vmem:[%s190 + $0x23a8] sm:$0xff]
        %v1377 = vld [vmem:[%s190 + $0x23b0] sm:$0xff]
        %v1378 = vld [vmem:[%s190 + $0x23b8] sm:$0xff]
        %v1379 = vld [vmem:[%s190 + $0x23c0] sm:$0xff]
        %v1380 = vld [vmem:[%s190 + $0x23c8] sm:$0xff]
        %v1381 = vld [vmem:[%s190 + $0x23d0] sm:$0xff]
        %v1382 = vld [vmem:[%s190 + $0x23d8] sm:$0xff]
        %v1383 = vld [vmem:[%s190 + $0x23e0] sm:$0xff]
        %v1384 = vld [vmem:[%s190 + $0x23e8] sm:$0xff]
        %v1385 = vld [vmem:[%s190 + $0x23f0] sm:$0xff]
        %v1386 = vld [vmem:[%s190 + $0x23f8] sm:$0xff]
        %v1387 = vld [vmem:[%s199] sm:$0x7]
        %v1389 = vlaneseq
        %v1390 = vshrl.u32 %v1389, 7
        %v1391 = vsub.s32 0, %v1390
        %v1392 = vrot.slane %v1387, %v1391
        %v1393 = vlaneseq
        %v1394 = vshrl.u32 %v1393, 7
        %v1395 = vsub.s32 1, %v1394
        %v1396 = vrot.slane %v1387, %v1395
        %v1397 = vlaneseq
        %v1398 = vshrl.u32 %v1397, 7
        %v1399 = vsub.s32 2, %v1398
        %v1400 = vrot.slane %v1387, %v1399
        %v1410 = vcombine.high %v229, %v229
        %v1412 = vunpack.c.l.s4 1983009808
        %v1413 = vunpack.c.0.s8 %v1412
        %v1414 = vlaneseq
        %v1415 = vshrl.u32 %v1414, 7
        %v1416 = vsub.s32 %v1413, %v1415
        %v1417 = vrot.slane %v229, %v1416
        %v1419 = vunpack.c.l.s4 1983009808
        %v1420 = vunpack.c.0.s8 %v1419
        %v1421 = vlaneseq
        %v1422 = vshrl.u32 %v1421, 7
        %v1423 = vsub.s32 %v1420, %v1422
        %v1424 = vrot.slane %v1410, %v1423
        %v1425 = vcombine.high %v1417, %v1417
        %v1426 = vcombine.high %v1424, %v1424
        %v1427 = vcombine.high %v230, %v230
        %v1429 = vunpack.c.l.s4 1983009808
        %v1430 = vunpack.c.0.s8 %v1429
        %v1431 = vlaneseq
        %v1432 = vshrl.u32 %v1431, 7
        %v1433 = vsub.s32 %v1430, %v1432
        %v1434 = vrot.slane %v230, %v1433
        %v1436 = vunpack.c.l.s4 1983009808
        %v1437 = vunpack.c.0.s8 %v1436
        %v1438 = vlaneseq
        %v1439 = vshrl.u32 %v1438, 7
        %v1440 = vsub.s32 %v1437, %v1439
        %v1441 = vrot.slane %v1427, %v1440
        %v1442 = vcombine.high %v1434, %v1434
        %v1443 = vcombine.high %v1441, %v1441
        %v1444 = vcombine.high %v231, %v231
        %v1446 = vunpack.c.l.s4 1983009808
        %v1447 = vunpack.c.0.s8 %v1446
        %v1448 = vlaneseq
        %v1449 = vshrl.u32 %v1448, 7
        %v1450 = vsub.s32 %v1447, %v1449
        %v1451 = vrot.slane %v231, %v1450
        %v1453 = vunpack.c.l.s4 1983009808
        %v1454 = vunpack.c.0.s8 %v1453
        %v1455 = vlaneseq
        %v1456 = vshrl.u32 %v1455, 7
        %v1457 = vsub.s32 %v1454, %v1456
        %v1458 = vrot.slane %v1444, %v1457
        %v1459 = vcombine.high %v1451, %v1451
        %v1460 = vcombine.high %v1458, %v1458
        %v1461 = vcombine.high %v232, %v232
        %v1463 = vunpack.c.l.s4 1983009808
        %v1464 = vunpack.c.0.s8 %v1463
        %v1465 = vlaneseq
        %v1466 = vshrl.u32 %v1465, 7
        %v1467 = vsub.s32 %v1464, %v1466
        %v1468 = vrot.slane %v232, %v1467
        %v1470 = vunpack.c.l.s4 1983009808
        %v1471 = vunpack.c.0.s8 %v1470
        %v1472 = vlaneseq
        %v1473 = vshrl.u32 %v1472, 7
        %v1474 = vsub.s32 %v1471, %v1473
        %v1475 = vrot.slane %v1461, %v1474
        %v1476 = vcombine.high %v1468, %v1468
        %v1477 = vcombine.high %v1475, %v1475
        %v1478 = vcombine.high %v233, %v233
        %v1480 = vunpack.c.l.s4 1983009808
        %v1481 = vunpack.c.0.s8 %v1480
        %v1482 = vlaneseq
        %v1483 = vshrl.u32 %v1482, 7
        %v1484 = vsub.s32 %v1481, %v1483
        %v1485 = vrot.slane %v233, %v1484
        %v1487 = vunpack.c.l.s4 1983009808
        %v1488 = vunpack.c.0.s8 %v1487
        %v1489 = vlaneseq
        %v1490 = vshrl.u32 %v1489, 7
        %v1491 = vsub.s32 %v1488, %v1490
        %v1492 = vrot.slane %v1478, %v1491
        %v1493 = vcombine.high %v1485, %v1485
        %v1494 = vcombine.high %v1492, %v1492
        %v1495 = vcombine.high %v234, %v234
        %v1497 = vunpack.c.l.s4 1983009808
        %v1498 = vunpack.c.0.s8 %v1497
        %v1499 = vlaneseq
        %v1500 = vshrl.u32 %v1499, 7
        %v1501 = vsub.s32 %v1498, %v1500
        %v1502 = vrot.slane %v234, %v1501
        %v1504 = vunpack.c.l.s4 1983009808
        %v1505 = vunpack.c.0.s8 %v1504
        %v1506 = vlaneseq
        %v1507 = vshrl.u32 %v1506, 7
        %v1508 = vsub.s32 %v1505, %v1507
        %v1509 = vrot.slane %v1495, %v1508
        %v1510 = vcombine.high %v1502, %v1502
        %v1511 = vcombine.high %v1509, %v1509
        %1536 = vmatprep.subr.mxu0 %v281
        %1537 = vmatpush1.msra.mxu0 %v280
        %1538 = vmatprep.subr.mxu0 %v278
        %1539 = vmatpush1.msra.mxu0 %v277
        %1540 = vmatprep.subr.mxu0 %v275
        %1541 = vmatpush1.msra.mxu0 %v274
        %1542 = vmatprep.subr.mxu0 %v272
        %1543 = vmatpush1.msra.mxu0 %v271
        %1544 = vmatprep.subr.mxu0 %v269
        %1545 = vmatpush1.msra.mxu0 %v268
        %1546 = vmatprep.subr.mxu0 %v266
        %1547 = vmatpush1.msra.mxu0 %v265
        %1548 = vmatprep.subr.mxu0 %v263
        %1549 = vmatpush1.msra.mxu0 %v262
        %1550 = vmatprep.subr.mxu0 %v260
        %1551 = vmatpush1.msra.mxu0 %v259
        %1552 = vmatprep.subr.mxu0 %v257
        %1553 = vmatpush1.msra.mxu0 %v256
        %1554 = vmatprep.subr.mxu0 %v254
        %1555 = vmatpush1.msra.mxu0 %v253
        %1556 = vmatprep.subr.mxu0 %v251
        %1557 = vmatpush1.msra.mxu0 %v250
        %1558 = vmatprep.subr.mxu0 %v248
        %1559 = vmatpush1.msra.mxu0 %v247
        %1560 = vmatprep.subr.mxu0 %v245
        %1561 = vmatpush1.msra.mxu0 %v244
        %1562 = vmatprep.subr.mxu0 %v242
        %1563 = vmatpush1.msra.mxu0 %v241
        %1564 = vmatprep.subr.mxu0 %v239
        %1565 = vmatpush1.msra.mxu0 %v238
        %1566 = vmatprep.subr.mxu0 %v236
        %1567 = vmatpush1.msra.mxu0 %v235
        %1568 = vmatprep.subr.mxu0 %v329
        %1569 = vmatpush2.msra.mxu0 %v328
        %1570 = vmatprep.subr.mxu0 %v326
        %1571 = vmatpush2.msra.mxu0 %v325
        %1572 = vmatprep.subr.mxu0 %v323
        %1573 = vmatpush2.msra.mxu0 %v322
        %1574 = vmatprep.subr.mxu0 %v320
        %1575 = vmatpush2.msra.mxu0 %v319
        %1576 = vmatprep.subr.mxu0 %v317
        %1577 = vmatpush2.msra.mxu0 %v316
        %1578 = vmatprep.subr.mxu0 %v314
        %1579 = vmatpush2.msra.mxu0 %v313
        %1580 = vmatprep.subr.mxu0 %v311
        %1581 = vmatpush2.msra.mxu0 %v310
        %1582 = vmatprep.subr.mxu0 %v308
        %1583 = vmatpush2.msra.mxu0 %v307
        %1584 = vmatprep.subr.mxu0 %v305
        %1585 = vmatpush2.msra.mxu0 %v304
        %1586 = vmatprep.subr.mxu0 %v302
        %1587 = vmatpush2.msra.mxu0 %v301
        %1588 = vmatprep.subr.mxu0 %v299
        %1589 = vmatpush2.msra.mxu0 %v298
        %1590 = vmatprep.subr.mxu0 %v296
        %1591 = vmatpush2.msra.mxu0 %v295
        %1592 = vmatprep.subr.mxu0 %v293
        %1593 = vmatpush2.msra.mxu0 %v292
        %1594 = vmatprep.subr.mxu0 %v290
        %1595 = vmatpush2.msra.mxu0 %v289
        %1596 = vmatprep.subr.mxu0 %v287
        %1597 = vmatpush2.msra.mxu0 %v286
        %1598 = vmatprep.subr.mxu0 %v284
        %1599 = vmatpush2.msra.mxu0 %v283
        %1600 = vmatprep.mubr.f32.mxu0 %v1425
        %1601 = vmatmul.mubr.f32.gmra.mxu0 %v1417
        %v1602 = vpop.f32.mrf.mxu0
        %v1603 = vadd.f32 %v1392, %v1602
        %v1604 = vpop.f32.mrf.mxu0
        %v1605 = vadd.f32 %v1396, %v1604
        %1606 = vdwg.mxu0
        %1607 = vmatprep.subr.mxu0 %v377
        %1608 = vmatpush1.msra.mxu0 %v376
        %1609 = vmatprep.subr.mxu0 %v374
        %1610 = vmatpush1.msra.mxu0 %v373
        %1611 = vmatprep.subr.mxu0 %v371
        %1612 = vmatpush1.msra.mxu0 %v370
        %1613 = vmatprep.subr.mxu0 %v368
        %1614 = vmatpush1.msra.mxu0 %v367
        %1615 = vmatprep.subr.mxu0 %v365
        %1616 = vmatpush1.msra.mxu0 %v364
        %1617 = vmatprep.subr.mxu0 %v362
        %1618 = vmatpush1.msra.mxu0 %v361
        %1619 = vmatprep.subr.mxu0 %v359
        %1620 = vmatpush1.msra.mxu0 %v358
        %1621 = vmatprep.subr.mxu0 %v356
        %1622 = vmatpush1.msra.mxu0 %v355
        %1623 = vmatprep.subr.mxu0 %v353
        %1624 = vmatpush1.msra.mxu0 %v352
        %1625 = vmatprep.subr.mxu0 %v350
        %1626 = vmatpush1.msra.mxu0 %v349
        %1627 = vmatprep.subr.mxu0 %v347
        %1628 = vmatpush1.msra.mxu0 %v346
        %1629 = vmatprep.subr.mxu0 %v344
        %1630 = vmatpush1.msra.mxu0 %v343
        %1631 = vmatprep.subr.mxu0 %v341
        %1632 = vmatpush1.msra.mxu0 %v340
        %1633 = vmatprep.subr.mxu0 %v338
        %1634 = vmatpush1.msra.mxu0 %v337
        %1635 = vmatprep.subr.mxu0 %v335
        %1636 = vmatpush1.msra.mxu0 %v334
        %1637 = vmatprep.subr.mxu0 %v332
        %1638 = vmatpush1.msra.mxu0 %v331
        %1639 = vmatprep.subr.mxu0 %v425
        %1640 = vmatpush2.msra.mxu0 %v424
        %1641 = vmatprep.subr.mxu0 %v422
        %1642 = vmatpush2.msra.mxu0 %v421
        %1643 = vmatprep.subr.mxu0 %v419
        %1644 = vmatpush2.msra.mxu0 %v418
        %1645 = vmatprep.subr.mxu0 %v416
        %1646 = vmatpush2.msra.mxu0 %v415
        %1647 = vmatprep.subr.mxu0 %v413
        %1648 = vmatpush2.msra.mxu0 %v412
        %1649 = vmatprep.subr.mxu0 %v410
        %1650 = vmatpush2.msra.mxu0 %v409
        %1651 = vmatprep.subr.mxu0 %v407
        %1652 = vmatpush2.msra.mxu0 %v406
        %1653 = vmatprep.subr.mxu0 %v404
        %1654 = vmatpush2.msra.mxu0 %v403
        %1655 = vmatprep.subr.mxu0 %v401
        %1656 = vmatpush2.msra.mxu0 %v400
        %1657 = vmatprep.subr.mxu0 %v398
        %1658 = vmatpush2.msra.mxu0 %v397
        %1659 = vmatprep.subr.mxu0 %v395
        %1660 = vmatpush2.msra.mxu0 %v394
        %1661 = vmatprep.subr.mxu0 %v392
        %1662 = vmatpush2.msra.mxu0 %v391
        %1663 = vmatprep.subr.mxu0 %v389
        %1664 = vmatpush2.msra.mxu0 %v388
        %1665 = vmatprep.subr.mxu0 %v386
        %1666 = vmatpush2.msra.mxu0 %v385
        %1667 = vmatprep.subr.mxu0 %v383
        %1668 = vmatpush2.msra.mxu0 %v382
        %1669 = vmatprep.subr.mxu0 %v380
        %1670 = vmatpush2.msra.mxu0 %v379
        %1671 = vmatprep.mubr.f32.mxu0 %v1426
        %1672 = vmatmul.mubr.f32.gmra.mxu0 %v1424
        %v1673 = vpop.f32.mrf.mxu0
        %v1674 = vadd.f32 %v1603, %v1673
        %v1675 = vpop.f32.mrf.mxu0
        %v1676 = vadd.f32 %v1605, %v1675
        %1677 = vdwg.mxu0
        %1678 = vmatprep.subr.mxu0 %v473
        %1679 = vmatpush1.msra.mxu0 %v472
        %1680 = vmatprep.subr.mxu0 %v470
        %1681 = vmatpush1.msra.mxu0 %v469
        %1682 = vmatprep.subr.mxu0 %v467
        %1683 = vmatpush1.msra.mxu0 %v466
        %1684 = vmatprep.subr.mxu0 %v464
        %1685 = vmatpush1.msra.mxu0 %v463
        %1686 = vmatprep.subr.mxu0 %v461
        %1687 = vmatpush1.msra.mxu0 %v460
        %1688 = vmatprep.subr.mxu0 %v458
        %1689 = vmatpush1.msra.mxu0 %v457
        %1690 = vmatprep.subr.mxu0 %v455
        %1691 = vmatpush1.msra.mxu0 %v454
        %1692 = vmatprep.subr.mxu0 %v452
        %1693 = vmatpush1.msra.mxu0 %v451
        %1694 = vmatprep.subr.mxu0 %v449
        %1695 = vmatpush1.msra.mxu0 %v448
        %1696 = vmatprep.subr.mxu0 %v446
        %1697 = vmatpush1.msra.mxu0 %v445
        %1698 = vmatprep.subr.mxu0 %v443
        %1699 = vmatpush1.msra.mxu0 %v442
        %1700 = vmatprep.subr.mxu0 %v440
        %1701 = vmatpush1.msra.mxu0 %v439
        %1702 = vmatprep.subr.mxu0 %v437
        %1703 = vmatpush1.msra.mxu0 %v436
        %1704 = vmatprep.subr.mxu0 %v434
        %1705 = vmatpush1.msra.mxu0 %v433
        %1706 = vmatprep.subr.mxu0 %v431
        %1707 = vmatpush1.msra.mxu0 %v430
        %1708 = vmatprep.subr.mxu0 %v428
        %1709 = vmatpush1.msra.mxu0 %v427
        %1710 = vmatprep.subr.mxu0 %v521
        %1711 = vmatpush2.msra.mxu0 %v520
        %1712 = vmatprep.subr.mxu0 %v518
        %1713 = vmatpush2.msra.mxu0 %v517
        %1714 = vmatprep.subr.mxu0 %v515
        %1715 = vmatpush2.msra.mxu0 %v514
        %1716 = vmatprep.subr.mxu0 %v512
        %1717 = vmatpush2.msra.mxu0 %v511
        %1718 = vmatprep.subr.mxu0 %v509
        %1719 = vmatpush2.msra.mxu0 %v508
        %1720 = vmatprep.subr.mxu0 %v506
        %1721 = vmatpush2.msra.mxu0 %v505
        %1722 = vmatprep.subr.mxu0 %v503
        %1723 = vmatpush2.msra.mxu0 %v502
        %1724 = vmatprep.subr.mxu0 %v500
        %1725 = vmatpush2.msra.mxu0 %v499
        %1726 = vmatprep.subr.mxu0 %v497
        %1727 = vmatpush2.msra.mxu0 %v496
        %1728 = vmatprep.subr.mxu0 %v494
        %1729 = vmatpush2.msra.mxu0 %v493
        %1730 = vmatprep.subr.mxu0 %v491
        %1731 = vmatpush2.msra.mxu0 %v490
        %1732 = vmatprep.subr.mxu0 %v488
        %1733 = vmatpush2.msra.mxu0 %v487
        %1734 = vmatprep.subr.mxu0 %v485
        %1735 = vmatpush2.msra.mxu0 %v484
        %1736 = vmatprep.subr.mxu0 %v482
        %1737 = vmatpush2.msra.mxu0 %v481
        %1738 = vmatprep.subr.mxu0 %v479
        %1739 = vmatpush2.msra.mxu0 %v478
        %1740 = vmatprep.subr.mxu0 %v476
        %1741 = vmatpush2.msra.mxu0 %v475
        %1742 = vmatprep.mubr.f32.mxu0 %v1442
        %1743 = vmatmul.mubr.f32.gmra.mxu0 %v1434
        %v1744 = vpop.f32.mrf.mxu0
        %v1745 = vadd.f32 %v1674, %v1744
        %v1746 = vpop.f32.mrf.mxu0
        %v1747 = vadd.f32 %v1676, %v1746
        %1748 = vdwg.mxu0
        %1749 = vmatprep.subr.mxu0 %v569
        %1750 = vmatpush1.msra.mxu0 %v568
        %1751 = vmatprep.subr.mxu0 %v566
        %1752 = vmatpush1.msra.mxu0 %v565
        %1753 = vmatprep.subr.mxu0 %v563
        %1754 = vmatpush1.msra.mxu0 %v562
        %1755 = vmatprep.subr.mxu0 %v560
        %1756 = vmatpush1.msra.mxu0 %v559
        %1757 = vmatprep.subr.mxu0 %v557
        %1758 = vmatpush1.msra.mxu0 %v556
        %1759 = vmatprep.subr.mxu0 %v554
        %1760 = vmatpush1.msra.mxu0 %v553
        %1761 = vmatprep.subr.mxu0 %v551
        %1762 = vmatpush1.msra.mxu0 %v550
        %1763 = vmatprep.subr.mxu0 %v548
        %1764 = vmatpush1.msra.mxu0 %v547
        %1765 = vmatprep.subr.mxu0 %v545
        %1766 = vmatpush1.msra.mxu0 %v544
        %1767 = vmatprep.subr.mxu0 %v542
        %1768 = vmatpush1.msra.mxu0 %v541
        %1769 = vmatprep.subr.mxu0 %v539
        %1770 = vmatpush1.msra.mxu0 %v538
        %1771 = vmatprep.subr.mxu0 %v536
        %1772 = vmatpush1.msra.mxu0 %v535
        %1773 = vmatprep.subr.mxu0 %v533
        %1774 = vmatpush1.msra.mxu0 %v532
        %1775 = vmatprep.subr.mxu0 %v530
        %1776 = vmatpush1.msra.mxu0 %v529
        %1777 = vmatprep.subr.mxu0 %v527
        %1778 = vmatpush1.msra.mxu0 %v526
        %1779 = vmatprep.subr.mxu0 %v524
        %1780 = vmatpush1.msra.mxu0 %v523
        %1781 = vmatprep.subr.mxu0 %v617
        %1782 = vmatpush2.msra.mxu0 %v616
        %1783 = vmatprep.subr.mxu0 %v614
        %1784 = vmatpush2.msra.mxu0 %v613
        %1785 = vmatprep.subr.mxu0 %v611
        %1786 = vmatpush2.msra.mxu0 %v610
        %1787 = vmatprep.subr.mxu0 %v608
        %1788 = vmatpush2.msra.mxu0 %v607
        %1789 = vmatprep.subr.mxu0 %v605
        %1790 = vmatpush2.msra.mxu0 %v604
        %1791 = vmatprep.subr.mxu0 %v602
        %1792 = vmatpush2.msra.mxu0 %v601
        %1793 = vmatprep.subr.mxu0 %v599
        %1794 = vmatpush2.msra.mxu0 %v598
        %1795 = vmatprep.subr.mxu0 %v596
        %1796 = vmatpush2.msra.mxu0 %v595
        %1797 = vmatprep.subr.mxu0 %v593
        %1798 = vmatpush2.msra.mxu0 %v592
        %1799 = vmatprep.subr.mxu0 %v590
        %1800 = vmatpush2.msra.mxu0 %v589
        %1801 = vmatprep.subr.mxu0 %v587
        %1802 = vmatpush2.msra.mxu0 %v586
        %1803 = vmatprep.subr.mxu0 %v584
        %1804 = vmatpush2.msra.mxu0 %v583
        %1805 = vmatprep.subr.mxu0 %v581
        %1806 = vmatpush2.msra.mxu0 %v580
        %1807 = vmatprep.subr.mxu0 %v578
        %1808 = vmatpush2.msra.mxu0 %v577
        %1809 = vmatprep.subr.mxu0 %v575
        %1810 = vmatpush2.msra.mxu0 %v574
        %1811 = vmatprep.subr.mxu0 %v572
        %1812 = vmatpush2.msra.mxu0 %v571
        %1813 = vmatprep.mubr.f32.mxu0 %v1443
        %1814 = vmatmul.mubr.f32.gmra.mxu0 %v1441
        %v1815 = vpop.f32.mrf.mxu0
        %v1816 = vadd.f32 %v1745, %v1815
        %v1817 = vpop.f32.mrf.mxu0
        %v1818 = vadd.f32 %v1747, %v1817
        %1819 = vdwg.mxu0
        %1820 = vmatprep.subr.mxu0 %v665
        %1821 = vmatpush1.msra.mxu0 %v664
        %1822 = vmatprep.subr.mxu0 %v662
        %1823 = vmatpush1.msra.mxu0 %v661
        %1824 = vmatprep.subr.mxu0 %v659
        %1825 = vmatpush1.msra.mxu0 %v658
        %1826 = vmatprep.subr.mxu0 %v656
        %1827 = vmatpush1.msra.mxu0 %v655
        %1828 = vmatprep.subr.mxu0 %v653
        %1829 = vmatpush1.msra.mxu0 %v652
        %1830 = vmatprep.subr.mxu0 %v650
        %1831 = vmatpush1.msra.mxu0 %v649
        %1832 = vmatprep.subr.mxu0 %v647
        %1833 = vmatpush1.msra.mxu0 %v646
        %1834 = vmatprep.subr.mxu0 %v644
        %1835 = vmatpush1.msra.mxu0 %v643
        %1836 = vmatprep.subr.mxu0 %v641
        %1837 = vmatpush1.msra.mxu0 %v640
        %1838 = vmatprep.subr.mxu0 %v638
        %1839 = vmatpush1.msra.mxu0 %v637
        %1840 = vmatprep.subr.mxu0 %v635
        %1841 = vmatpush1.msra.mxu0 %v634
        %1842 = vmatprep.subr.mxu0 %v632
        %1843 = vmatpush1.msra.mxu0 %v631
        %1844 = vmatprep.subr.mxu0 %v629
        %1845 = vmatpush1.msra.mxu0 %v628
        %1846 = vmatprep.subr.mxu0 %v626
        %1847 = vmatpush1.msra.mxu0 %v625
        %1848 = vmatprep.subr.mxu0 %v623
        %1849 = vmatpush1.msra.mxu0 %v622
        %1850 = vmatprep.subr.mxu0 %v620
        %1851 = vmatpush1.msra.mxu0 %v619
        %1852 = vmatprep.subr.mxu0 %v713
        %1853 = vmatpush2.msra.mxu0 %v712
        %1854 = vmatprep.subr.mxu0 %v710
        %1855 = vmatpush2.msra.mxu0 %v709
        %1856 = vmatprep.subr.mxu0 %v707
        %1857 = vmatpush2.msra.mxu0 %v706
        %1858 = vmatprep.subr.mxu0 %v704
        %1859 = vmatpush2.msra.mxu0 %v703
        %1860 = vmatprep.subr.mxu0 %v701
        %1861 = vmatpush2.msra.mxu0 %v700
        %1862 = vmatprep.subr.mxu0 %v698
        %1863 = vmatpush2.msra.mxu0 %v697
        %1864 = vmatprep.subr.mxu0 %v695
        %1865 = vmatpush2.msra.mxu0 %v694
        %1866 = vmatprep.subr.mxu0 %v692
        %1867 = vmatpush2.msra.mxu0 %v691
        %1868 = vmatprep.subr.mxu0 %v689
        %1869 = vmatpush2.msra.mxu0 %v688
        %1870 = vmatprep.subr.mxu0 %v686
        %1871 = vmatpush2.msra.mxu0 %v685
        %1872 = vmatprep.subr.mxu0 %v683
        %1873 = vmatpush2.msra.mxu0 %v682
        %1874 = vmatprep.subr.mxu0 %v680
        %1875 = vmatpush2.msra.mxu0 %v679
        %1876 = vmatprep.subr.mxu0 %v677
        %1877 = vmatpush2.msra.mxu0 %v676
        %1878 = vmatprep.subr.mxu0 %v674
        %1879 = vmatpush2.msra.mxu0 %v673
        %1880 = vmatprep.subr.mxu0 %v671
        %1881 = vmatpush2.msra.mxu0 %v670
        %1882 = vmatprep.subr.mxu0 %v668
        %1883 = vmatpush2.msra.mxu0 %v667
        %1884 = vmatprep.mubr.f32.mxu0 %v1459
        %1885 = vmatmul.mubr.f32.gmra.mxu0 %v1451
        %v1886 = vpop.f32.mrf.mxu0
        %v1887 = vadd.f32 %v1816, %v1886
        %v1888 = vpop.f32.mrf.mxu0
        %v1889 = vadd.f32 %v1818, %v1888
        %1890 = vdwg.mxu0
        %1891 = vmatprep.subr.mxu0 %v761
        %1892 = vmatpush1.msra.mxu0 %v760
        %1893 = vmatprep.subr.mxu0 %v758
        %1894 = vmatpush1.msra.mxu0 %v757
        %1895 = vmatprep.subr.mxu0 %v755
        %1896 = vmatpush1.msra.mxu0 %v754
        %1897 = vmatprep.subr.mxu0 %v752
        %1898 = vmatpush1.msra.mxu0 %v751
        %1899 = vmatprep.subr.mxu0 %v749
        %1900 = vmatpush1.msra.mxu0 %v748
        %1901 = vmatprep.subr.mxu0 %v746
        %1902 = vmatpush1.msra.mxu0 %v745
        %1903 = vmatprep.subr.mxu0 %v743
        %1904 = vmatpush1.msra.mxu0 %v742
        %1905 = vmatprep.subr.mxu0 %v740
        %1906 = vmatpush1.msra.mxu0 %v739
        %1907 = vmatprep.subr.mxu0 %v737
        %1908 = vmatpush1.msra.mxu0 %v736
        %1909 = vmatprep.subr.mxu0 %v734
        %1910 = vmatpush1.msra.mxu0 %v733
        %1911 = vmatprep.subr.mxu0 %v731
        %1912 = vmatpush1.msra.mxu0 %v730
        %1913 = vmatprep.subr.mxu0 %v728
        %1914 = vmatpush1.msra.mxu0 %v727
        %1915 = vmatprep.subr.mxu0 %v725
        %1916 = vmatpush1.msra.mxu0 %v724
        %1917 = vmatprep.subr.mxu0 %v722
        %1918 = vmatpush1.msra.mxu0 %v721
        %1919 = vmatprep.subr.mxu0 %v719
        %1920 = vmatpush1.msra.mxu0 %v718
        %1921 = vmatprep.subr.mxu0 %v716
        %1922 = vmatpush1.msra.mxu0 %v715
        %1923 = vmatprep.subr.mxu0 %v809
        %1924 = vmatpush2.msra.mxu0 %v808
        %1925 = vmatprep.subr.mxu0 %v806
        %1926 = vmatpush2.msra.mxu0 %v805
        %1927 = vmatprep.subr.mxu0 %v803
        %1928 = vmatpush2.msra.mxu0 %v802
        %1929 = vmatprep.subr.mxu0 %v800
        %1930 = vmatpush2.msra.mxu0 %v799
        %1931 = vmatprep.subr.mxu0 %v797
        %1932 = vmatpush2.msra.mxu0 %v796
        %1933 = vmatprep.subr.mxu0 %v794
        %1934 = vmatpush2.msra.mxu0 %v793
        %1935 = vmatprep.subr.mxu0 %v791
        %1936 = vmatpush2.msra.mxu0 %v790
        %1937 = vmatprep.subr.mxu0 %v788
        %1938 = vmatpush2.msra.mxu0 %v787
        %1939 = vmatprep.subr.mxu0 %v785
        %1940 = vmatpush2.msra.mxu0 %v784
        %1941 = vmatprep.subr.mxu0 %v782
        %1942 = vmatpush2.msra.mxu0 %v781
        %1943 = vmatprep.subr.mxu0 %v779
        %1944 = vmatpush2.msra.mxu0 %v778
        %1945 = vmatprep.subr.mxu0 %v776
        %1946 = vmatpush2.msra.mxu0 %v775
        %1947 = vmatprep.subr.mxu0 %v773
        %1948 = vmatpush2.msra.mxu0 %v772
        %1949 = vmatprep.subr.mxu0 %v770
        %1950 = vmatpush2.msra.mxu0 %v769
        %1951 = vmatprep.subr.mxu0 %v767
        %1952 = vmatpush2.msra.mxu0 %v766
        %1953 = vmatprep.subr.mxu0 %v764
        %1954 = vmatpush2.msra.mxu0 %v763
        %1955 = vmatprep.mubr.f32.mxu0 %v1460
        %1956 = vmatmul.mubr.f32.gmra.mxu0 %v1458
        %v1957 = vpop.f32.mrf.mxu0
        %v1958 = vadd.f32 %v1887, %v1957
        %v1959 = vpop.f32.mrf.mxu0
        %v1960 = vadd.f32 %v1889, %v1959
        %1961 = vdwg.mxu0
        %1962 = vmatprep.subr.mxu0 %v857
        %1963 = vmatpush1.msra.mxu0 %v856
        %1964 = vmatprep.subr.mxu0 %v854
        %1965 = vmatpush1.msra.mxu0 %v853
        %1966 = vmatprep.subr.mxu0 %v851
        %1967 = vmatpush1.msra.mxu0 %v850
        %1968 = vmatprep.subr.mxu0 %v848
        %1969 = vmatpush1.msra.mxu0 %v847
        %1970 = vmatprep.subr.mxu0 %v845
        %1971 = vmatpush1.msra.mxu0 %v844
        %1972 = vmatprep.subr.mxu0 %v842
        %1973 = vmatpush1.msra.mxu0 %v841
        %1974 = vmatprep.subr.mxu0 %v839
        %1975 = vmatpush1.msra.mxu0 %v838
        %1976 = vmatprep.subr.mxu0 %v836
        %1977 = vmatpush1.msra.mxu0 %v835
        %1978 = vmatprep.subr.mxu0 %v833
        %1979 = vmatpush1.msra.mxu0 %v832
        %1980 = vmatprep.subr.mxu0 %v830
        %1981 = vmatpush1.msra.mxu0 %v829
        %1982 = vmatprep.subr.mxu0 %v827
        %1983 = vmatpush1.msra.mxu0 %v826
        %1984 = vmatprep.subr.mxu0 %v824
        %1985 = vmatpush1.msra.mxu0 %v823
        %1986 = vmatprep.subr.mxu0 %v821
        %1987 = vmatpush1.msra.mxu0 %v820
        %1988 = vmatprep.subr.mxu0 %v818
        %1989 = vmatpush1.msra.mxu0 %v817
        %1990 = vmatprep.subr.mxu0 %v815
        %1991 = vmatpush1.msra.mxu0 %v814
        %1992 = vmatprep.subr.mxu0 %v812
        %1993 = vmatpush1.msra.mxu0 %v811
        %1994 = vmatprep.subr.mxu0 %v905
        %1995 = vmatpush2.msra.mxu0 %v904
        %1996 = vmatprep.subr.mxu0 %v902
        %1997 = vmatpush2.msra.mxu0 %v901
        %1998 = vmatprep.subr.mxu0 %v899
        %1999 = vmatpush2.msra.mxu0 %v898
        %2000 = vmatprep.subr.mxu0 %v896
        %2001 = vmatpush2.msra.mxu0 %v895
        %2002 = vmatprep.subr.mxu0 %v893
        %2003 = vmatpush2.msra.mxu0 %v892
        %2004 = vmatprep.subr.mxu0 %v890
        %2005 = vmatpush2.msra.mxu0 %v889
        %2006 = vmatprep.subr.mxu0 %v887
        %2007 = vmatpush2.msra.mxu0 %v886
        %2008 = vmatprep.subr.mxu0 %v884
        %2009 = vmatpush2.msra.mxu0 %v883
        %2010 = vmatprep.subr.mxu0 %v881
        %2011 = vmatpush2.msra.mxu0 %v880
        %2012 = vmatprep.subr.mxu0 %v878
        %2013 = vmatpush2.msra.mxu0 %v877
        %2014 = vmatprep.subr.mxu0 %v875
        %2015 = vmatpush2.msra.mxu0 %v874
        %2016 = vmatprep.subr.mxu0 %v872
        %2017 = vmatpush2.msra.mxu0 %v871
        %2018 = vmatprep.subr.mxu0 %v869
        %2019 = vmatpush2.msra.mxu0 %v868
        %2020 = vmatprep.subr.mxu0 %v866
        %2021 = vmatpush2.msra.mxu0 %v865
        %2022 = vmatprep.subr.mxu0 %v863
        %2023 = vmatpush2.msra.mxu0 %v862
        %2024 = vmatprep.subr.mxu0 %v860
        %2025 = vmatpush2.msra.mxu0 %v859
        %2026 = vmatprep.mubr.f32.mxu0 %v1476
        %2027 = vmatmul.mubr.f32.gmra.mxu0 %v1468
        %v2028 = vpop.f32.mrf.mxu0
        %v2029 = vadd.f32 %v1958, %v2028
        %v2030 = vpop.f32.mrf.mxu0
        %v2031 = vadd.f32 %v1960, %v2030
        %2032 = vdwg.mxu0
        %2033 = vmatprep.subr.mxu0 %v953
        %2034 = vmatpush1.msra.mxu0 %v952
        %2035 = vmatprep.subr.mxu0 %v950
        %2036 = vmatpush1.msra.mxu0 %v949
        %2037 = vmatprep.subr.mxu0 %v947
        %2038 = vmatpush1.msra.mxu0 %v946
        %2039 = vmatprep.subr.mxu0 %v944
        %2040 = vmatpush1.msra.mxu0 %v943
        %2041 = vmatprep.subr.mxu0 %v941
        %2042 = vmatpush1.msra.mxu0 %v940
        %2043 = vmatprep.subr.mxu0 %v938
        %2044 = vmatpush1.msra.mxu0 %v937
        %2045 = vmatprep.subr.mxu0 %v935
        %2046 = vmatpush1.msra.mxu0 %v934
        %2047 = vmatprep.subr.mxu0 %v932
        %2048 = vmatpush1.msra.mxu0 %v931
        %2049 = vmatprep.subr.mxu0 %v929
        %2050 = vmatpush1.msra.mxu0 %v928
        %2051 = vmatprep.subr.mxu0 %v926
        %2052 = vmatpush1.msra.mxu0 %v925
        %2053 = vmatprep.subr.mxu0 %v923
        %2054 = vmatpush1.msra.mxu0 %v922
        %2055 = vmatprep.subr.mxu0 %v920
        %2056 = vmatpush1.msra.mxu0 %v919
        %2057 = vmatprep.subr.mxu0 %v917
        %2058 = vmatpush1.msra.mxu0 %v916
        %2059 = vmatprep.subr.mxu0 %v914
        %2060 = vmatpush1.msra.mxu0 %v913
        %2061 = vmatprep.subr.mxu0 %v911
        %2062 = vmatpush1.msra.mxu0 %v910
        %2063 = vmatprep.subr.mxu0 %v908
        %2064 = vmatpush1.msra.mxu0 %v907
        %2065 = vmatprep.subr.mxu0 %v1001
        %2066 = vmatpush2.msra.mxu0 %v1000
        %2067 = vmatprep.subr.mxu0 %v998
        %2068 = vmatpush2.msra.mxu0 %v997
        %2069 = vmatprep.subr.mxu0 %v995
        %2070 = vmatpush2.msra.mxu0 %v994
        %2071 = vmatprep.subr.mxu0 %v992
        %2072 = vmatpush2.msra.mxu0 %v991
        %2073 = vmatprep.subr.mxu0 %v989
        %2074 = vmatpush2.msra.mxu0 %v988
        %2075 = vmatprep.subr.mxu0 %v986
        %2076 = vmatpush2.msra.mxu0 %v985
        %2077 = vmatprep.subr.mxu0 %v983
        %2078 = vmatpush2.msra.mxu0 %v982
        %2079 = vmatprep.subr.mxu0 %v980
        %2080 = vmatpush2.msra.mxu0 %v979
        %2081 = vmatprep.subr.mxu0 %v977
        %2082 = vmatpush2.msra.mxu0 %v976
        %2083 = vmatprep.subr.mxu0 %v974
        %2084 = vmatpush2.msra.mxu0 %v973
        %2085 = vmatprep.subr.mxu0 %v971
        %2086 = vmatpush2.msra.mxu0 %v970
        %2087 = vmatprep.subr.mxu0 %v968
        %2088 = vmatpush2.msra.mxu0 %v967
        %2089 = vmatprep.subr.mxu0 %v965
        %2090 = vmatpush2.msra.mxu0 %v964
        %2091 = vmatprep.subr.mxu0 %v962
        %2092 = vmatpush2.msra.mxu0 %v961
        %2093 = vmatprep.subr.mxu0 %v959
        %2094 = vmatpush2.msra.mxu0 %v958
        %2095 = vmatprep.subr.mxu0 %v956
        %2096 = vmatpush2.msra.mxu0 %v955
        %2097 = vmatprep.mubr.f32.mxu0 %v1477
        %2098 = vmatmul.mubr.f32.gmra.mxu0 %v1475
        %v2099 = vpop.f32.mrf.mxu0
        %v2100 = vadd.f32 %v2029, %v2099
        %v2101 = vpop.f32.mrf.mxu0
        %v2102 = vadd.f32 %v2031, %v2101
        %2103 = vdwg.mxu0
        %2104 = vmatprep.subr.mxu0 %v1049
        %2105 = vmatpush1.msra.mxu0 %v1048
        %2106 = vmatprep.subr.mxu0 %v1046
        %2107 = vmatpush1.msra.mxu0 %v1045
        %2108 = vmatprep.subr.mxu0 %v1043
        %2109 = vmatpush1.msra.mxu0 %v1042
        %2110 = vmatprep.subr.mxu0 %v1040
        %2111 = vmatpush1.msra.mxu0 %v1039
        %2112 = vmatprep.subr.mxu0 %v1037
        %2113 = vmatpush1.msra.mxu0 %v1036
        %2114 = vmatprep.subr.mxu0 %v1034
        %2115 = vmatpush1.msra.mxu0 %v1033
        %2116 = vmatprep.subr.mxu0 %v1031
        %2117 = vmatpush1.msra.mxu0 %v1030
        %2118 = vmatprep.subr.mxu0 %v1028
        %2119 = vmatpush1.msra.mxu0 %v1027
        %2120 = vmatprep.subr.mxu0 %v1025
        %2121 = vmatpush1.msra.mxu0 %v1024
        %2122 = vmatprep.subr.mxu0 %v1022
        %2123 = vmatpush1.msra.mxu0 %v1021
        %2124 = vmatprep.subr.mxu0 %v1019
        %2125 = vmatpush1.msra.mxu0 %v1018
        %2126 = vmatprep.subr.mxu0 %v1016
        %2127 = vmatpush1.msra.mxu0 %v1015
        %2128 = vmatprep.subr.mxu0 %v1013
        %2129 = vmatpush1.msra.mxu0 %v1012
        %2130 = vmatprep.subr.mxu0 %v1010
        %2131 = vmatpush1.msra.mxu0 %v1009
        %2132 = vmatprep.subr.mxu0 %v1007
        %2133 = vmatpush1.msra.mxu0 %v1006
        %2134 = vmatprep.subr.mxu0 %v1004
        %2135 = vmatpush1.msra.mxu0 %v1003
        %2136 = vmatprep.subr.mxu0 %v1097
        %2137 = vmatpush2.msra.mxu0 %v1096
        %2138 = vmatprep.subr.mxu0 %v1094
        %2139 = vmatpush2.msra.mxu0 %v1093
        %2140 = vmatprep.subr.mxu0 %v1091
        %2141 = vmatpush2.msra.mxu0 %v1090
        %2142 = vmatprep.subr.mxu0 %v1088
        %2143 = vmatpush2.msra.mxu0 %v1087
        %2144 = vmatprep.subr.mxu0 %v1085
        %2145 = vmatpush2.msra.mxu0 %v1084
        %2146 = vmatprep.subr.mxu0 %v1082
        %2147 = vmatpush2.msra.mxu0 %v1081
        %2148 = vmatprep.subr.mxu0 %v1079
        %2149 = vmatpush2.msra.mxu0 %v1078
        %2150 = vmatprep.subr.mxu0 %v1076
        %2151 = vmatpush2.msra.mxu0 %v1075
        %2152 = vmatprep.subr.mxu0 %v1073
        %2153 = vmatpush2.msra.mxu0 %v1072
        %2154 = vmatprep.subr.mxu0 %v1070
        %2155 = vmatpush2.msra.mxu0 %v1069
        %2156 = vmatprep.subr.mxu0 %v1067
        %2157 = vmatpush2.msra.mxu0 %v1066
        %2158 = vmatprep.subr.mxu0 %v1064
        %2159 = vmatpush2.msra.mxu0 %v1063
        %2160 = vmatprep.subr.mxu0 %v1061
        %2161 = vmatpush2.msra.mxu0 %v1060
        %2162 = vmatprep.subr.mxu0 %v1058
        %2163 = vmatpush2.msra.mxu0 %v1057
        %2164 = vmatprep.subr.mxu0 %v1055
        %2165 = vmatpush2.msra.mxu0 %v1054
        %2166 = vmatprep.subr.mxu0 %v1052
        %2167 = vmatpush2.msra.mxu0 %v1051
        %2168 = vmatprep.mubr.f32.mxu0 %v1493
        %2169 = vmatmul.mubr.f32.gmra.mxu0 %v1485
        %v2170 = vpop.f32.mrf.mxu0
        %v2171 = vadd.f32 %v2100, %v2170
        %v2172 = vpop.f32.mrf.mxu0
        %v2173 = vadd.f32 %v2102, %v2172
        %2174 = vdwg.mxu0
        %2175 = vmatprep.subr.mxu0 %v1145
        %2176 = vmatpush1.msra.mxu0 %v1144
        %2177 = vmatprep.subr.mxu0 %v1142
        %2178 = vmatpush1.msra.mxu0 %v1141
        %2179 = vmatprep.subr.mxu0 %v1139
        %2180 = vmatpush1.msra.mxu0 %v1138
        %2181 = vmatprep.subr.mxu0 %v1136
        %2182 = vmatpush1.msra.mxu0 %v1135
        %2183 = vmatprep.subr.mxu0 %v1133
        %2184 = vmatpush1.msra.mxu0 %v1132
        %2185 = vmatprep.subr.mxu0 %v1130
        %2186 = vmatpush1.msra.mxu0 %v1129
        %2187 = vmatprep.subr.mxu0 %v1127
        %2188 = vmatpush1.msra.mxu0 %v1126
        %2189 = vmatprep.subr.mxu0 %v1124
        %2190 = vmatpush1.msra.mxu0 %v1123
        %2191 = vmatprep.subr.mxu0 %v1121
        %2192 = vmatpush1.msra.mxu0 %v1120
        %2193 = vmatprep.subr.mxu0 %v1118
        %2194 = vmatpush1.msra.mxu0 %v1117
        %2195 = vmatprep.subr.mxu0 %v1115
        %2196 = vmatpush1.msra.mxu0 %v1114
        %2197 = vmatprep.subr.mxu0 %v1112
        %2198 = vmatpush1.msra.mxu0 %v1111
        %2199 = vmatprep.subr.mxu0 %v1109
        %2200 = vmatpush1.msra.mxu0 %v1108
        %2201 = vmatprep.subr.mxu0 %v1106
        %2202 = vmatpush1.msra.mxu0 %v1105
        %2203 = vmatprep.subr.mxu0 %v1103
        %2204 = vmatpush1.msra.mxu0 %v1102
        %2205 = vmatprep.subr.mxu0 %v1100
        %2206 = vmatpush1.msra.mxu0 %v1099
        %2207 = vmatprep.subr.mxu0 %v1193
        %2208 = vmatpush2.msra.mxu0 %v1192
        %2209 = vmatprep.subr.mxu0 %v1190
        %2210 = vmatpush2.msra.mxu0 %v1189
        %2211 = vmatprep.subr.mxu0 %v1187
        %2212 = vmatpush2.msra.mxu0 %v1186
        %2213 = vmatprep.subr.mxu0 %v1184
        %2214 = vmatpush2.msra.mxu0 %v1183
        %2215 = vmatprep.subr.mxu0 %v1181
        %2216 = vmatpush2.msra.mxu0 %v1180
        %2217 = vmatprep.subr.mxu0 %v1178
        %2218 = vmatpush2.msra.mxu0 %v1177
        %2219 = vmatprep.subr.mxu0 %v1175
        %2220 = vmatpush2.msra.mxu0 %v1174
        %2221 = vmatprep.subr.mxu0 %v1172
        %2222 = vmatpush2.msra.mxu0 %v1171
        %2223 = vmatprep.subr.mxu0 %v1169
        %2224 = vmatpush2.msra.mxu0 %v1168
        %2225 = vmatprep.subr.mxu0 %v1166
        %2226 = vmatpush2.msra.mxu0 %v1165
        %2227 = vmatprep.subr.mxu0 %v1163
        %2228 = vmatpush2.msra.mxu0 %v1162
        %2229 = vmatprep.subr.mxu0 %v1160
        %2230 = vmatpush2.msra.mxu0 %v1159
        %2231 = vmatprep.subr.mxu0 %v1157
        %2232 = vmatpush2.msra.mxu0 %v1156
        %2233 = vmatprep.subr.mxu0 %v1154
        %2234 = vmatpush2.msra.mxu0 %v1153
        %2235 = vmatprep.subr.mxu0 %v1151
        %2236 = vmatpush2.msra.mxu0 %v1150
        %2237 = vmatprep.subr.mxu0 %v1148
        %2238 = vmatpush2.msra.mxu0 %v1147
        %2239 = vmatprep.mubr.f32.mxu0 %v1494
        %2240 = vmatmul.mubr.f32.gmra.mxu0 %v1492
        %v2241 = vpop.f32.mrf.mxu0
        %v2242 = vadd.f32 %v2171, %v2241
        %v2243 = vpop.f32.mrf.mxu0
        %v2244 = vadd.f32 %v2173, %v2243
        %2245 = vdwg.mxu0
        %2246 = vmatprep.subr.mxu0 %v1241
        %2247 = vmatpush1.msra.mxu0 %v1240
        %2248 = vmatprep.subr.mxu0 %v1238
        %2249 = vmatpush1.msra.mxu0 %v1237
        %2250 = vmatprep.subr.mxu0 %v1235
        %2251 = vmatpush1.msra.mxu0 %v1234
        %2252 = vmatprep.subr.mxu0 %v1232
        %2253 = vmatpush1.msra.mxu0 %v1231
        %2254 = vmatprep.subr.mxu0 %v1229
        %2255 = vmatpush1.msra.mxu0 %v1228
        %2256 = vmatprep.subr.mxu0 %v1226
        %2257 = vmatpush1.msra.mxu0 %v1225
        %2258 = vmatprep.subr.mxu0 %v1223
        %2259 = vmatpush1.msra.mxu0 %v1222
        %2260 = vmatprep.subr.mxu0 %v1220
        %2261 = vmatpush1.msra.mxu0 %v1219
        %2262 = vmatprep.subr.mxu0 %v1217
        %2263 = vmatpush1.msra.mxu0 %v1216
        %2264 = vmatprep.subr.mxu0 %v1214
        %2265 = vmatpush1.msra.mxu0 %v1213
        %2266 = vmatprep.subr.mxu0 %v1211
        %2267 = vmatpush1.msra.mxu0 %v1210
        %2268 = vmatprep.subr.mxu0 %v1208
        %2269 = vmatpush1.msra.mxu0 %v1207
        %2270 = vmatprep.subr.mxu0 %v1205
        %2271 = vmatpush1.msra.mxu0 %v1204
        %2272 = vmatprep.subr.mxu0 %v1202
        %2273 = vmatpush1.msra.mxu0 %v1201
        %2274 = vmatprep.subr.mxu0 %v1199
        %2275 = vmatpush1.msra.mxu0 %v1198
        %2276 = vmatprep.subr.mxu0 %v1196
        %2277 = vmatpush1.msra.mxu0 %v1195
        %2278 = vmatprep.subr.mxu0 %v1289
        %2279 = vmatpush2.msra.mxu0 %v1288
        %2280 = vmatprep.subr.mxu0 %v1286
        %2281 = vmatpush2.msra.mxu0 %v1285
        %2282 = vmatprep.subr.mxu0 %v1283
        %2283 = vmatpush2.msra.mxu0 %v1282
        %2284 = vmatprep.subr.mxu0 %v1280
        %2285 = vmatpush2.msra.mxu0 %v1279
        %2286 = vmatprep.subr.mxu0 %v1277
        %2287 = vmatpush2.msra.mxu0 %v1276
        %2288 = vmatprep.subr.mxu0 %v1274
        %2289 = vmatpush2.msra.mxu0 %v1273
        %2290 = vmatprep.subr.mxu0 %v1271
        %2291 = vmatpush2.msra.mxu0 %v1270
        %2292 = vmatprep.subr.mxu0 %v1268
        %2293 = vmatpush2.msra.mxu0 %v1267
        %2294 = vmatprep.subr.mxu0 %v1265
        %2295 = vmatpush2.msra.mxu0 %v1264
        %2296 = vmatprep.subr.mxu0 %v1262
        %2297 = vmatpush2.msra.mxu0 %v1261
        %2298 = vmatprep.subr.mxu0 %v1259
        %2299 = vmatpush2.msra.mxu0 %v1258
        %2300 = vmatprep.subr.mxu0 %v1256
        %2301 = vmatpush2.msra.mxu0 %v1255
        %2302 = vmatprep.subr.mxu0 %v1253
        %2303 = vmatpush2.msra.mxu0 %v1252
        %2304 = vmatprep.subr.mxu0 %v1250
        %2305 = vmatpush2.msra.mxu0 %v1249
        %2306 = vmatprep.subr.mxu0 %v1247
        %2307 = vmatpush2.msra.mxu0 %v1246
        %2308 = vmatprep.subr.mxu0 %v1244
        %2309 = vmatpush2.msra.mxu0 %v1243
        %2310 = vmatprep.mubr.f32.mxu0 %v1510
        %2311 = vmatmul.mubr.f32.gmra.mxu0 %v1502
        %v2312 = vpop.f32.mrf.mxu0
        %v2313 = vadd.f32 %v2242, %v2312
        %v2314 = vpop.f32.mrf.mxu0
        %v2315 = vadd.f32 %v2244, %v2314
        %2316 = vdwg.mxu0
        %2317 = vmatprep.subr.mxu0 %v1337
        %2318 = vmatpush1.msra.mxu0 %v1336
        %2319 = vmatprep.subr.mxu0 %v1334
        %2320 = vmatpush1.msra.mxu0 %v1333
        %2321 = vmatprep.subr.mxu0 %v1331
        %2322 = vmatpush1.msra.mxu0 %v1330
        %2323 = vmatprep.subr.mxu0 %v1328
        %2324 = vmatpush1.msra.mxu0 %v1327
        %2325 = vmatprep.subr.mxu0 %v1325
        %2326 = vmatpush1.msra.mxu0 %v1324
        %2327 = vmatprep.subr.mxu0 %v1322
        %2328 = vmatpush1.msra.mxu0 %v1321
        %2329 = vmatprep.subr.mxu0 %v1319
        %2330 = vmatpush1.msra.mxu0 %v1318
        %2331 = vmatprep.subr.mxu0 %v1316
        %2332 = vmatpush1.msra.mxu0 %v1315
        %2333 = vmatprep.subr.mxu0 %v1313
        %2334 = vmatpush1.msra.mxu0 %v1312
        %2335 = vmatprep.subr.mxu0 %v1310
        %2336 = vmatpush1.msra.mxu0 %v1309
        %2337 = vmatprep.subr.mxu0 %v1307
        %2338 = vmatpush1.msra.mxu0 %v1306
        %2339 = vmatprep.subr.mxu0 %v1304
        %2340 = vmatpush1.msra.mxu0 %v1303
        %2341 = vmatprep.subr.mxu0 %v1301
        %2342 = vmatpush1.msra.mxu0 %v1300
        %2343 = vmatprep.subr.mxu0 %v1298
        %2344 = vmatpush1.msra.mxu0 %v1297
        %2345 = vmatprep.subr.mxu0 %v1295
        %2346 = vmatpush1.msra.mxu0 %v1294
        %2347 = vmatprep.subr.mxu0 %v1292
        %2348 = vmatpush1.msra.mxu0 %v1291
        %2349 = vmatprep.subr.mxu0 %v1385
        %2350 = vmatpush2.msra.mxu0 %v1384
        %2351 = vmatprep.subr.mxu0 %v1382
        %2352 = vmatpush2.msra.mxu0 %v1381
        %2353 = vmatprep.subr.mxu0 %v1379
        %2354 = vmatpush2.msra.mxu0 %v1378
        %2355 = vmatprep.subr.mxu0 %v1376
        %2356 = vmatpush2.msra.mxu0 %v1375
        %2357 = vmatprep.subr.mxu0 %v1373
        %2358 = vmatpush2.msra.mxu0 %v1372
        %2359 = vmatprep.subr.mxu0 %v1370
        %2360 = vmatpush2.msra.mxu0 %v1369
        %2361 = vmatprep.subr.mxu0 %v1367
        %2362 = vmatpush2.msra.mxu0 %v1366
        %2363 = vmatprep.subr.mxu0 %v1364
        %2364 = vmatpush2.msra.mxu0 %v1363
        %2365 = vmatprep.subr.mxu0 %v1361
        %2366 = vmatpush2.msra.mxu0 %v1360
        %2367 = vmatprep.subr.mxu0 %v1358
        %2368 = vmatpush2.msra.mxu0 %v1357
        %2369 = vmatprep.subr.mxu0 %v1355
        %2370 = vmatpush2.msra.mxu0 %v1354
        %2371 = vmatprep.subr.mxu0 %v1352
        %2372 = vmatpush2.msra.mxu0 %v1351
        %2373 = vmatprep.subr.mxu0 %v1349
        %2374 = vmatpush2.msra.mxu0 %v1348
        %2375 = vmatprep.subr.mxu0 %v1346
        %2376 = vmatpush2.msra.mxu0 %v1345
        %2377 = vmatprep.subr.mxu0 %v1343
        %2378 = vmatpush2.msra.mxu0 %v1342
        %2379 = vmatprep.subr.mxu0 %v1340
        %2380 = vmatpush2.msra.mxu0 %v1339
        %2381 = vmatprep.mubr.f32.mxu0 %v1511
        %2382 = vmatmul.mubr.f32.gmra.mxu0 %v1509
        %v2383 = vpop.f32.mrf.mxu0
        %v2384 = vadd.f32 %v2313, %v2383
        %v2385 = vpop.f32.mrf.mxu0
        %v2386 = vadd.f32 %v2315, %v2385
        %2387 = vdwg.mxu0
        %2388 = vmatprep.subr.mxu0 0.0
        %2389 = vmatpush1.msra.mxu0 %v282
        %2390 = vmatprep.subr.mxu0 0.0
        %2391 = vmatpush1.msra.mxu0 %v279
        %2392 = vmatprep.subr.mxu0 0.0
        %2393 = vmatpush1.msra.mxu0 %v276
        %2394 = vmatprep.subr.mxu0 0.0
        %2395 = vmatpush1.msra.mxu0 %v273
        %2396 = vmatprep.subr.mxu0 0.0
        %2397 = vmatpush1.msra.mxu0 %v270
        %2398 = vmatprep.subr.mxu0 0.0
        %2399 = vmatpush1.msra.mxu0 %v267
        %2400 = vmatprep.subr.mxu0 0.0
        %2401 = vmatpush1.msra.mxu0 %v264
        %2402 = vmatprep.subr.mxu0 0.0
        %2403 = vmatpush1.msra.mxu0 %v261
        %2404 = vmatprep.subr.mxu0 0.0
        %2405 = vmatpush1.msra.mxu0 %v258
        %2406 = vmatprep.subr.mxu0 0.0
        %2407 = vmatpush1.msra.mxu0 %v255
        %2408 = vmatprep.subr.mxu0 0.0
        %2409 = vmatpush1.msra.mxu0 %v252
        %2410 = vmatprep.subr.mxu0 0.0
        %2411 = vmatpush1.msra.mxu0 %v249
        %2412 = vmatprep.subr.mxu0 0.0
        %2413 = vmatpush1.msra.mxu0 %v246
        %2414 = vmatprep.subr.mxu0 0.0
        %2415 = vmatpush1.msra.mxu0 %v243
        %2416 = vmatprep.subr.mxu0 0.0
        %2417 = vmatpush1.msra.mxu0 %v240
        %2418 = vmatprep.subr.mxu0 0.0
        %2419 = vmatpush1.msra.mxu0 %v237
        %2420 = vmatprep.subr.mxu0 0.0
        %2421 = vmatpush2.msra.mxu0 %v330
        %2422 = vmatprep.subr.mxu0 0.0
        %2423 = vmatpush2.msra.mxu0 %v327
        %2424 = vmatprep.subr.mxu0 0.0
        %2425 = vmatpush2.msra.mxu0 %v324
        %2426 = vmatprep.subr.mxu0 0.0
        %2427 = vmatpush2.msra.mxu0 %v321
        %2428 = vmatprep.subr.mxu0 0.0
        %2429 = vmatpush2.msra.mxu0 %v318
        %2430 = vmatprep.subr.mxu0 0.0
        %2431 = vmatpush2.msra.mxu0 %v315
        %2432 = vmatprep.subr.mxu0 0.0
        %2433 = vmatpush2.msra.mxu0 %v312
        %2434 = vmatprep.subr.mxu0 0.0
        %2435 = vmatpush2.msra.mxu0 %v309
        %2436 = vmatprep.subr.mxu0 0.0
        %2437 = vmatpush2.msra.mxu0 %v306
        %2438 = vmatprep.subr.mxu0 0.0
        %2439 = vmatpush2.msra.mxu0 %v303
        %2440 = vmatprep.subr.mxu0 0.0
        %2441 = vmatpush2.msra.mxu0 %v300
        %2442 = vmatprep.subr.mxu0 0.0
        %2443 = vmatpush2.msra.mxu0 %v297
        %2444 = vmatprep.subr.mxu0 0.0
        %2445 = vmatpush2.msra.mxu0 %v294
        %2446 = vmatprep.subr.mxu0 0.0
        %2447 = vmatpush2.msra.mxu0 %v291
        %2448 = vmatprep.subr.mxu0 0.0
        %2449 = vmatpush2.msra.mxu0 %v288
        %2450 = vmatprep.subr.mxu0 0.0
        %2451 = vmatpush2.msra.mxu0 %v285
        %2452 = vmatprep.mubr.f32.mxu0 %v1425
        %2453 = vmatmul.mubr.f32.gmra.mxu0 %v1417
        %v2454 = vpop.f32.mrf.mxu0
        %v2455 = vadd.f32 %v1400, %v2454
        %v2456 = vpop.f32.mrf.mxu0
        %2457 = vdwg.mxu0
        %2458 = vmatprep.subr.mxu0 0.0
        %2459 = vmatpush1.msra.mxu0 %v378
        %2460 = vmatprep.subr.mxu0 0.0
        %2461 = vmatpush1.msra.mxu0 %v375
        %2462 = vmatprep.subr.mxu0 0.0
        %2463 = vmatpush1.msra.mxu0 %v372
        %2464 = vmatprep.subr.mxu0 0.0
        %2465 = vmatpush1.msra.mxu0 %v369
        %2466 = vmatprep.subr.mxu0 0.0
        %2467 = vmatpush1.msra.mxu0 %v366
        %2468 = vmatprep.subr.mxu0 0.0
        %2469 = vmatpush1.msra.mxu0 %v363
        %2470 = vmatprep.subr.mxu0 0.0
        %2471 = vmatpush1.msra.mxu0 %v360
        %2472 = vmatprep.subr.mxu0 0.0
        %2473 = vmatpush1.msra.mxu0 %v357
        %2474 = vmatprep.subr.mxu0 0.0
        %2475 = vmatpush1.msra.mxu0 %v354
        %2476 = vmatprep.subr.mxu0 0.0
        %2477 = vmatpush1.msra.mxu0 %v351
        %2478 = vmatprep.subr.mxu0 0.0
        %2479 = vmatpush1.msra.mxu0 %v348
        %2480 = vmatprep.subr.mxu0 0.0
        %2481 = vmatpush1.msra.mxu0 %v345
        %2482 = vmatprep.subr.mxu0 0.0
        %2483 = vmatpush1.msra.mxu0 %v342
        %2484 = vmatprep.subr.mxu0 0.0
        %2485 = vmatpush1.msra.mxu0 %v339
        %2486 = vmatprep.subr.mxu0 0.0
        %2487 = vmatpush1.msra.mxu0 %v336
        %2488 = vmatprep.subr.mxu0 0.0
        %2489 = vmatpush1.msra.mxu0 %v333
        %2490 = vmatprep.subr.mxu0 0.0
        %2491 = vmatpush2.msra.mxu0 %v426
        %2492 = vmatprep.subr.mxu0 0.0
        %2493 = vmatpush2.msra.mxu0 %v423
        %2494 = vmatprep.subr.mxu0 0.0
        %2495 = vmatpush2.msra.mxu0 %v420
        %2496 = vmatprep.subr.mxu0 0.0
        %2497 = vmatpush2.msra.mxu0 %v417
        %2498 = vmatprep.subr.mxu0 0.0
        %2499 = vmatpush2.msra.mxu0 %v414
        %2500 = vmatprep.subr.mxu0 0.0
        %2501 = vmatpush2.msra.mxu0 %v411
        %2502 = vmatprep.subr.mxu0 0.0
        %2503 = vmatpush2.msra.mxu0 %v408
        %2504 = vmatprep.subr.mxu0 0.0
        %2505 = vmatpush2.msra.mxu0 %v405
        %2506 = vmatprep.subr.mxu0 0.0
        %2507 = vmatpush2.msra.mxu0 %v402
        %2508 = vmatprep.subr.mxu0 0.0
        %2509 = vmatpush2.msra.mxu0 %v399
        %2510 = vmatprep.subr.mxu0 0.0
        %2511 = vmatpush2.msra.mxu0 %v396
        %2512 = vmatprep.subr.mxu0 0.0
        %2513 = vmatpush2.msra.mxu0 %v393
        %2514 = vmatprep.subr.mxu0 0.0
        %2515 = vmatpush2.msra.mxu0 %v390
        %2516 = vmatprep.subr.mxu0 0.0
        %2517 = vmatpush2.msra.mxu0 %v387
        %2518 = vmatprep.subr.mxu0 0.0
        %2519 = vmatpush2.msra.mxu0 %v384
        %2520 = vmatprep.subr.mxu0 0.0
        %2521 = vmatpush2.msra.mxu0 %v381
        %2522 = vmatprep.mubr.f32.mxu0 %v1426
        %2523 = vmatmul.mubr.f32.gmra.mxu0 %v1424
        %v2524 = vpop.f32.mrf.mxu0
        %v2525 = vadd.f32 %v2455, %v2524
        %v2526 = vpop.f32.mrf.mxu0
        %2527 = vdwg.mxu0
        %2528 = vmatprep.subr.mxu0 0.0
        %2529 = vmatpush1.msra.mxu0 %v474
        %2530 = vmatprep.subr.mxu0 0.0
        %2531 = vmatpush1.msra.mxu0 %v471
        %2532 = vmatprep.subr.mxu0 0.0
        %2533 = vmatpush1.msra.mxu0 %v468
        %2534 = vmatprep.subr.mxu0 0.0
        %2535 = vmatpush1.msra.mxu0 %v465
        %2536 = vmatprep.subr.mxu0 0.0
        %2537 = vmatpush1.msra.mxu0 %v462
        %2538 = vmatprep.subr.mxu0 0.0
        %2539 = vmatpush1.msra.mxu0 %v459
        %2540 = vmatprep.subr.mxu0 0.0
        %2541 = vmatpush1.msra.mxu0 %v456
        %2542 = vmatprep.subr.mxu0 0.0
        %2543 = vmatpush1.msra.mxu0 %v453
        %2544 = vmatprep.subr.mxu0 0.0
        %2545 = vmatpush1.msra.mxu0 %v450
        %2546 = vmatprep.subr.mxu0 0.0
        %2547 = vmatpush1.msra.mxu0 %v447
        %2548 = vmatprep.subr.mxu0 0.0
        %2549 = vmatpush1.msra.mxu0 %v444
        %2550 = vmatprep.subr.mxu0 0.0
        %2551 = vmatpush1.msra.mxu0 %v441
        %2552 = vmatprep.subr.mxu0 0.0
        %2553 = vmatpush1.msra.mxu0 %v438
        %2554 = vmatprep.subr.mxu0 0.0
        %2555 = vmatpush1.msra.mxu0 %v435
        %2556 = vmatprep.subr.mxu0 0.0
        %2557 = vmatpush1.msra.mxu0 %v432
        %2558 = vmatprep.subr.mxu0 0.0
        %2559 = vmatpush1.msra.mxu0 %v429
        %2560 = vmatprep.subr.mxu0 0.0
        %2561 = vmatpush2.msra.mxu0 %v522
        %2562 = vmatprep.subr.mxu0 0.0
        %2563 = vmatpush2.msra.mxu0 %v519
        %2564 = vmatprep.subr.mxu0 0.0
        %2565 = vmatpush2.msra.mxu0 %v516
        %2566 = vmatprep.subr.mxu0 0.0
        %2567 = vmatpush2.msra.mxu0 %v513
        %2568 = vmatprep.subr.mxu0 0.0
        %2569 = vmatpush2.msra.mxu0 %v510
        %2570 = vmatprep.subr.mxu0 0.0
        %2571 = vmatpush2.msra.mxu0 %v507
        %2572 = vmatprep.subr.mxu0 0.0
        %2573 = vmatpush2.msra.mxu0 %v504
        %2574 = vmatprep.subr.mxu0 0.0
        %2575 = vmatpush2.msra.mxu0 %v501
        %2576 = vmatprep.subr.mxu0 0.0
        %2577 = vmatpush2.msra.mxu0 %v498
        %2578 = vmatprep.subr.mxu0 0.0
        %2579 = vmatpush2.msra.mxu0 %v495
        %2580 = vmatprep.subr.mxu0 0.0
        %2581 = vmatpush2.msra.mxu0 %v492
        %2582 = vmatprep.subr.mxu0 0.0
        %2583 = vmatpush2.msra.mxu0 %v489
        %2584 = vmatprep.subr.mxu0 0.0
        %2585 = vmatpush2.msra.mxu0 %v486
        %2586 = vmatprep.subr.mxu0 0.0
        %2587 = vmatpush2.msra.mxu0 %v483
        %2588 = vmatprep.subr.mxu0 0.0
        %2589 = vmatpush2.msra.mxu0 %v480
        %2590 = vmatprep.subr.mxu0 0.0
        %2591 = vmatpush2.msra.mxu0 %v477
        %2592 = vmatprep.mubr.f32.mxu0 %v1442
        %2593 = vmatmul.mubr.f32.gmra.mxu0 %v1434
        %v2594 = vpop.f32.mrf.mxu0
        %v2595 = vadd.f32 %v2525, %v2594
        %v2596 = vpop.f32.mrf.mxu0
        %2597 = vdwg.mxu0
        %2598 = vmatprep.subr.mxu0 0.0
        %2599 = vmatpush1.msra.mxu0 %v570
        %2600 = vmatprep.subr.mxu0 0.0
        %2601 = vmatpush1.msra.mxu0 %v567
        %2602 = vmatprep.subr.mxu0 0.0
        %2603 = vmatpush1.msra.mxu0 %v564
        %2604 = vmatprep.subr.mxu0 0.0
        %2605 = vmatpush1.msra.mxu0 %v561
        %2606 = vmatprep.subr.mxu0 0.0
        %2607 = vmatpush1.msra.mxu0 %v558
        %2608 = vmatprep.subr.mxu0 0.0
        %2609 = vmatpush1.msra.mxu0 %v555
        %2610 = vmatprep.subr.mxu0 0.0
        %2611 = vmatpush1.msra.mxu0 %v552
        %2612 = vmatprep.subr.mxu0 0.0
        %2613 = vmatpush1.msra.mxu0 %v549
        %2614 = vmatprep.subr.mxu0 0.0
        %2615 = vmatpush1.msra.mxu0 %v546
        %2616 = vmatprep.subr.mxu0 0.0
        %2617 = vmatpush1.msra.mxu0 %v543
        %2618 = vmatprep.subr.mxu0 0.0
        %2619 = vmatpush1.msra.mxu0 %v540
        %2620 = vmatprep.subr.mxu0 0.0
        %2621 = vmatpush1.msra.mxu0 %v537
        %2622 = vmatprep.subr.mxu0 0.0
        %2623 = vmatpush1.msra.mxu0 %v534
        %2624 = vmatprep.subr.mxu0 0.0
        %2625 = vmatpush1.msra.mxu0 %v531
        %2626 = vmatprep.subr.mxu0 0.0
        %2627 = vmatpush1.msra.mxu0 %v528
        %2628 = vmatprep.subr.mxu0 0.0
        %2629 = vmatpush1.msra.mxu0 %v525
        %2630 = vmatprep.subr.mxu0 0.0
        %2631 = vmatpush2.msra.mxu0 %v618
        %2632 = vmatprep.subr.mxu0 0.0
        %2633 = vmatpush2.msra.mxu0 %v615
        %2634 = vmatprep.subr.mxu0 0.0
        %2635 = vmatpush2.msra.mxu0 %v612
        %2636 = vmatprep.subr.mxu0 0.0
        %2637 = vmatpush2.msra.mxu0 %v609
        %2638 = vmatprep.subr.mxu0 0.0
        %2639 = vmatpush2.msra.mxu0 %v606
        %2640 = vmatprep.subr.mxu0 0.0
        %2641 = vmatpush2.msra.mxu0 %v603
        %2642 = vmatprep.subr.mxu0 0.0
        %2643 = vmatpush2.msra.mxu0 %v600
        %2644 = vmatprep.subr.mxu0 0.0
        %2645 = vmatpush2.msra.mxu0 %v597
        %2646 = vmatprep.subr.mxu0 0.0
        %2647 = vmatpush2.msra.mxu0 %v594
        %2648 = vmatprep.subr.mxu0 0.0
        %2649 = vmatpush2.msra.mxu0 %v591
        %2650 = vmatprep.subr.mxu0 0.0
        %2651 = vmatpush2.msra.mxu0 %v588
        %2652 = vmatprep.subr.mxu0 0.0
        %2653 = vmatpush2.msra.mxu0 %v585
        %2654 = vmatprep.subr.mxu0 0.0
        %2655 = vmatpush2.msra.mxu0 %v582
        %2656 = vmatprep.subr.mxu0 0.0
        %2657 = vmatpush2.msra.mxu0 %v579
        %2658 = vmatprep.subr.mxu0 0.0
        %2659 = vmatpush2.msra.mxu0 %v576
        %2660 = vmatprep.subr.mxu0 0.0
        %2661 = vmatpush2.msra.mxu0 %v573
        %2662 = vmatprep.mubr.f32.mxu0 %v1443
        %2663 = vmatmul.mubr.f32.gmra.mxu0 %v1441
        %v2664 = vpop.f32.mrf.mxu0
        %v2665 = vadd.f32 %v2595, %v2664
        %v2666 = vpop.f32.mrf.mxu0
        %2667 = vdwg.mxu0
        %2668 = vmatprep.subr.mxu0 0.0
        %2669 = vmatpush1.msra.mxu0 %v666
        %2670 = vmatprep.subr.mxu0 0.0
        %2671 = vmatpush1.msra.mxu0 %v663
        %2672 = vmatprep.subr.mxu0 0.0
        %2673 = vmatpush1.msra.mxu0 %v660
        %2674 = vmatprep.subr.mxu0 0.0
        %2675 = vmatpush1.msra.mxu0 %v657
        %2676 = vmatprep.subr.mxu0 0.0
        %2677 = vmatpush1.msra.mxu0 %v654
        %2678 = vmatprep.subr.mxu0 0.0
        %2679 = vmatpush1.msra.mxu0 %v651
        %2680 = vmatprep.subr.mxu0 0.0
        %2681 = vmatpush1.msra.mxu0 %v648
        %2682 = vmatprep.subr.mxu0 0.0
        %2683 = vmatpush1.msra.mxu0 %v645
        %2684 = vmatprep.subr.mxu0 0.0
        %2685 = vmatpush1.msra.mxu0 %v642
        %2686 = vmatprep.subr.mxu0 0.0
        %2687 = vmatpush1.msra.mxu0 %v639
        %2688 = vmatprep.subr.mxu0 0.0
        %2689 = vmatpush1.msra.mxu0 %v636
        %2690 = vmatprep.subr.mxu0 0.0
        %2691 = vmatpush1.msra.mxu0 %v633
        %2692 = vmatprep.subr.mxu0 0.0
        %2693 = vmatpush1.msra.mxu0 %v630
        %2694 = vmatprep.subr.mxu0 0.0
        %2695 = vmatpush1.msra.mxu0 %v627
        %2696 = vmatprep.subr.mxu0 0.0
        %2697 = vmatpush1.msra.mxu0 %v624
        %2698 = vmatprep.subr.mxu0 0.0
        %2699 = vmatpush1.msra.mxu0 %v621
        %2700 = vmatprep.subr.mxu0 0.0
        %2701 = vmatpush2.msra.mxu0 %v714
        %2702 = vmatprep.subr.mxu0 0.0
        %2703 = vmatpush2.msra.mxu0 %v711
        %2704 = vmatprep.subr.mxu0 0.0
        %2705 = vmatpush2.msra.mxu0 %v708
        %2706 = vmatprep.subr.mxu0 0.0
        %2707 = vmatpush2.msra.mxu0 %v705
        %2708 = vmatprep.subr.mxu0 0.0
        %2709 = vmatpush2.msra.mxu0 %v702
        %2710 = vmatprep.subr.mxu0 0.0
        %2711 = vmatpush2.msra.mxu0 %v699
        %2712 = vmatprep.subr.mxu0 0.0
        %2713 = vmatpush2.msra.mxu0 %v696
        %2714 = vmatprep.subr.mxu0 0.0
        %2715 = vmatpush2.msra.mxu0 %v693
        %2716 = vmatprep.subr.mxu0 0.0
        %2717 = vmatpush2.msra.mxu0 %v690
        %2718 = vmatprep.subr.mxu0 0.0
        %2719 = vmatpush2.msra.mxu0 %v687
        %2720 = vmatprep.subr.mxu0 0.0
        %2721 = vmatpush2.msra.mxu0 %v684
        %2722 = vmatprep.subr.mxu0 0.0
        %2723 = vmatpush2.msra.mxu0 %v681
        %2724 = vmatprep.subr.mxu0 0.0
        %2725 = vmatpush2.msra.mxu0 %v678
        %2726 = vmatprep.subr.mxu0 0.0
        %2727 = vmatpush2.msra.mxu0 %v675
        %2728 = vmatprep.subr.mxu0 0.0
        %2729 = vmatpush2.msra.mxu0 %v672
        %2730 = vmatprep.subr.mxu0 0.0
        %2731 = vmatpush2.msra.mxu0 %v669
        %2732 = vmatprep.mubr.f32.mxu0 %v1459
        %2733 = vmatmul.mubr.f32.gmra.mxu0 %v1451
        %v2734 = vpop.f32.mrf.mxu0
        %v2735 = vadd.f32 %v2665, %v2734
        %v2736 = vpop.f32.mrf.mxu0
        %2737 = vdwg.mxu0
        %2738 = vmatprep.subr.mxu0 0.0
        %2739 = vmatpush1.msra.mxu0 %v762
        %2740 = vmatprep.subr.mxu0 0.0
        %2741 = vmatpush1.msra.mxu0 %v759
        %2742 = vmatprep.subr.mxu0 0.0
        %2743 = vmatpush1.msra.mxu0 %v756
        %2744 = vmatprep.subr.mxu0 0.0
        %2745 = vmatpush1.msra.mxu0 %v753
        %2746 = vmatprep.subr.mxu0 0.0
        %2747 = vmatpush1.msra.mxu0 %v750
        %2748 = vmatprep.subr.mxu0 0.0
        %2749 = vmatpush1.msra.mxu0 %v747
        %2750 = vmatprep.subr.mxu0 0.0
        %2751 = vmatpush1.msra.mxu0 %v744
        %2752 = vmatprep.subr.mxu0 0.0
        %2753 = vmatpush1.msra.mxu0 %v741
        %2754 = vmatprep.subr.mxu0 0.0
        %2755 = vmatpush1.msra.mxu0 %v738
        %2756 = vmatprep.subr.mxu0 0.0
        %2757 = vmatpush1.msra.mxu0 %v735
        %2758 = vmatprep.subr.mxu0 0.0
        %2759 = vmatpush1.msra.mxu0 %v732
        %2760 = vmatprep.subr.mxu0 0.0
        %2761 = vmatpush1.msra.mxu0 %v729
        %2762 = vmatprep.subr.mxu0 0.0
        %2763 = vmatpush1.msra.mxu0 %v726
        %2764 = vmatprep.subr.mxu0 0.0
        %2765 = vmatpush1.msra.mxu0 %v723
        %2766 = vmatprep.subr.mxu0 0.0
        %2767 = vmatpush1.msra.mxu0 %v720
        %2768 = vmatprep.subr.mxu0 0.0
        %2769 = vmatpush1.msra.mxu0 %v717
        %2770 = vmatprep.subr.mxu0 0.0
        %2771 = vmatpush2.msra.mxu0 %v810
        %2772 = vmatprep.subr.mxu0 0.0
        %2773 = vmatpush2.msra.mxu0 %v807
        %2774 = vmatprep.subr.mxu0 0.0
        %2775 = vmatpush2.msra.mxu0 %v804
        %2776 = vmatprep.subr.mxu0 0.0
        %2777 = vmatpush2.msra.mxu0 %v801
        %2778 = vmatprep.subr.mxu0 0.0
        %2779 = vmatpush2.msra.mxu0 %v798
        %2780 = vmatprep.subr.mxu0 0.0
        %2781 = vmatpush2.msra.mxu0 %v795
        %2782 = vmatprep.subr.mxu0 0.0
        %2783 = vmatpush2.msra.mxu0 %v792
        %2784 = vmatprep.subr.mxu0 0.0
        %2785 = vmatpush2.msra.mxu0 %v789
        %2786 = vmatprep.subr.mxu0 0.0
        %2787 = vmatpush2.msra.mxu0 %v786
        %2788 = vmatprep.subr.mxu0 0.0
        %2789 = vmatpush2.msra.mxu0 %v783
        %2790 = vmatprep.subr.mxu0 0.0
        %2791 = vmatpush2.msra.mxu0 %v780
        %2792 = vmatprep.subr.mxu0 0.0
        %2793 = vmatpush2.msra.mxu0 %v777
        %2794 = vmatprep.subr.mxu0 0.0
        %2795 = vmatpush2.msra.mxu0 %v774
        %2796 = vmatprep.subr.mxu0 0.0
        %2797 = vmatpush2.msra.mxu0 %v771
        %2798 = vmatprep.subr.mxu0 0.0
        %2799 = vmatpush2.msra.mxu0 %v768
        %2800 = vmatprep.subr.mxu0 0.0
        %2801 = vmatpush2.msra.mxu0 %v765
        %2802 = vmatprep.mubr.f32.mxu0 %v1460
        %2803 = vmatmul.mubr.f32.gmra.mxu0 %v1458
        %v2804 = vpop.f32.mrf.mxu0
        %v2805 = vadd.f32 %v2735, %v2804
        %v2806 = vpop.f32.mrf.mxu0
        %2807 = vdwg.mxu0
        %2808 = vmatprep.subr.mxu0 0.0
        %2809 = vmatpush1.msra.mxu0 %v858
        %2810 = vmatprep.subr.mxu0 0.0
        %2811 = vmatpush1.msra.mxu0 %v855
        %2812 = vmatprep.subr.mxu0 0.0
        %2813 = vmatpush1.msra.mxu0 %v852
        %2814 = vmatprep.subr.mxu0 0.0
        %2815 = vmatpush1.msra.mxu0 %v849
        %2816 = vmatprep.subr.mxu0 0.0
        %2817 = vmatpush1.msra.mxu0 %v846
        %2818 = vmatprep.subr.mxu0 0.0
        %2819 = vmatpush1.msra.mxu0 %v843
        %2820 = vmatprep.subr.mxu0 0.0
        %2821 = vmatpush1.msra.mxu0 %v840
        %2822 = vmatprep.subr.mxu0 0.0
        %2823 = vmatpush1.msra.mxu0 %v837
        %2824 = vmatprep.subr.mxu0 0.0
        %2825 = vmatpush1.msra.mxu0 %v834
        %2826 = vmatprep.subr.mxu0 0.0
        %2827 = vmatpush1.msra.mxu0 %v831
        %2828 = vmatprep.subr.mxu0 0.0
        %2829 = vmatpush1.msra.mxu0 %v828
        %2830 = vmatprep.subr.mxu0 0.0
        %2831 = vmatpush1.msra.mxu0 %v825
        %2832 = vmatprep.subr.mxu0 0.0
        %2833 = vmatpush1.msra.mxu0 %v822
        %2834 = vmatprep.subr.mxu0 0.0
        %2835 = vmatpush1.msra.mxu0 %v819
        %2836 = vmatprep.subr.mxu0 0.0
        %2837 = vmatpush1.msra.mxu0 %v816
        %2838 = vmatprep.subr.mxu0 0.0
        %2839 = vmatpush1.msra.mxu0 %v813
        %2840 = vmatprep.subr.mxu0 0.0
        %2841 = vmatpush2.msra.mxu0 %v906
        %2842 = vmatprep.subr.mxu0 0.0
        %2843 = vmatpush2.msra.mxu0 %v903
        %2844 = vmatprep.subr.mxu0 0.0
        %2845 = vmatpush2.msra.mxu0 %v900
        %2846 = vmatprep.subr.mxu0 0.0
        %2847 = vmatpush2.msra.mxu0 %v897
        %2848 = vmatprep.subr.mxu0 0.0
        %2849 = vmatpush2.msra.mxu0 %v894
        %2850 = vmatprep.subr.mxu0 0.0
        %2851 = vmatpush2.msra.mxu0 %v891
        %2852 = vmatprep.subr.mxu0 0.0
        %2853 = vmatpush2.msra.mxu0 %v888
        %2854 = vmatprep.subr.mxu0 0.0
        %2855 = vmatpush2.msra.mxu0 %v885
        %2856 = vmatprep.subr.mxu0 0.0
        %2857 = vmatpush2.msra.mxu0 %v882
        %2858 = vmatprep.subr.mxu0 0.0
        %2859 = vmatpush2.msra.mxu0 %v879
        %2860 = vmatprep.subr.mxu0 0.0
        %2861 = vmatpush2.msra.mxu0 %v876
        %2862 = vmatprep.subr.mxu0 0.0
        %2863 = vmatpush2.msra.mxu0 %v873
        %2864 = vmatprep.subr.mxu0 0.0
        %2865 = vmatpush2.msra.mxu0 %v870
        %2866 = vmatprep.subr.mxu0 0.0
        %2867 = vmatpush2.msra.mxu0 %v867
        %2868 = vmatprep.subr.mxu0 0.0
        %2869 = vmatpush2.msra.mxu0 %v864
        %2870 = vmatprep.subr.mxu0 0.0
        %2871 = vmatpush2.msra.mxu0 %v861
        %2872 = vmatprep.mubr.f32.mxu0 %v1476
        %2873 = vmatmul.mubr.f32.gmra.mxu0 %v1468
        %v2874 = vpop.f32.mrf.mxu0
        %v2875 = vadd.f32 %v2805, %v2874
        %v2876 = vpop.f32.mrf.mxu0
        %2877 = vdwg.mxu0
        %2878 = vmatprep.subr.mxu0 0.0
        %2879 = vmatpush1.msra.mxu0 %v954
        %2880 = vmatprep.subr.mxu0 0.0
        %2881 = vmatpush1.msra.mxu0 %v951
        %2882 = vmatprep.subr.mxu0 0.0
        %2883 = vmatpush1.msra.mxu0 %v948
        %2884 = vmatprep.subr.mxu0 0.0
        %2885 = vmatpush1.msra.mxu0 %v945
        %2886 = vmatprep.subr.mxu0 0.0
        %2887 = vmatpush1.msra.mxu0 %v942
        %2888 = vmatprep.subr.mxu0 0.0
        %2889 = vmatpush1.msra.mxu0 %v939
        %2890 = vmatprep.subr.mxu0 0.0
        %2891 = vmatpush1.msra.mxu0 %v936
        %2892 = vmatprep.subr.mxu0 0.0
        %2893 = vmatpush1.msra.mxu0 %v933
        %2894 = vmatprep.subr.mxu0 0.0
        %2895 = vmatpush1.msra.mxu0 %v930
        %2896 = vmatprep.subr.mxu0 0.0
        %2897 = vmatpush1.msra.mxu0 %v927
        %2898 = vmatprep.subr.mxu0 0.0
        %2899 = vmatpush1.msra.mxu0 %v924
        %2900 = vmatprep.subr.mxu0 0.0
        %2901 = vmatpush1.msra.mxu0 %v921
        %2902 = vmatprep.subr.mxu0 0.0
        %2903 = vmatpush1.msra.mxu0 %v918
        %2904 = vmatprep.subr.mxu0 0.0
        %2905 = vmatpush1.msra.mxu0 %v915
        %2906 = vmatprep.subr.mxu0 0.0
        %2907 = vmatpush1.msra.mxu0 %v912
        %2908 = vmatprep.subr.mxu0 0.0
        %2909 = vmatpush1.msra.mxu0 %v909
        %2910 = vmatprep.subr.mxu0 0.0
        %2911 = vmatpush2.msra.mxu0 %v1002
        %2912 = vmatprep.subr.mxu0 0.0
        %2913 = vmatpush2.msra.mxu0 %v999
        %2914 = vmatprep.subr.mxu0 0.0
        %2915 = vmatpush2.msra.mxu0 %v996
        %2916 = vmatprep.subr.mxu0 0.0
        %2917 = vmatpush2.msra.mxu0 %v993
        %2918 = vmatprep.subr.mxu0 0.0
        %2919 = vmatpush2.msra.mxu0 %v990
        %2920 = vmatprep.subr.mxu0 0.0
        %2921 = vmatpush2.msra.mxu0 %v987
        %2922 = vmatprep.subr.mxu0 0.0
        %2923 = vmatpush2.msra.mxu0 %v984
        %2924 = vmatprep.subr.mxu0 0.0
        %2925 = vmatpush2.msra.mxu0 %v981
        %2926 = vmatprep.subr.mxu0 0.0
        %2927 = vmatpush2.msra.mxu0 %v978
        %2928 = vmatprep.subr.mxu0 0.0
        %2929 = vmatpush2.msra.mxu0 %v975
        %2930 = vmatprep.subr.mxu0 0.0
        %2931 = vmatpush2.msra.mxu0 %v972
        %2932 = vmatprep.subr.mxu0 0.0
        %2933 = vmatpush2.msra.mxu0 %v969
        %2934 = vmatprep.subr.mxu0 0.0
        %2935 = vmatpush2.msra.mxu0 %v966
        %2936 = vmatprep.subr.mxu0 0.0
        %2937 = vmatpush2.msra.mxu0 %v963
        %2938 = vmatprep.subr.mxu0 0.0
        %2939 = vmatpush2.msra.mxu0 %v960
        %2940 = vmatprep.subr.mxu0 0.0
        %2941 = vmatpush2.msra.mxu0 %v957
        %2942 = vmatprep.mubr.f32.mxu0 %v1477
        %2943 = vmatmul.mubr.f32.gmra.mxu0 %v1475
        %v2944 = vpop.f32.mrf.mxu0
        %v2945 = vadd.f32 %v2875, %v2944
        %v2946 = vpop.f32.mrf.mxu0
        %2947 = vdwg.mxu0
        %2948 = vmatprep.subr.mxu0 0.0
        %2949 = vmatpush1.msra.mxu0 %v1050
        %2950 = vmatprep.subr.mxu0 0.0
        %2951 = vmatpush1.msra.mxu0 %v1047
        %2952 = vmatprep.subr.mxu0 0.0
        %2953 = vmatpush1.msra.mxu0 %v1044
        %2954 = vmatprep.subr.mxu0 0.0
        %2955 = vmatpush1.msra.mxu0 %v1041
        %2956 = vmatprep.subr.mxu0 0.0
        %2957 = vmatpush1.msra.mxu0 %v1038
        %2958 = vmatprep.subr.mxu0 0.0
        %2959 = vmatpush1.msra.mxu0 %v1035
        %2960 = vmatprep.subr.mxu0 0.0
        %2961 = vmatpush1.msra.mxu0 %v1032
        %2962 = vmatprep.subr.mxu0 0.0
        %2963 = vmatpush1.msra.mxu0 %v1029
        %2964 = vmatprep.subr.mxu0 0.0
        %2965 = vmatpush1.msra.mxu0 %v1026
        %2966 = vmatprep.subr.mxu0 0.0
        %2967 = vmatpush1.msra.mxu0 %v1023
        %2968 = vmatprep.subr.mxu0 0.0
        %2969 = vmatpush1.msra.mxu0 %v1020
        %2970 = vmatprep.subr.mxu0 0.0
        %2971 = vmatpush1.msra.mxu0 %v1017
        %2972 = vmatprep.subr.mxu0 0.0
        %2973 = vmatpush1.msra.mxu0 %v1014
        %2974 = vmatprep.subr.mxu0 0.0
        %2975 = vmatpush1.msra.mxu0 %v1011
        %2976 = vmatprep.subr.mxu0 0.0
        %2977 = vmatpush1.msra.mxu0 %v1008
        %2978 = vmatprep.subr.mxu0 0.0
        %2979 = vmatpush1.msra.mxu0 %v1005
        %2980 = vmatprep.subr.mxu0 0.0
        %2981 = vmatpush2.msra.mxu0 %v1098
        %2982 = vmatprep.subr.mxu0 0.0
        %2983 = vmatpush2.msra.mxu0 %v1095
        %2984 = vmatprep.subr.mxu0 0.0
        %2985 = vmatpush2.msra.mxu0 %v1092
        %2986 = vmatprep.subr.mxu0 0.0
        %2987 = vmatpush2.msra.mxu0 %v1089
        %2988 = vmatprep.subr.mxu0 0.0
        %2989 = vmatpush2.msra.mxu0 %v1086
        %2990 = vmatprep.subr.mxu0 0.0
        %2991 = vmatpush2.msra.mxu0 %v1083
        %2992 = vmatprep.subr.mxu0 0.0
        %2993 = vmatpush2.msra.mxu0 %v1080
        %2994 = vmatprep.subr.mxu0 0.0
        %2995 = vmatpush2.msra.mxu0 %v1077
        %2996 = vmatprep.subr.mxu0 0.0
        %2997 = vmatpush2.msra.mxu0 %v1074
        %2998 = vmatprep.subr.mxu0 0.0
        %2999 = vmatpush2.msra.mxu0 %v1071
        %3000 = vmatprep.subr.mxu0 0.0
        %3001 = vmatpush2.msra.mxu0 %v1068
        %3002 = vmatprep.subr.mxu0 0.0
        %3003 = vmatpush2.msra.mxu0 %v1065
        %3004 = vmatprep.subr.mxu0 0.0
        %3005 = vmatpush2.msra.mxu0 %v1062
        %3006 = vmatprep.subr.mxu0 0.0
        %3007 = vmatpush2.msra.mxu0 %v1059
        %3008 = vmatprep.subr.mxu0 0.0
        %3009 = vmatpush2.msra.mxu0 %v1056
        %3010 = vmatprep.subr.mxu0 0.0
        %3011 = vmatpush2.msra.mxu0 %v1053
        %3012 = vmatprep.mubr.f32.mxu0 %v1493
        %3013 = vmatmul.mubr.f32.gmra.mxu0 %v1485
        %v3014 = vpop.f32.mrf.mxu0
        %v3015 = vadd.f32 %v2945, %v3014
        %v3016 = vpop.f32.mrf.mxu0
        %3017 = vdwg.mxu0
        %3018 = vmatprep.subr.mxu0 0.0
        %3019 = vmatpush1.msra.mxu0 %v1146
        %3020 = vmatprep.subr.mxu0 0.0
        %3021 = vmatpush1.msra.mxu0 %v1143
        %3022 = vmatprep.subr.mxu0 0.0
        %3023 = vmatpush1.msra.mxu0 %v1140
        %3024 = vmatprep.subr.mxu0 0.0
        %3025 = vmatpush1.msra.mxu0 %v1137
        %3026 = vmatprep.subr.mxu0 0.0
        %3027 = vmatpush1.msra.mxu0 %v1134
        %3028 = vmatprep.subr.mxu0 0.0
        %3029 = vmatpush1.msra.mxu0 %v1131
        %3030 = vmatprep.subr.mxu0 0.0
        %3031 = vmatpush1.msra.mxu0 %v1128
        %3032 = vmatprep.subr.mxu0 0.0
        %3033 = vmatpush1.msra.mxu0 %v1125
        %3034 = vmatprep.subr.mxu0 0.0
        %3035 = vmatpush1.msra.mxu0 %v1122
        %3036 = vmatprep.subr.mxu0 0.0
        %3037 = vmatpush1.msra.mxu0 %v1119
        %3038 = vmatprep.subr.mxu0 0.0
        %3039 = vmatpush1.msra.mxu0 %v1116
        %3040 = vmatprep.subr.mxu0 0.0
        %3041 = vmatpush1.msra.mxu0 %v1113
        %3042 = vmatprep.subr.mxu0 0.0
        %3043 = vmatpush1.msra.mxu0 %v1110
        %3044 = vmatprep.subr.mxu0 0.0
        %3045 = vmatpush1.msra.mxu0 %v1107
        %3046 = vmatprep.subr.mxu0 0.0
        %3047 = vmatpush1.msra.mxu0 %v1104
        %3048 = vmatprep.subr.mxu0 0.0
        %3049 = vmatpush1.msra.mxu0 %v1101
        %3050 = vmatprep.subr.mxu0 0.0
        %3051 = vmatpush2.msra.mxu0 %v1194
        %3052 = vmatprep.subr.mxu0 0.0
        %3053 = vmatpush2.msra.mxu0 %v1191
        %3054 = vmatprep.subr.mxu0 0.0
        %3055 = vmatpush2.msra.mxu0 %v1188
        %3056 = vmatprep.subr.mxu0 0.0
        %3057 = vmatpush2.msra.mxu0 %v1185
        %3058 = vmatprep.subr.mxu0 0.0
        %3059 = vmatpush2.msra.mxu0 %v1182
        %3060 = vmatprep.subr.mxu0 0.0
        %3061 = vmatpush2.msra.mxu0 %v1179
        %3062 = vmatprep.subr.mxu0 0.0
        %3063 = vmatpush2.msra.mxu0 %v1176
        %3064 = vmatprep.subr.mxu0 0.0
        %3065 = vmatpush2.msra.mxu0 %v1173
        %3066 = vmatprep.subr.mxu0 0.0
        %3067 = vmatpush2.msra.mxu0 %v1170
        %3068 = vmatprep.subr.mxu0 0.0
        %3069 = vmatpush2.msra.mxu0 %v1167
        %3070 = vmatprep.subr.mxu0 0.0
        %3071 = vmatpush2.msra.mxu0 %v1164
        %3072 = vmatprep.subr.mxu0 0.0
        %3073 = vmatpush2.msra.mxu0 %v1161
        %3074 = vmatprep.subr.mxu0 0.0
        %3075 = vmatpush2.msra.mxu0 %v1158
        %3076 = vmatprep.subr.mxu0 0.0
        %3077 = vmatpush2.msra.mxu0 %v1155
        %3078 = vmatprep.subr.mxu0 0.0
        %3079 = vmatpush2.msra.mxu0 %v1152
        %3080 = vmatprep.subr.mxu0 0.0
        %3081 = vmatpush2.msra.mxu0 %v1149
        %3082 = vmatprep.mubr.f32.mxu0 %v1494
        %3083 = vmatmul.mubr.f32.gmra.mxu0 %v1492
        %v3084 = vpop.f32.mrf.mxu0
        %v3085 = vadd.f32 %v3015, %v3084
        %v3086 = vpop.f32.mrf.mxu0
        %3087 = vdwg.mxu0
        %3088 = vmatprep.subr.mxu0 0.0
        %3089 = vmatpush1.msra.mxu0 %v1242
        %3090 = vmatprep.subr.mxu0 0.0
        %3091 = vmatpush1.msra.mxu0 %v1239
        %3092 = vmatprep.subr.mxu0 0.0
        %3093 = vmatpush1.msra.mxu0 %v1236
        %3094 = vmatprep.subr.mxu0 0.0
        %3095 = vmatpush1.msra.mxu0 %v1233
        %3096 = vmatprep.subr.mxu0 0.0
        %3097 = vmatpush1.msra.mxu0 %v1230
        %3098 = vmatprep.subr.mxu0 0.0
        %3099 = vmatpush1.msra.mxu0 %v1227
        %3100 = vmatprep.subr.mxu0 0.0
        %3101 = vmatpush1.msra.mxu0 %v1224
        %3102 = vmatprep.subr.mxu0 0.0
        %3103 = vmatpush1.msra.mxu0 %v1221
        %3104 = vmatprep.subr.mxu0 0.0
        %3105 = vmatpush1.msra.mxu0 %v1218
        %3106 = vmatprep.subr.mxu0 0.0
        %3107 = vmatpush1.msra.mxu0 %v1215
        %3108 = vmatprep.subr.mxu0 0.0
        %3109 = vmatpush1.msra.mxu0 %v1212
        %3110 = vmatprep.subr.mxu0 0.0
        %3111 = vmatpush1.msra.mxu0 %v1209
        %3112 = vmatprep.subr.mxu0 0.0
        %3113 = vmatpush1.msra.mxu0 %v1206
        %3114 = vmatprep.subr.mxu0 0.0
        %3115 = vmatpush1.msra.mxu0 %v1203
        %3116 = vmatprep.subr.mxu0 0.0
        %3117 = vmatpush1.msra.mxu0 %v1200
        %3118 = vmatprep.subr.mxu0 0.0
        %3119 = vmatpush1.msra.mxu0 %v1197
        %3120 = vmatprep.subr.mxu0 0.0
        %3121 = vmatpush2.msra.mxu0 %v1290
        %3122 = vmatprep.subr.mxu0 0.0
        %3123 = vmatpush2.msra.mxu0 %v1287
        %3124 = vmatprep.subr.mxu0 0.0
        %3125 = vmatpush2.msra.mxu0 %v1284
        %3126 = vmatprep.subr.mxu0 0.0
        %3127 = vmatpush2.msra.mxu0 %v1281
        %3128 = vmatprep.subr.mxu0 0.0
        %3129 = vmatpush2.msra.mxu0 %v1278
        %3130 = vmatprep.subr.mxu0 0.0
        %3131 = vmatpush2.msra.mxu0 %v1275
        %3132 = vmatprep.subr.mxu0 0.0
        %3133 = vmatpush2.msra.mxu0 %v1272
        %3134 = vmatprep.subr.mxu0 0.0
        %3135 = vmatpush2.msra.mxu0 %v1269
        %3136 = vmatprep.subr.mxu0 0.0
        %3137 = vmatpush2.msra.mxu0 %v1266
        %3138 = vmatprep.subr.mxu0 0.0
        %3139 = vmatpush2.msra.mxu0 %v1263
        %3140 = vmatprep.subr.mxu0 0.0
        %3141 = vmatpush2.msra.mxu0 %v1260
        %3142 = vmatprep.subr.mxu0 0.0
        %3143 = vmatpush2.msra.mxu0 %v1257
        %3144 = vmatprep.subr.mxu0 0.0
        %3145 = vmatpush2.msra.mxu0 %v1254
        %3146 = vmatprep.subr.mxu0 0.0
        %3147 = vmatpush2.msra.mxu0 %v1251
        %3148 = vmatprep.subr.mxu0 0.0
        %3149 = vmatpush2.msra.mxu0 %v1248
        %3150 = vmatprep.subr.mxu0 0.0
        %3151 = vmatpush2.msra.mxu0 %v1245
        %3152 = vmatprep.mubr.f32.mxu0 %v1510
        %3153 = vmatmul.mubr.f32.gmra.mxu0 %v1502
        %v3154 = vpop.f32.mrf.mxu0
        %v3155 = vadd.f32 %v3085, %v3154
        %v3156 = vpop.f32.mrf.mxu0
        %3157 = vdwg.mxu0
        %3158 = vmatprep.subr.mxu0 0.0
        %3159 = vmatpush1.msra.mxu0 %v1338
        %3160 = vmatprep.subr.mxu0 0.0
        %3161 = vmatpush1.msra.mxu0 %v1335
        %3162 = vmatprep.subr.mxu0 0.0
        %3163 = vmatpush1.msra.mxu0 %v1332
        %3164 = vmatprep.subr.mxu0 0.0
        %3165 = vmatpush1.msra.mxu0 %v1329
        %3166 = vmatprep.subr.mxu0 0.0
        %3167 = vmatpush1.msra.mxu0 %v1326
        %3168 = vmatprep.subr.mxu0 0.0
        %3169 = vmatpush1.msra.mxu0 %v1323
        %3170 = vmatprep.subr.mxu0 0.0
        %3171 = vmatpush1.msra.mxu0 %v1320
        %3172 = vmatprep.subr.mxu0 0.0
        %3173 = vmatpush1.msra.mxu0 %v1317
        %3174 = vmatprep.subr.mxu0 0.0
        %3175 = vmatpush1.msra.mxu0 %v1314
        %3176 = vmatprep.subr.mxu0 0.0
        %3177 = vmatpush1.msra.mxu0 %v1311
        %3178 = vmatprep.subr.mxu0 0.0
        %3179 = vmatpush1.msra.mxu0 %v1308
        %3180 = vmatprep.subr.mxu0 0.0
        %3181 = vmatpush1.msra.mxu0 %v1305
        %3182 = vmatprep.subr.mxu0 0.0
        %3183 = vmatpush1.msra.mxu0 %v1302
        %3184 = vmatprep.subr.mxu0 0.0
        %3185 = vmatpush1.msra.mxu0 %v1299
        %3186 = vmatprep.subr.mxu0 0.0
        %3187 = vmatpush1.msra.mxu0 %v1296
        %3188 = vmatprep.subr.mxu0 0.0
        %3189 = vmatpush1.msra.mxu0 %v1293
        %3190 = vmatprep.subr.mxu0 0.0
        %3191 = vmatpush2.msra.mxu0 %v1386
        %3192 = vmatprep.subr.mxu0 0.0
        %3193 = vmatpush2.msra.mxu0 %v1383
        %3194 = vmatprep.subr.mxu0 0.0
        %3195 = vmatpush2.msra.mxu0 %v1380
        %3196 = vmatprep.subr.mxu0 0.0
        %3197 = vmatpush2.msra.mxu0 %v1377
        %3198 = vmatprep.subr.mxu0 0.0
        %3199 = vmatpush2.msra.mxu0 %v1374
        %3200 = vmatprep.subr.mxu0 0.0
        %3201 = vmatpush2.msra.mxu0 %v1371
        %3202 = vmatprep.subr.mxu0 0.0
        %3203 = vmatpush2.msra.mxu0 %v1368
        %3204 = vmatprep.subr.mxu0 0.0
        %3205 = vmatpush2.msra.mxu0 %v1365
        %3206 = vmatprep.subr.mxu0 0.0
        %3207 = vmatpush2.msra.mxu0 %v1362
        %3208 = vmatprep.subr.mxu0 0.0
        %3209 = vmatpush2.msra.mxu0 %v1359
        %3210 = vmatprep.subr.mxu0 0.0
        %3211 = vmatpush2.msra.mxu0 %v1356
        %3212 = vmatprep.subr.mxu0 0.0
        %3213 = vmatpush2.msra.mxu0 %v1353
        %3214 = vmatprep.subr.mxu0 0.0
        %3215 = vmatpush2.msra.mxu0 %v1350
        %3216 = vmatprep.subr.mxu0 0.0
        %3217 = vmatpush2.msra.mxu0 %v1347
        %3218 = vmatprep.subr.mxu0 0.0
        %3219 = vmatpush2.msra.mxu0 %v1344
        %3220 = vmatprep.subr.mxu0 0.0
        %3221 = vmatpush2.msra.mxu0 %v1341
        %3222 = vmatprep.mubr.f32.mxu0 %v1511
        %3223 = vmatmul.mubr.f32.gmra.mxu0 %v1509
        %v3224 = vpop.f32.mrf.mxu0
        %v3225 = vadd.f32 %v3155, %v3224
        %v3226 = vpop.f32.mrf.mxu0
        %3227 = vdwg.mxu0
        %v3228 = vmax.f32 %v2384, -0.25142986
        %v3229 = vmax.f32 %v2386, -0.25142986
        %v3230 = vmax.f32 %v3225, -0.25142986
        %v3231 = vmin.f32 %v3228, 0.5333022
        %v3232 = vmin.f32 %v3229, 0.5333022
        %v3233 = vmin.f32 %v3230, 0.5333022
        %v3237 = vcombine.low %v3231, %v3232
        %v3239 = vunpack.c.l.s4 1983009808
        %v3240 = vunpack.c.0.s8 %v3239
        %v3241 = vlaneseq
        %v3242 = vshrl.u32 %v3241, 7
        %v3243 = vsub.s32 %v3240, %v3242
        %v3244 = vrot.slane %v3237, %v3243
        %v3246 = vunpack.c.l.s4 1983009808
        %v3247 = vunpack.c.0.s8 %v3246
        %v3248 = vlaneseq
        %v3249 = vshrl.u32 %v3248, 7
        %v3250 = vsub.s32 %v3247, %v3249
        %v3251 = vrot.slane %v3233, %v3250
        %v3252 = vcombine.low %v3244, %v3251
        %3254 = vst [vmem:[%s226] sm:$0x3f] %v3252
        %s3255 = sand.u32 %s104, 1
        %s3256 = scalar_lea.sflag [#allocation4], %s3255
        %s3257 = sand.u32 %s104, 1
        %s3258 = smul.addr %s3257, 6
        %s3259 = scalar_lea.vmem [#allocation7], %s3258
        // Predicated region
        $region41: #{model_forward.1} parent=31 // pred_check
          %p3260 = pneg %p114
        $region42: #{model_forward.1} parent=31 // pred_check_branch
          %3262 = sbr.rel (%p3260) target = $region44
        $region43: #{model_forward.1} parent=31 // pred_region
          %s3263 = smul.u32 3, %s23
          %s3265 = ssub.s32 96, 96
          %3266 = vsyncadd %s3256, %s3265
          %s3267 = smul.addr %s3263, 32
          %s3268 = scalar_lea.hbm %s3, %s3267
          %s3270 = sshll.u32 %s3259, 4
          %s3271 = int_to_ptr.vmem [resolvable:$true] %s3270
          %3273 = dma.vmem_to_hbm [thread:$0]  %s3271, 96, %s3268, %s3256
        $region44: #{model_forward.1} parent=31 // pred_fallthru
          _
      $region32: #{model_forward.1} parent=5 // pred_fallthru
        _
      %p3274 = scmp.le.s32.totalorder 2, %s18
      // Predicated region
      $region45: #{model_forward.1} parent=5 // pred_check
        %p3275 = pneg %p3274
      $region46: #{model_forward.1} parent=5 // pred_check_branch
        %3277 = sbr.rel (%p3275) target = $region48
      $region47: #{model_forward.1} parent=5 // pred_region
        %s3278 = ssub.s32 %s18, 2
        // Predicated region
        $region49: #{model_forward.1} parent=47 // pred_check
          %p3279 = pneg %p120
        $region50: #{model_forward.1} parent=47 // pred_check_branch
          %3281 = sbr.rel (%p3279) target = $region52
        $region51: #{model_forward.1} parent=47 // pred_region
          %s3282 = sand.u32 %s105, 1
          %s3283 = scalar_lea.sflag [#allocation4], %s3282
          %s3284 = sand.u32 %s105, 1
          %s3285 = smul.addr %s3284, 6
          %s3286 = scalar_lea.vmem [#allocation7], %s3285
          %3287 = dma.done %s3283, 96
        $region52: #{model_forward.1} parent=47 // pred_fallthru
          _
      $region48: #{model_forward.1} parent=5 // pred_fallthru
        _
    $region6: #{model_forward.1} parent=1 // loop_footer
      %s22 = sadd.s32 1, %s18
    $region7: #{model_forward.1} parent=1 // loop_footer_branch
      %17 = sbr.rel target = $region3
    $region8: #{model_forward.1} parent=1 // loop_exit
      _
    %3288 = vsyncpa [#allocation3], 1
    %s3289 = scalar_lea.sflag [#allocation3], 1
    %3290 = vsyncpa %s3289, 1
    %3291 = vsyncpa [#allocation6], 1
    %s3292 = scalar_lea.sflag [#allocation6], 1
    %3293 = vsyncpa %s3292, 1
    %3294 = vsyncpa [#allocation4], 1
    %s3295 = scalar_lea.sflag [#allocation4], 1
    %3296 = vsyncpa %s3295, 1

</llo_original>
